<compile_context>
chip_gen: v5e
topology: v5e:2x2
jax: 0.10.0
libtpu: 0.0.40
codegen_flags: <defaults>
</compile_context>

<pallas_src>
import jax
import jax.numpy as jnp
from jax.experimental import pallas as pl
from jax.experimental.pallas import tpu as pltpu

IN_FEATURES = 2048
HIDDEN = 512
BN_EPS = 1e-5


def _classifier_kernel(x_ref, w1_ref, b1_ref, w2_ref, b2_ref, o_ref):
    # ---- block1: Linear(2048 -> 512) on the MXU (bf16 operands, f32 accum) + ReLU ----
    h = jnp.dot(x_ref[...], w1_ref[...],
                preferred_element_type=jnp.float32)           # [TB, 512] f32
    h = jnp.maximum(h + b1_ref[...], 0.0)                     # bias + ReLU (VPU)
    # BatchNorm1d (eval) is folded into w2/b2 on the host.
    # TODO(synk): Dropout(0.3) is identity in eval mode; training-mode mask not implemented.

    # ---- block2: Linear(512 -> 1) + Sigmoid ----
    # VPU multiply + XLU lane reduction instead of a degenerate N=1 MXU matmul.
    logits = jnp.sum(h * w2_ref[...], axis=-1, keepdims=True) + b2_ref[...]   # [TB, 1]
    o_ref[...] = 1.0 / (1.0 + jnp.exp(-logits))               # sigmoid


def binary_classifier_forward(x, w1, b1, gamma, beta, running_mean, running_var,
                              w2, b2, *, block_b=256):
    """x: [B, 2048] float32 -> [B, 1] float32 (inference)."""
    B = x.shape[0]

    # Fold BatchNorm1d (eval mode) into a per-feature scale/shift, then fold that
    # affine into the second linear (exact: BN output feeds Linear(512,1) directly).
    inv_std = jax.lax.rsqrt(running_var.astype(jnp.float32) + BN_EPS)
    bn_scale = gamma * inv_std
    bn_shift = beta - running_mean * bn_scale
    w2_eff = (w2 * bn_scale).reshape(1, HIDDEN).astype(jnp.float32)
    b2_eff = (b2 + jnp.sum(w2 * bn_shift)).reshape(1, 1).astype(jnp.float32)
    b1_row = b1.reshape(1, HIDDEN).astype(jnp.float32)

    # bf16 MXU operands; weight lives in HBM as bf16 so its DMA shrinks too.
    w1_bf16 = w1.astype(jnp.bfloat16)
    x_bf16 = x.astype(jnp.bfloat16)

    # Batch tiling: TB=256 fills the v6e/v7x MXU; small batches use a single
    # full-extent block (block dim == full array dim is always legal).
    if B <= block_b:
        tb = B
        b_padded = B
        x_in = x_bf16
    else:
        tb = block_b
        b_padded = pl.cdiv(B, tb) * tb
        x_in = x_bf16 if b_padded == B else jnp.pad(x_bf16, ((0, b_padded - B), (0, 0)))

    grid = (b_padded // tb,)

    out = pl.pallas_call(
        _classifier_kernel,
        out_shape=jax.ShapeDtypeStruct((b_padded, 1), jnp.float32),
        grid=grid,
        in_specs=[
            pl.BlockSpec((tb, IN_FEATURES), lambda i: (i, 0)),     # x: streamed per tile
            pl.BlockSpec((IN_FEATURES, HIDDEN), lambda i: (0, 0)),  # w1: VMEM-resident
            pl.BlockSpec((1, HIDDEN), lambda i: (0, 0)),            # b1
            pl.BlockSpec((1, HIDDEN), lambda i: (0, 0)),            # w2 (BN-folded)
            pl.BlockSpec((1, 1), lambda i: (0, 0)),                 # b2 (BN-folded)
        ],
        out_specs=pl.BlockSpec((tb, 1), lambda i: (i, 0)),
        compiler_params=pltpu.CompilerParams(
            dimension_semantics=("parallel",),     # megacore-shard the batch axis (v7x)
            vmem_limit_bytes=16 << 20,             # ~6 MiB actually used; leave headroom
        ),
    )(x_in, w1_bf16, b1_row, w2_eff, b2_eff)

    return out[:B]


def init_params(key):
    """Deterministic synthetic parameters matching the PyTorch module shapes."""
    k1, k2, k3, k4 = jax.random.split(key, 4)
    # Linear(2048, 512): torch weight is [512, 2048]; stored transposed [2048, 512].
    w1 = jax.random.uniform(k1, (IN_FEATURES, HIDDEN), jnp.float32,
                            minval=-1.0, maxval=1.0) / jnp.sqrt(IN_FEATURES)
    b1 = jax.random.uniform(k2, (HIDDEN,), jnp.float32,
                            minval=-1.0, maxval=1.0) / jnp.sqrt(IN_FEATURES)
    # BatchNorm1d(512) non-default stats so the fold is actually exercised.
    gamma = 1.0 + 0.1 * jax.random.normal(k3, (HIDDEN,), jnp.float32)
    beta = 0.05 * jax.random.normal(k4, (HIDDEN,), jnp.float32)
    running_mean = 0.1 * jax.random.normal(k1, (HIDDEN,), jnp.float32)
    running_var = jnp.abs(1.0 + 0.1 * jax.random.normal(k2, (HIDDEN,), jnp.float32))
    # Linear(512, 1): torch weight [1, 512].
    w2 = jax.random.uniform(k3, (HIDDEN,), jnp.float32,
                            minval=-1.0, maxval=1.0) / jnp.sqrt(HIDDEN)
    b2 = jax.random.uniform(k4, (1,), jnp.float32,
                            minval=-1.0, maxval=1.0) / jnp.sqrt(HIDDEN)
    return w1, b1, gamma, beta, running_mean, running_var, w2, b2


def _reference(x, params):
    w1, b1, gamma, beta, rm, rv, w2, b2 = params
    h = jnp.maximum(x @ w1 + b1, 0.0)
    h = (h - rm) / jnp.sqrt(rv + BN_EPS) * gamma + beta
    return jax.nn.sigmoid(h @ w2.reshape(HIDDEN, 1) + b2)


if __name__ == "__main__":
    key = jax.random.PRNGKey(0)
    kx, kp = jax.random.split(key)
    params = init_params(kp)

    ok = True
    # Small batch (single full-extent block) and a batch that exercises the
    # grid + tail padding path (300 -> 2 tiles of 256).
    for B in (8, 300):
        x = jax.random.normal(jax.random.fold_in(kx, B), (B, IN_FEATURES), jnp.float32)
        out = jax.block_until_ready(binary_classifier_forward(x, *params))
        ref = _reference(x, params)
        ok &= out.shape == (B, 1)
        # bf16 MXU operands (f32 accumulation) -> compare with a loosened tolerance.
        ok &= bool(jnp.max(jnp.abs(out - ref)) < 2e-2)

    assert ok
    print("KERNEL_OK")
</pallas_src>

<mosaic_0001>
module attributes {stable_mosaic.version = 11 : i64} {
  func.func @_classifier_kernel(%arg0: i32, %arg1: memref<8x2048xbf16, #tpu.memory_space<vmem>>, %arg2: memref<2048x512xbf16, #tpu.memory_space<vmem>>, %arg3: memref<1x512xf32, #tpu.memory_space<vmem>>, %arg4: memref<1x512xf32, #tpu.memory_space<vmem>>, %arg5: memref<1x1xf32, #tpu.memory_space<vmem>>, %arg6: memref<8x1xf32, #tpu.memory_space<vmem>>) attributes {dimension_semantics = [#tpu.dimension_semantics<parallel>], iteration_bounds = array<i64: 1>, scalar_prefetch = 0 : i64, scratch_operands = 0 : i64, tpu.core_type = #tpu.core_type<tc>, window_params = [{transform_indices = @transform_0, window_bounds = array<i64: 8, 2048>}, {pipeline_mode = #tpu.pipeline_mode<synchronous>, transform_indices = @transform_1, window_bounds = array<i64: 2048, 512>}, {pipeline_mode = #tpu.pipeline_mode<synchronous>, transform_indices = @transform_2, window_bounds = array<i64: 1, 512>}, {pipeline_mode = #tpu.pipeline_mode<synchronous>, transform_indices = @transform_3, window_bounds = array<i64: 1, 512>}, {pipeline_mode = #tpu.pipeline_mode<synchronous>, transform_indices = @transform_4, window_bounds = array<i64: 1, 1>}, {transform_indices = @transform_5, window_bounds = array<i64: 8, 1>}]} {
    %c0 = arith.constant 0 : index
    %c0_0 = arith.constant 0 : index
    %0 = vector.load %arg1[%c0, %c0_0] : memref<8x2048xbf16, #tpu.memory_space<vmem>>, vector<8x2048xbf16>
    %c0_1 = arith.constant 0 : index
    %c0_2 = arith.constant 0 : index
    %1 = vector.load %arg2[%c0_1, %c0_2] : memref<2048x512xbf16, #tpu.memory_space<vmem>>, vector<2048x512xbf16>
    %cst = arith.constant dense<0.000000e+00> : vector<8x512xf32>
    %2 = tpu.matmul %0, %1, %cst {dimension_numbers = #tpu.dot_dimension_numbers<[1], [0], [0], [1], [0, 0, 1, 1], [], []>} : vector<8x2048xbf16>, vector<2048x512xbf16>, vector<8x512xf32> -> vector<8x512xf32>
    %c0_3 = arith.constant 0 : index
    %c0_4 = arith.constant 0 : index
    %3 = vector.load %arg3[%c0_3, %c0_4] : memref<1x512xf32, #tpu.memory_space<vmem>>, vector<1x512xf32>
    %4 = vector.broadcast %3 : vector<1x512xf32> to vector<8x512xf32>
    %5 = arith.addf %2, %4 : vector<8x512xf32>
    %cst_5 = arith.constant 0.000000e+00 : f32
    %6 = vector.broadcast %cst_5 : f32 to vector<8x512xf32>
    %7 = arith.maximumf %5, %6 : vector<8x512xf32>
    %c0_6 = arith.constant 0 : index
    %c0_7 = arith.constant 0 : index
    %8 = vector.load %arg4[%c0_6, %c0_7] : memref<1x512xf32, #tpu.memory_space<vmem>>, vector<1x512xf32>
    %9 = vector.broadcast %8 : vector<1x512xf32> to vector<8x512xf32>
    %10 = arith.mulf %7, %9 : vector<8x512xf32>
    %cst_8 = arith.constant dense<0.000000e+00> : vector<8xf32>
    %11 = vector.multi_reduction <add>, %10, %cst_8 [1] : vector<8x512xf32> to vector<8xf32>
    %12 = vector.shape_cast %11 : vector<8xf32> to vector<8x1xf32>
    %c0_9 = arith.constant 0 : index
    %c0_10 = arith.constant 0 : index
    %13 = vector.load %arg5[%c0_9, %c0_10] : memref<1x1xf32, #tpu.memory_space<vmem>>, vector<1x1xf32>
    %14 = vector.broadcast %13 : vector<1x1xf32> to vector<8x1xf32>
    %15 = arith.addf %12, %14 : vector<8x1xf32>
    %cst_11 = arith.constant 0.000000e+00 : f32
    %16 = vector.broadcast %cst_11 : f32 to vector<8x1xf32>
    %17 = arith.subf %16, %15 : vector<8x1xf32>
    %18 = math.exp %17 : vector<8x1xf32>
    %cst_12 = arith.constant 1.000000e+00 : f32
    %19 = vector.broadcast %cst_12 : f32 to vector<8x1xf32>
    %20 = arith.addf %19, %18 : vector<8x1xf32>
    %cst_13 = arith.constant 1.000000e+00 : f32
    %21 = vector.broadcast %cst_13 : f32 to vector<8x1xf32>
    %22 = arith.divf %21, %20 : vector<8x1xf32>
    %c0_14 = arith.constant 0 : index
    %c0_15 = arith.constant 0 : index
    %23 = vector.load %arg6[%c0_14, %c0_15] : memref<8x1xf32, #tpu.memory_space<vmem>>, vector<8x1xf32>
    tpu.vector_store %arg6[%c0_14, %c0_15], %22 {strides = array<i32>} : memref<8x1xf32, #tpu.memory_space<vmem>>, vector<8x1xf32>,
    return
  }
  func.func @transform_0(%arg0: i32) -> (i32, i32) {
    %c0_i32 = arith.constant 0 : i32
    %c0_i32_0 = arith.constant 0 : i32
    return %arg0, %c0_i32 : i32, i32
  }
  func.func @transform_1(%arg0: i32) -> (i32, i32) {
    %c0_i32 = arith.constant 0 : i32
    %c0_i32_0 = arith.constant 0 : i32
    %c0_i32_1 = arith.constant 0 : i32
    return %c0_i32, %c0_i32_0 : i32, i32
  }
  func.func @transform_2(%arg0: i32) -> (i32, i32) {
    %c0_i32 = arith.constant 0 : i32
    %c0_i32_0 = arith.constant 0 : i32
    %c0_i32_1 = arith.constant 0 : i32
    return %c0_i32, %c0_i32_0 : i32, i32
  }
  func.func @transform_3(%arg0: i32) -> (i32, i32) {
    %c0_i32 = arith.constant 0 : i32
    %c0_i32_0 = arith.constant 0 : i32
    %c0_i32_1 = arith.constant 0 : i32
    return %c0_i32, %c0_i32_0 : i32, i32
  }
  func.func @transform_4(%arg0: i32) -> (i32, i32) {
    %c0_i32 = arith.constant 0 : i32
    %c0_i32_0 = arith.constant 0 : i32
    %c0_i32_1 = arith.constant 0 : i32
    return %c0_i32, %c0_i32_0 : i32, i32
  }
  func.func @transform_5(%arg0: i32) -> (i32, i32) {
    %c0_i32 = arith.constant 0 : i32
    %c0_i32_0 = arith.constant 0 : i32
    return %arg0, %c0_i32 : i32, i32
  }
}

</mosaic_0001>

<llo_original>
// kernel: tpu_custom_call.1
$region0: #{tpu_custom_call.1}
  #allocation0 [shape = 'u32[]', space=smem, size = 0x4, offset = 0x4, fixed_abs, tag = 'smem constant byte address 0x4 - core index']
  #allocation1 [shape = 'u32[72,128]{1,0:T(1,128)}', space=vmem, size = 0x9000, scoped, tag = 'internal scratch']
  #allocation2 [shape = 'f32[1,1]{1,0:T(1,128)S(1)}', space=vmem, size = 0x200, scoped, tag = 'scoped memory for tpu_custom_call.1']
  %s0 = inlined_call_operand.hbm [shape: bf16[8,2048], index: 0, kind: input, shape index: {}]
  %s1 = inlined_call_operand.hbm [shape: bf16[2048,512], index: 1, kind: input, shape index: {}]
  %s2 = inlined_call_operand.hbm [shape: f32[1,512], index: 2, kind: input, shape index: {}]
  %s3 = inlined_call_operand.hbm [shape: f32[1,512], index: 3, kind: input, shape index: {}]
  %s4 = inlined_call_operand.<no memory space> [shape: f32[1,1], index: 4, kind: input, shape index: {}]
  %s5 = inlined_call_operand.vmem [shape: f32[8,1], index: 5, kind: output, shape index: {}]
  %s6 = sld [smem:[#allocation0]]
  $region46: #{tpu_custom_call.1} parent=0
    _
  %s8 = ssub.s32 1, %s6
  %s9 = scalar_select 0, %s8, %s6
  %v10 = vstv %s4
  %11 = vst [vmem:[#allocation2] sm:$0x1] %v10
  $region1: #{tpu_custom_call.1} parent=0
    #allocation3 [shape = 'u8[32768]{0}', space=vmem, size = 0x8000, scoped, tag = 'input window, operand 0, single buffered']
    #allocation4 [shape = 's32[1]{0}', space=sflag, size = 0x4, scoped, tag = 'scoped memory for tpu_custom_call.1']
    #allocation5 [shape = 'u8[2097152]{0}', space=vmem, size = 0x200000, scoped, tag = 'input window, operand 1, single buffered']
    #allocation6 [shape = 's32[1]{0}', space=sflag, size = 0x4, scoped, tag = 'scoped memory for tpu_custom_call.1']
    #allocation7 [shape = 'u8[2048]{0}', space=vmem, size = 0x800, scoped, tag = 'input window, operand 2, single buffered']
    #allocation8 [shape = 'u8[2048]{0}', space=vmem, size = 0x800, scoped, tag = 'input window, operand 3, single buffered']
    #allocation9 [shape = 's32[1]{0}', space=sflag, size = 0x4, scoped, tag = 'scoped memory for tpu_custom_call.1']
    %12 = vsyncpa [#allocation4], 0
    %13 = vsyncpa [#allocation6], 0
    %14 = vsyncpa [#allocation9], 0
    // Predicated region
    $region2: #{tpu_custom_call.1} parent=1 // pred_check
      _
    $region3: #{tpu_custom_call.1} parent=1 // pred_check_branch
      %16 = sbr.rel (0) target = $region5
    $region4: #{tpu_custom_call.1} parent=1 // pred_region
      %18 = vsyncadd [#allocation4], 0
      %s20 = sshll.u32 %s0, 4
      %s21 = int_to_ptr.hbm [resolvable:$true] %s20
      %s22 = sshll.u32 [#allocation3], 4
      %s23 = int_to_ptr.vmem [resolvable:$true] %s22
      %25 = dma.hbm_to_vmem [thread:$0]  %s21, 1024, %s23, [#allocation4]
    $region5: #{tpu_custom_call.1} parent=1 // pred_fallthru
      _
    // Predicated region
    $region6: #{tpu_custom_call.1} parent=1 // pred_check
      _
    $region7: #{tpu_custom_call.1} parent=1 // pred_check_branch
      %27 = sbr.rel (0) target = $region9
    $region8: #{tpu_custom_call.1} parent=1 // pred_region
      %29 = vsyncadd [#allocation6], 0
      %s30 = sshll.u32 %s1, 4
      %s31 = int_to_ptr.hbm [resolvable:$true] %s30
      %s32 = sshll.u32 [#allocation5], 4
      %s33 = int_to_ptr.vmem [resolvable:$true] %s32
      %38 = dma.hbm_to_vmem [thread:$0]  %s31, 65536, %s33, [#allocation6], 256, 256, 16
    $region9: #{tpu_custom_call.1} parent=1 // pred_fallthru
      _
    // Predicated region
    $region10: #{tpu_custom_call.1} parent=1 // pred_check
      _
    $region11: #{tpu_custom_call.1} parent=1 // pred_check_branch
      %40 = sbr.rel (0) target = $region13
    $region12: #{tpu_custom_call.1} parent=1 // pred_region
      %42 = vsyncadd [#allocation6], 0
      %s44 = sshll.u32 %s2, 4
      %s45 = int_to_ptr.hbm [resolvable:$true] %s44
      %s46 = sshll.u32 [#allocation7], 4
      %s47 = int_to_ptr.vmem [resolvable:$true] %s46
      %49 = dma.hbm_to_vmem [thread:$0]  %s45, 64, %s47, [#allocation6]
    $region13: #{tpu_custom_call.1} parent=1 // pred_fallthru
      _
    // Predicated region
    $region14: #{tpu_custom_call.1} parent=1 // pred_check
      _
    $region15: #{tpu_custom_call.1} parent=1 // pred_check_branch
      %51 = sbr.rel (0) target = $region17
    $region16: #{tpu_custom_call.1} parent=1 // pred_region
      %53 = vsyncadd [#allocation9], 0
      %s55 = sshll.u32 %s3, 4
      %s56 = int_to_ptr.hbm [resolvable:$true] %s55
      %s57 = sshll.u32 [#allocation8], 4
      %s58 = int_to_ptr.vmem [resolvable:$true] %s57
      %60 = dma.hbm_to_vmem [thread:$0]  %s56, 64, %s58, [#allocation9]
    $region17: #{tpu_custom_call.1} parent=1 // pred_fallthru
      _
    // Predicated region
    $region18: #{tpu_custom_call.1} parent=1 // pred_check
      _
    $region19: #{tpu_custom_call.1} parent=1 // pred_check_branch
      %62 = sbr.rel (0) target = $region21
    $region20: #{tpu_custom_call.1} parent=1 // pred_region
      _
    $region21: #{tpu_custom_call.1} parent=1 // pred_fallthru
      _
    // Predicated region
    $region22: #{tpu_custom_call.1} parent=1 // pred_check
      _
    $region23: #{tpu_custom_call.1} parent=1 // pred_check_branch
      %64 = sbr.rel (0) target = $region25
    $region24: #{tpu_custom_call.1} parent=1 // pred_region
      %66 = dma.done [#allocation4], 1024
    $region25: #{tpu_custom_call.1} parent=1 // pred_fallthru
      _
    // Predicated region
    $region26: #{tpu_custom_call.1} parent=1 // pred_check
      _
    $region27: #{tpu_custom_call.1} parent=1 // pred_check_branch
      %68 = sbr.rel (0) target = $region29
    $region28: #{tpu_custom_call.1} parent=1 // pred_region
      %70 = dma.done [#allocation6], 65536
    $region29: #{tpu_custom_call.1} parent=1 // pred_fallthru
      _
    // Predicated region
    $region30: #{tpu_custom_call.1} parent=1 // pred_check
      _
    $region31: #{tpu_custom_call.1} parent=1 // pred_check_branch
      %72 = sbr.rel (0) target = $region33
    $region32: #{tpu_custom_call.1} parent=1 // pred_region
      %74 = dma.done [#allocation6], 64
    $region33: #{tpu_custom_call.1} parent=1 // pred_fallthru
      _
    // Predicated region
    $region34: #{tpu_custom_call.1} parent=1 // pred_check
      _
    $region35: #{tpu_custom_call.1} parent=1 // pred_check_branch
      %76 = sbr.rel (0) target = $region37
    $region36: #{tpu_custom_call.1} parent=1 // pred_region
      %78 = dma.done [#allocation9], 64
    $region37: #{tpu_custom_call.1} parent=1 // pred_fallthru
      _
    %v79 = vld [vmem:[#allocation3] sm:$0xff]
    %v80 = vld [vmem:[#allocation3 + $0x8] sm:$0xff]
    %v81 = vld [vmem:[#allocation3 + $0x10] sm:$0xff]
    %v82 = vld [vmem:[#allocation3 + $0x18] sm:$0xff]
    %v83 = vld [vmem:[#allocation3 + $0x20] sm:$0xff]
    %v84 = vld [vmem:[#allocation3 + $0x28] sm:$0xff]
    %v85 = vld [vmem:[#allocation3 + $0x30] sm:$0xff]
    %v86 = vld [vmem:[#allocation3 + $0x38] sm:$0xff]
    %v87 = vld [vmem:[#allocation5] sm:$0xff]
    %v88 = vld [vmem:[#allocation5 + $0x8] sm:$0xff]
    %v89 = vld [vmem:[#allocation5 + $0x10] sm:$0xff]
    %v90 = vld [vmem:[#allocation5 + $0x18] sm:$0xff]
    %v91 = vld [vmem:[#allocation5 + $0x20] sm:$0xff]
    %v92 = vld [vmem:[#allocation5 + $0x28] sm:$0xff]
    %v93 = vld [vmem:[#allocation5 + $0x30] sm:$0xff]
    %v94 = vld [vmem:[#allocation5 + $0x38] sm:$0xff]
    %v95 = vld [vmem:[#allocation5 + $0x40] sm:$0xff]
    %v96 = vld [vmem:[#allocation5 + $0x48] sm:$0xff]
    %v97 = vld [vmem:[#allocation5 + $0x50] sm:$0xff]
    %v98 = vld [vmem:[#allocation5 + $0x58] sm:$0xff]
    %v99 = vld [vmem:[#allocation5 + $0x60] sm:$0xff]
    %v100 = vld [vmem:[#allocation5 + $0x68] sm:$0xff]
    %v101 = vld [vmem:[#allocation5 + $0x70] sm:$0xff]
    %v102 = vld [vmem:[#allocation5 + $0x78] sm:$0xff]
    %v103 = vld [vmem:[#allocation5 + $0x80] sm:$0xff]
    %v104 = vld [vmem:[#allocation5 + $0x88] sm:$0xff]
    %v105 = vld [vmem:[#allocation5 + $0x90] sm:$0xff]
    %v106 = vld [vmem:[#allocation5 + $0x98] sm:$0xff]
    %v107 = vld [vmem:[#allocation5 + $0xa0] sm:$0xff]
    %v108 = vld [vmem:[#allocation5 + $0xa8] sm:$0xff]
    %v109 = vld [vmem:[#allocation5 + $0xb0] sm:$0xff]
    %v110 = vld [vmem:[#allocation5 + $0xb8] sm:$0xff]
    %v111 = vld [vmem:[#allocation5 + $0xc0] sm:$0xff]
    %v112 = vld [vmem:[#allocation5 + $0xc8] sm:$0xff]
    %v113 = vld [vmem:[#allocation5 + $0xd0] sm:$0xff]
    %v114 = vld [vmem:[#allocation5 + $0xd8] sm:$0xff]
    %v115 = vld [vmem:[#allocation5 + $0xe0] sm:$0xff]
    %v116 = vld [vmem:[#allocation5 + $0xe8] sm:$0xff]
    %v117 = vld [vmem:[#allocation5 + $0xf0] sm:$0xff]
    %v118 = vld [vmem:[#allocation5 + $0xf8] sm:$0xff]
    %v119 = vld [vmem:[#allocation5 + $0x100] sm:$0xff]
    %v120 = vld [vmem:[#allocation5 + $0x108] sm:$0xff]
    %v121 = vld [vmem:[#allocation5 + $0x110] sm:$0xff]
    %v122 = vld [vmem:[#allocation5 + $0x118] sm:$0xff]
    %v123 = vld [vmem:[#allocation5 + $0x120] sm:$0xff]
    %v124 = vld [vmem:[#allocation5 + $0x128] sm:$0xff]
    %v125 = vld [vmem:[#allocation5 + $0x130] sm:$0xff]
    %v126 = vld [vmem:[#allocation5 + $0x138] sm:$0xff]
    %v127 = vld [vmem:[#allocation5 + $0x140] sm:$0xff]
    %v128 = vld [vmem:[#allocation5 + $0x148] sm:$0xff]
    %v129 = vld [vmem:[#allocation5 + $0x150] sm:$0xff]
    %v130 = vld [vmem:[#allocation5 + $0x158] sm:$0xff]
    %v131 = vld [vmem:[#allocation5 + $0x160] sm:$0xff]
    %v132 = vld [vmem:[#allocation5 + $0x168] sm:$0xff]
    %v133 = vld [vmem:[#allocation5 + $0x170] sm:$0xff]
    %v134 = vld [vmem:[#allocation5 + $0x178] sm:$0xff]
    %v135 = vld [vmem:[#allocation5 + $0x180] sm:$0xff]
    %v136 = vld [vmem:[#allocation5 + $0x188] sm:$0xff]
    %v137 = vld [vmem:[#allocation5 + $0x190] sm:$0xff]
    %v138 = vld [vmem:[#allocation5 + $0x198] sm:$0xff]
    %v139 = vld [vmem:[#allocation5 + $0x1a0] sm:$0xff]
    %v140 = vld [vmem:[#allocation5 + $0x1a8] sm:$0xff]
    %v141 = vld [vmem:[#allocation5 + $0x1b0] sm:$0xff]
    %v142 = vld [vmem:[#allocation5 + $0x1b8] sm:$0xff]
    %v143 = vld [vmem:[#allocation5 + $0x1c0] sm:$0xff]
    %v144 = vld [vmem:[#allocation5 + $0x1c8] sm:$0xff]
    %v145 = vld [vmem:[#allocation5 + $0x1d0] sm:$0xff]
    %v146 = vld [vmem:[#allocation5 + $0x1d8] sm:$0xff]
    %v147 = vld [vmem:[#allocation5 + $0x1e0] sm:$0xff]
    %v148 = vld [vmem:[#allocation5 + $0x1e8] sm:$0xff]
    %v149 = vld [vmem:[#allocation5 + $0x1f0] sm:$0xff]
    %v150 = vld [vmem:[#allocation5 + $0x1f8] sm:$0xff]
    %v151 = vld [vmem:[#allocation5 + $0x200] sm:$0xff]
    %v152 = vld [vmem:[#allocation5 + $0x208] sm:$0xff]
    %v153 = vld [vmem:[#allocation5 + $0x210] sm:$0xff]
    %v154 = vld [vmem:[#allocation5 + $0x218] sm:$0xff]
    %v155 = vld [vmem:[#allocation5 + $0x220] sm:$0xff]
    %v156 = vld [vmem:[#allocation5 + $0x228] sm:$0xff]
    %v157 = vld [vmem:[#allocation5 + $0x230] sm:$0xff]
    %v158 = vld [vmem:[#allocation5 + $0x238] sm:$0xff]
    %v159 = vld [vmem:[#allocation5 + $0x240] sm:$0xff]
    %v160 = vld [vmem:[#allocation5 + $0x248] sm:$0xff]
    %v161 = vld [vmem:[#allocation5 + $0x250] sm:$0xff]
    %v162 = vld [vmem:[#allocation5 + $0x258] sm:$0xff]
    %v163 = vld [vmem:[#allocation5 + $0x260] sm:$0xff]
    %v164 = vld [vmem:[#allocation5 + $0x268] sm:$0xff]
    %v165 = vld [vmem:[#allocation5 + $0x270] sm:$0xff]
    %v166 = vld [vmem:[#allocation5 + $0x278] sm:$0xff]
    %v167 = vld [vmem:[#allocation5 + $0x280] sm:$0xff]
    %v168 = vld [vmem:[#allocation5 + $0x288] sm:$0xff]
    %v169 = vld [vmem:[#allocation5 + $0x290] sm:$0xff]
    %v170 = vld [vmem:[#allocation5 + $0x298] sm:$0xff]
    %v171 = vld [vmem:[#allocation5 + $0x2a0] sm:$0xff]
    %v172 = vld [vmem:[#allocation5 + $0x2a8] sm:$0xff]
    %v173 = vld [vmem:[#allocation5 + $0x2b0] sm:$0xff]
    %v174 = vld [vmem:[#allocation5 + $0x2b8] sm:$0xff]
    %v175 = vld [vmem:[#allocation5 + $0x2c0] sm:$0xff]
    %v176 = vld [vmem:[#allocation5 + $0x2c8] sm:$0xff]
    %v177 = vld [vmem:[#allocation5 + $0x2d0] sm:$0xff]
    %v178 = vld [vmem:[#allocation5 + $0x2d8] sm:$0xff]
    %v179 = vld [vmem:[#allocation5 + $0x2e0] sm:$0xff]
    %v180 = vld [vmem:[#allocation5 + $0x2e8] sm:$0xff]
    %v181 = vld [vmem:[#allocation5 + $0x2f0] sm:$0xff]
    %v182 = vld [vmem:[#allocation5 + $0x2f8] sm:$0xff]
    %v183 = vld [vmem:[#allocation5 + $0x300] sm:$0xff]
    %v184 = vld [vmem:[#allocation5 + $0x308] sm:$0xff]
    %v185 = vld [vmem:[#allocation5 + $0x310] sm:$0xff]
    %v186 = vld [vmem:[#allocation5 + $0x318] sm:$0xff]
    %v187 = vld [vmem:[#allocation5 + $0x320] sm:$0xff]
    %v188 = vld [vmem:[#allocation5 + $0x328] sm:$0xff]
    %v189 = vld [vmem:[#allocation5 + $0x330] sm:$0xff]
    %v190 = vld [vmem:[#allocation5 + $0x338] sm:$0xff]
    %v191 = vld [vmem:[#allocation5 + $0x340] sm:$0xff]
    %v192 = vld [vmem:[#allocation5 + $0x348] sm:$0xff]
    %v193 = vld [vmem:[#allocation5 + $0x350] sm:$0xff]
    %v194 = vld [vmem:[#allocation5 + $0x358] sm:$0xff]
    %v195 = vld [vmem:[#allocation5 + $0x360] sm:$0xff]
    %v196 = vld [vmem:[#allocation5 + $0x368] sm:$0xff]
    %v197 = vld [vmem:[#allocation5 + $0x370] sm:$0xff]
    %v198 = vld [vmem:[#allocation5 + $0x378] sm:$0xff]
    %v199 = vld [vmem:[#allocation5 + $0x380] sm:$0xff]
    %v200 = vld [vmem:[#allocation5 + $0x388] sm:$0xff]
    %v201 = vld [vmem:[#allocation5 + $0x390] sm:$0xff]
    %v202 = vld [vmem:[#allocation5 + $0x398] sm:$0xff]
    %v203 = vld [vmem:[#allocation5 + $0x3a0] sm:$0xff]
    %v204 = vld [vmem:[#allocation5 + $0x3a8] sm:$0xff]
    %v205 = vld [vmem:[#allocation5 + $0x3b0] sm:$0xff]
    %v206 = vld [vmem:[#allocation5 + $0x3b8] sm:$0xff]
    %v207 = vld [vmem:[#allocation5 + $0x3c0] sm:$0xff]
    %v208 = vld [vmem:[#allocation5 + $0x3c8] sm:$0xff]
    %v209 = vld [vmem:[#allocation5 + $0x3d0] sm:$0xff]
    %v210 = vld [vmem:[#allocation5 + $0x3d8] sm:$0xff]
    %v211 = vld [vmem:[#allocation5 + $0x3e0] sm:$0xff]
    %v212 = vld [vmem:[#allocation5 + $0x3e8] sm:$0xff]
    %v213 = vld [vmem:[#allocation5 + $0x3f0] sm:$0xff]
    %v214 = vld [vmem:[#allocation5 + $0x3f8] sm:$0xff]
    %v215 = vld [vmem:[#allocation5 + $0x400] sm:$0xff]
    %v216 = vld [vmem:[#allocation5 + $0x408] sm:$0xff]
    %v217 = vld [vmem:[#allocation5 + $0x410] sm:$0xff]
    %v218 = vld [vmem:[#allocation5 + $0x418] sm:$0xff]
    %v219 = vld [vmem:[#allocation5 + $0x420] sm:$0xff]
    %v220 = vld [vmem:[#allocation5 + $0x428] sm:$0xff]
    %v221 = vld [vmem:[#allocation5 + $0x430] sm:$0xff]
    %v222 = vld [vmem:[#allocation5 + $0x438] sm:$0xff]
    %v223 = vld [vmem:[#allocation5 + $0x440] sm:$0xff]
    %v224 = vld [vmem:[#allocation5 + $0x448] sm:$0xff]
    %v225 = vld [vmem:[#allocation5 + $0x450] sm:$0xff]
    %v226 = vld [vmem:[#allocation5 + $0x458] sm:$0xff]
    %v227 = vld [vmem:[#allocation5 + $0x460] sm:$0xff]
    %v228 = vld [vmem:[#allocation5 + $0x468] sm:$0xff]
    %v229 = vld [vmem:[#allocation5 + $0x470] sm:$0xff]
    %v230 = vld [vmem:[#allocation5 + $0x478] sm:$0xff]
    %v231 = vld [vmem:[#allocation5 + $0x480] sm:$0xff]
    %v232 = vld [vmem:[#allocation5 + $0x488] sm:$0xff]
    %v233 = vld [vmem:[#allocation5 + $0x490] sm:$0xff]
    %v234 = vld [vmem:[#allocation5 + $0x498] sm:$0xff]
    %v235 = vld [vmem:[#allocation5 + $0x4a0] sm:$0xff]
    %v236 = vld [vmem:[#allocation5 + $0x4a8] sm:$0xff]
    %v237 = vld [vmem:[#allocation5 + $0x4b0] sm:$0xff]
    %v238 = vld [vmem:[#allocation5 + $0x4b8] sm:$0xff]
    %v239 = vld [vmem:[#allocation5 + $0x4c0] sm:$0xff]
    %v240 = vld [vmem:[#allocation5 + $0x4c8] sm:$0xff]
    %v241 = vld [vmem:[#allocation5 + $0x4d0] sm:$0xff]
    %v242 = vld [vmem:[#allocation5 + $0x4d8] sm:$0xff]
    %v243 = vld [vmem:[#allocation5 + $0x4e0] sm:$0xff]
    %v244 = vld [vmem:[#allocation5 + $0x4e8] sm:$0xff]
    %v245 = vld [vmem:[#allocation5 + $0x4f0] sm:$0xff]
    %v246 = vld [vmem:[#allocation5 + $0x4f8] sm:$0xff]
    %v247 = vld [vmem:[#allocation5 + $0x500] sm:$0xff]
    %v248 = vld [vmem:[#allocation5 + $0x508] sm:$0xff]
    %v249 = vld [vmem:[#allocation5 + $0x510] sm:$0xff]
    %v250 = vld [vmem:[#allocation5 + $0x518] sm:$0xff]
    %v251 = vld [vmem:[#allocation5 + $0x520] sm:$0xff]
    %v252 = vld [vmem:[#allocation5 + $0x528] sm:$0xff]
    %v253 = vld [vmem:[#allocation5 + $0x530] sm:$0xff]
    %v254 = vld [vmem:[#allocation5 + $0x538] sm:$0xff]
    %v255 = vld [vmem:[#allocation5 + $0x540] sm:$0xff]
    %v256 = vld [vmem:[#allocation5 + $0x548] sm:$0xff]
    %v257 = vld [vmem:[#allocation5 + $0x550] sm:$0xff]
    %v258 = vld [vmem:[#allocation5 + $0x558] sm:$0xff]
    %v259 = vld [vmem:[#allocation5 + $0x560] sm:$0xff]
    %v260 = vld [vmem:[#allocation5 + $0x568] sm:$0xff]
    %v261 = vld [vmem:[#allocation5 + $0x570] sm:$0xff]
    %v262 = vld [vmem:[#allocation5 + $0x578] sm:$0xff]
    %v263 = vld [vmem:[#allocation5 + $0x580] sm:$0xff]
    %v264 = vld [vmem:[#allocation5 + $0x588] sm:$0xff]
    %v265 = vld [vmem:[#allocation5 + $0x590] sm:$0xff]
    %v266 = vld [vmem:[#allocation5 + $0x598] sm:$0xff]
    %v267 = vld [vmem:[#allocation5 + $0x5a0] sm:$0xff]
    %v268 = vld [vmem:[#allocation5 + $0x5a8] sm:$0xff]
    %v269 = vld [vmem:[#allocation5 + $0x5b0] sm:$0xff]
    %v270 = vld [vmem:[#allocation5 + $0x5b8] sm:$0xff]
    %v271 = vld [vmem:[#allocation5 + $0x5c0] sm:$0xff]
    %v272 = vld [vmem:[#allocation5 + $0x5c8] sm:$0xff]
    %v273 = vld [vmem:[#allocation5 + $0x5d0] sm:$0xff]
    %v274 = vld [vmem:[#allocation5 + $0x5d8] sm:$0xff]
    %v275 = vld [vmem:[#allocation5 + $0x5e0] sm:$0xff]
    %v276 = vld [vmem:[#allocation5 + $0x5e8] sm:$0xff]
    %v277 = vld [vmem:[#allocation5 + $0x5f0] sm:$0xff]
    %v278 = vld [vmem:[#allocation5 + $0x5f8] sm:$0xff]
    %v279 = vld [vmem:[#allocation5 + $0x600] sm:$0xff]
    %v280 = vld [vmem:[#allocation5 + $0x608] sm:$0xff]
    %v281 = vld [vmem:[#allocation5 + $0x610] sm:$0xff]
    %v282 = vld [vmem:[#allocation5 + $0x618] sm:$0xff]
    %v283 = vld [vmem:[#allocation5 + $0x620] sm:$0xff]
    %v284 = vld [vmem:[#allocation5 + $0x628] sm:$0xff]
    %v285 = vld [vmem:[#allocation5 + $0x630] sm:$0xff]
    %v286 = vld [vmem:[#allocation5 + $0x638] sm:$0xff]
    %v287 = vld [vmem:[#allocation5 + $0x640] sm:$0xff]
    %v288 = vld [vmem:[#allocation5 + $0x648] sm:$0xff]
    %v289 = vld [vmem:[#allocation5 + $0x650] sm:$0xff]
    %v290 = vld [vmem:[#allocation5 + $0x658] sm:$0xff]
    %v291 = vld [vmem:[#allocation5 + $0x660] sm:$0xff]
    %v292 = vld [vmem:[#allocation5 + $0x668] sm:$0xff]
    %v293 = vld [vmem:[#allocation5 + $0x670] sm:$0xff]
    %v294 = vld [vmem:[#allocation5 + $0x678] sm:$0xff]
    %v295 = vld [vmem:[#allocation5 + $0x680] sm:$0xff]
    %v296 = vld [vmem:[#allocation5 + $0x688] sm:$0xff]
    %v297 = vld [vmem:[#allocation5 + $0x690] sm:$0xff]
    %v298 = vld [vmem:[#allocation5 + $0x698] sm:$0xff]
    %v299 = vld [vmem:[#allocation5 + $0x6a0] sm:$0xff]
    %v300 = vld [vmem:[#allocation5 + $0x6a8] sm:$0xff]
    %v301 = vld [vmem:[#allocation5 + $0x6b0] sm:$0xff]
    %v302 = vld [vmem:[#allocation5 + $0x6b8] sm:$0xff]
    %v303 = vld [vmem:[#allocation5 + $0x6c0] sm:$0xff]
    %v304 = vld [vmem:[#allocation5 + $0x6c8] sm:$0xff]
    %v305 = vld [vmem:[#allocation5 + $0x6d0] sm:$0xff]
    %v306 = vld [vmem:[#allocation5 + $0x6d8] sm:$0xff]
    %v307 = vld [vmem:[#allocation5 + $0x6e0] sm:$0xff]
    %v308 = vld [vmem:[#allocation5 + $0x6e8] sm:$0xff]
    %v309 = vld [vmem:[#allocation5 + $0x6f0] sm:$0xff]
    %v310 = vld [vmem:[#allocation5 + $0x6f8] sm:$0xff]
    %v311 = vld [vmem:[#allocation5 + $0x700] sm:$0xff]
    %v312 = vld [vmem:[#allocation5 + $0x708] sm:$0xff]
    %v313 = vld [vmem:[#allocation5 + $0x710] sm:$0xff]
    %v314 = vld [vmem:[#allocation5 + $0x718] sm:$0xff]
    %v315 = vld [vmem:[#allocation5 + $0x720] sm:$0xff]
    %v316 = vld [vmem:[#allocation5 + $0x728] sm:$0xff]
    %v317 = vld [vmem:[#allocation5 + $0x730] sm:$0xff]
    %v318 = vld [vmem:[#allocation5 + $0x738] sm:$0xff]
    %v319 = vld [vmem:[#allocation5 + $0x740] sm:$0xff]
    %v320 = vld [vmem:[#allocation5 + $0x748] sm:$0xff]
    %v321 = vld [vmem:[#allocation5 + $0x750] sm:$0xff]
    %v322 = vld [vmem:[#allocation5 + $0x758] sm:$0xff]
    %v323 = vld [vmem:[#allocation5 + $0x760] sm:$0xff]
    %v324 = vld [vmem:[#allocation5 + $0x768] sm:$0xff]
    %v325 = vld [vmem:[#allocation5 + $0x770] sm:$0xff]
    %v326 = vld [vmem:[#allocation5 + $0x778] sm:$0xff]
    %v327 = vld [vmem:[#allocation5 + $0x780] sm:$0xff]
    %v328 = vld [vmem:[#allocation5 + $0x788] sm:$0xff]
    %v329 = vld [vmem:[#allocation5 + $0x790] sm:$0xff]
    %v330 = vld [vmem:[#allocation5 + $0x798] sm:$0xff]
    %v331 = vld [vmem:[#allocation5 + $0x7a0] sm:$0xff]
    %v332 = vld [vmem:[#allocation5 + $0x7a8] sm:$0xff]
    %v333 = vld [vmem:[#allocation5 + $0x7b0] sm:$0xff]
    %v334 = vld [vmem:[#allocation5 + $0x7b8] sm:$0xff]
    %v335 = vld [vmem:[#allocation5 + $0x7c0] sm:$0xff]
    %v336 = vld [vmem:[#allocation5 + $0x7c8] sm:$0xff]
    %v337 = vld [vmem:[#allocation5 + $0x7d0] sm:$0xff]
    %v338 = vld [vmem:[#allocation5 + $0x7d8] sm:$0xff]
    %v339 = vld [vmem:[#allocation5 + $0x7e0] sm:$0xff]
    %v340 = vld [vmem:[#allocation5 + $0x7e8] sm:$0xff]
    %v341 = vld [vmem:[#allocation5 + $0x7f0] sm:$0xff]
    %v342 = vld [vmem:[#allocation5 + $0x7f8] sm:$0xff]
    %v343 = vld [vmem:[#allocation5 + $0x800] sm:$0xff]
    %v344 = vld [vmem:[#allocation5 + $0x808] sm:$0xff]
    %v345 = vld [vmem:[#allocation5 + $0x810] sm:$0xff]
    %v346 = vld [vmem:[#allocation5 + $0x818] sm:$0xff]
    %v347 = vld [vmem:[#allocation5 + $0x820] sm:$0xff]
    %v348 = vld [vmem:[#allocation5 + $0x828] sm:$0xff]
    %v349 = vld [vmem:[#allocation5 + $0x830] sm:$0xff]
    %v350 = vld [vmem:[#allocation5 + $0x838] sm:$0xff]
    %v351 = vld [vmem:[#allocation5 + $0x840] sm:$0xff]
    %v352 = vld [vmem:[#allocation5 + $0x848] sm:$0xff]
    %v353 = vld [vmem:[#allocation5 + $0x850] sm:$0xff]
    %v354 = vld [vmem:[#allocation5 + $0x858] sm:$0xff]
    %v355 = vld [vmem:[#allocation5 + $0x860] sm:$0xff]
    %v356 = vld [vmem:[#allocation5 + $0x868] sm:$0xff]
    %v357 = vld [vmem:[#allocation5 + $0x870] sm:$0xff]
    %v358 = vld [vmem:[#allocation5 + $0x878] sm:$0xff]
    %v359 = vld [vmem:[#allocation5 + $0x880] sm:$0xff]
    %v360 = vld [vmem:[#allocation5 + $0x888] sm:$0xff]
    %v361 = vld [vmem:[#allocation5 + $0x890] sm:$0xff]
    %v362 = vld [vmem:[#allocation5 + $0x898] sm:$0xff]
    %v363 = vld [vmem:[#allocation5 + $0x8a0] sm:$0xff]
    %v364 = vld [vmem:[#allocation5 + $0x8a8] sm:$0xff]
    %v365 = vld [vmem:[#allocation5 + $0x8b0] sm:$0xff]
    %v366 = vld [vmem:[#allocation5 + $0x8b8] sm:$0xff]
    %v367 = vld [vmem:[#allocation5 + $0x8c0] sm:$0xff]
    %v368 = vld [vmem:[#allocation5 + $0x8c8] sm:$0xff]
    %v369 = vld [vmem:[#allocation5 + $0x8d0] sm:$0xff]
    %v370 = vld [vmem:[#allocation5 + $0x8d8] sm:$0xff]
    %v371 = vld [vmem:[#allocation5 + $0x8e0] sm:$0xff]
    %v372 = vld [vmem:[#allocation5 + $0x8e8] sm:$0xff]
    %v373 = vld [vmem:[#allocation5 + $0x8f0] sm:$0xff]
    %v374 = vld [vmem:[#allocation5 + $0x8f8] sm:$0xff]
    %v375 = vld [vmem:[#allocation5 + $0x900] sm:$0xff]
    %v376 = vld [vmem:[#allocation5 + $0x908] sm:$0xff]
    %v377 = vld [vmem:[#allocation5 + $0x910] sm:$0xff]
    %v378 = vld [vmem:[#allocation5 + $0x918] sm:$0xff]
    %v379 = vld [vmem:[#allocation5 + $0x920] sm:$0xff]
    %v380 = vld [vmem:[#allocation5 + $0x928] sm:$0xff]
    %v381 = vld [vmem:[#allocation5 + $0x930] sm:$0xff]
    %v382 = vld [vmem:[#allocation5 + $0x938] sm:$0xff]
    %v383 = vld [vmem:[#allocation5 + $0x940] sm:$0xff]
    %v384 = vld [vmem:[#allocation5 + $0x948] sm:$0xff]
    %v385 = vld [vmem:[#allocation5 + $0x950] sm:$0xff]
    %v386 = vld [vmem:[#allocation5 + $0x958] sm:$0xff]
    %v387 = vld [vmem:[#allocation5 + $0x960] sm:$0xff]
    %v388 = vld [vmem:[#allocation5 + $0x968] sm:$0xff]
    %v389 = vld [vmem:[#allocation5 + $0x970] sm:$0xff]
    %v390 = vld [vmem:[#allocation5 + $0x978] sm:$0xff]
    %v391 = vld [vmem:[#allocation5 + $0x980] sm:$0xff]
    %v392 = vld [vmem:[#allocation5 + $0x988] sm:$0xff]
    %v393 = vld [vmem:[#allocation5 + $0x990] sm:$0xff]
    %v394 = vld [vmem:[#allocation5 + $0x998] sm:$0xff]
    %v395 = vld [vmem:[#allocation5 + $0x9a0] sm:$0xff]
    %v396 = vld [vmem:[#allocation5 + $0x9a8] sm:$0xff]
    %v397 = vld [vmem:[#allocation5 + $0x9b0] sm:$0xff]
    %v398 = vld [vmem:[#allocation5 + $0x9b8] sm:$0xff]
    %v399 = vld [vmem:[#allocation5 + $0x9c0] sm:$0xff]
    %v400 = vld [vmem:[#allocation5 + $0x9c8] sm:$0xff]
    %v401 = vld [vmem:[#allocation5 + $0x9d0] sm:$0xff]
    %v402 = vld [vmem:[#allocation5 + $0x9d8] sm:$0xff]
    %v403 = vld [vmem:[#allocation5 + $0x9e0] sm:$0xff]
    %v404 = vld [vmem:[#allocation5 + $0x9e8] sm:$0xff]
    %v405 = vld [vmem:[#allocation5 + $0x9f0] sm:$0xff]
    %v406 = vld [vmem:[#allocation5 + $0x9f8] sm:$0xff]
    %v407 = vld [vmem:[#allocation5 + $0xa00] sm:$0xff]
    %v408 = vld [vmem:[#allocation5 + $0xa08] sm:$0xff]
    %v409 = vld [vmem:[#allocation5 + $0xa10] sm:$0xff]
    %v410 = vld [vmem:[#allocation5 + $0xa18] sm:$0xff]
    %v411 = vld [vmem:[#allocation5 + $0xa20] sm:$0xff]
    %v412 = vld [vmem:[#allocation5 + $0xa28] sm:$0xff]
    %v413 = vld [vmem:[#allocation5 + $0xa30] sm:$0xff]
    %v414 = vld [vmem:[#allocation5 + $0xa38] sm:$0xff]
    %v415 = vld [vmem:[#allocation5 + $0xa40] sm:$0xff]
    %v416 = vld [vmem:[#allocation5 + $0xa48] sm:$0xff]
    %v417 = vld [vmem:[#allocation5 + $0xa50] sm:$0xff]
    %v418 = vld [vmem:[#allocation5 + $0xa58] sm:$0xff]
    %v419 = vld [vmem:[#allocation5 + $0xa60] sm:$0xff]
    %v420 = vld [vmem:[#allocation5 + $0xa68] sm:$0xff]
    %v421 = vld [vmem:[#allocation5 + $0xa70] sm:$0xff]
    %v422 = vld [vmem:[#allocation5 + $0xa78] sm:$0xff]
    %v423 = vld [vmem:[#allocation5 + $0xa80] sm:$0xff]
    %v424 = vld [vmem:[#allocation5 + $0xa88] sm:$0xff]
    %v425 = vld [vmem:[#allocation5 + $0xa90] sm:$0xff]
    %v426 = vld [vmem:[#allocation5 + $0xa98] sm:$0xff]
    %v427 = vld [vmem:[#allocation5 + $0xaa0] sm:$0xff]
    %v428 = vld [vmem:[#allocation5 + $0xaa8] sm:$0xff]
    %v429 = vld [vmem:[#allocation5 + $0xab0] sm:$0xff]
    %v430 = vld [vmem:[#allocation5 + $0xab8] sm:$0xff]
    %v431 = vld [vmem:[#allocation5 + $0xac0] sm:$0xff]
    %v432 = vld [vmem:[#allocation5 + $0xac8] sm:$0xff]
    %v433 = vld [vmem:[#allocation5 + $0xad0] sm:$0xff]
    %v434 = vld [vmem:[#allocation5 + $0xad8] sm:$0xff]
    %v435 = vld [vmem:[#allocation5 + $0xae0] sm:$0xff]
    %v436 = vld [vmem:[#allocation5 + $0xae8] sm:$0xff]
    %v437 = vld [vmem:[#allocation5 + $0xaf0] sm:$0xff]
    %v438 = vld [vmem:[#allocation5 + $0xaf8] sm:$0xff]
    %v439 = vld [vmem:[#allocation5 + $0xb00] sm:$0xff]
    %v440 = vld [vmem:[#allocation5 + $0xb08] sm:$0xff]
    %v441 = vld [vmem:[#allocation5 + $0xb10] sm:$0xff]
    %v442 = vld [vmem:[#allocation5 + $0xb18] sm:$0xff]
    %v443 = vld [vmem:[#allocation5 + $0xb20] sm:$0xff]
    %v444 = vld [vmem:[#allocation5 + $0xb28] sm:$0xff]
    %v445 = vld [vmem:[#allocation5 + $0xb30] sm:$0xff]
    %v446 = vld [vmem:[#allocation5 + $0xb38] sm:$0xff]
    %v447 = vld [vmem:[#allocation5 + $0xb40] sm:$0xff]
    %v448 = vld [vmem:[#allocation5 + $0xb48] sm:$0xff]
    %v449 = vld [vmem:[#allocation5 + $0xb50] sm:$0xff]
    %v450 = vld [vmem:[#allocation5 + $0xb58] sm:$0xff]
    %v451 = vld [vmem:[#allocation5 + $0xb60] sm:$0xff]
    %v452 = vld [vmem:[#allocation5 + $0xb68] sm:$0xff]
    %v453 = vld [vmem:[#allocation5 + $0xb70] sm:$0xff]
    %v454 = vld [vmem:[#allocation5 + $0xb78] sm:$0xff]
    %v455 = vld [vmem:[#allocation5 + $0xb80] sm:$0xff]
    %v456 = vld [vmem:[#allocation5 + $0xb88] sm:$0xff]
    %v457 = vld [vmem:[#allocation5 + $0xb90] sm:$0xff]
    %v458 = vld [vmem:[#allocation5 + $0xb98] sm:$0xff]
    %v459 = vld [vmem:[#allocation5 + $0xba0] sm:$0xff]
    %v460 = vld [vmem:[#allocation5 + $0xba8] sm:$0xff]
    %v461 = vld [vmem:[#allocation5 + $0xbb0] sm:$0xff]
    %v462 = vld [vmem:[#allocation5 + $0xbb8] sm:$0xff]
    %v463 = vld [vmem:[#allocation5 + $0xbc0] sm:$0xff]
    %v464 = vld [vmem:[#allocation5 + $0xbc8] sm:$0xff]
    %v465 = vld [vmem:[#allocation5 + $0xbd0] sm:$0xff]
    %v466 = vld [vmem:[#allocation5 + $0xbd8] sm:$0xff]
    %v467 = vld [vmem:[#allocation5 + $0xbe0] sm:$0xff]
    %v468 = vld [vmem:[#allocation5 + $0xbe8] sm:$0xff]
    %v469 = vld [vmem:[#allocation5 + $0xbf0] sm:$0xff]
    %v470 = vld [vmem:[#allocation5 + $0xbf8] sm:$0xff]
    %v471 = vld [vmem:[#allocation5 + $0xc00] sm:$0xff]
    %v472 = vld [vmem:[#allocation5 + $0xc08] sm:$0xff]
    %v473 = vld [vmem:[#allocation5 + $0xc10] sm:$0xff]
    %v474 = vld [vmem:[#allocation5 + $0xc18] sm:$0xff]
    %v475 = vld [vmem:[#allocation5 + $0xc20] sm:$0xff]
    %v476 = vld [vmem:[#allocation5 + $0xc28] sm:$0xff]
    %v477 = vld [vmem:[#allocation5 + $0xc30] sm:$0xff]
    %v478 = vld [vmem:[#allocation5 + $0xc38] sm:$0xff]
    %v479 = vld [vmem:[#allocation5 + $0xc40] sm:$0xff]
    %v480 = vld [vmem:[#allocation5 + $0xc48] sm:$0xff]
    %v481 = vld [vmem:[#allocation5 + $0xc50] sm:$0xff]
    %v482 = vld [vmem:[#allocation5 + $0xc58] sm:$0xff]
    %v483 = vld [vmem:[#allocation5 + $0xc60] sm:$0xff]
    %v484 = vld [vmem:[#allocation5 + $0xc68] sm:$0xff]
    %v485 = vld [vmem:[#allocation5 + $0xc70] sm:$0xff]
    %v486 = vld [vmem:[#allocation5 + $0xc78] sm:$0xff]
    %v487 = vld [vmem:[#allocation5 + $0xc80] sm:$0xff]
    %v488 = vld [vmem:[#allocation5 + $0xc88] sm:$0xff]
    %v489 = vld [vmem:[#allocation5 + $0xc90] sm:$0xff]
    %v490 = vld [vmem:[#allocation5 + $0xc98] sm:$0xff]
    %v491 = vld [vmem:[#allocation5 + $0xca0] sm:$0xff]
    %v492 = vld [vmem:[#allocation5 + $0xca8] sm:$0xff]
    %v493 = vld [vmem:[#allocation5 + $0xcb0] sm:$0xff]
    %v494 = vld [vmem:[#allocation5 + $0xcb8] sm:$0xff]
    %v495 = vld [vmem:[#allocation5 + $0xcc0] sm:$0xff]
    %v496 = vld [vmem:[#allocation5 + $0xcc8] sm:$0xff]
    %v497 = vld [vmem:[#allocation5 + $0xcd0] sm:$0xff]
    %v498 = vld [vmem:[#allocation5 + $0xcd8] sm:$0xff]
    %v499 = vld [vmem:[#allocation5 + $0xce0] sm:$0xff]
    %v500 = vld [vmem:[#allocation5 + $0xce8] sm:$0xff]
    %v501 = vld [vmem:[#allocation5 + $0xcf0] sm:$0xff]
    %v502 = vld [vmem:[#allocation5 + $0xcf8] sm:$0xff]
    %v503 = vld [vmem:[#allocation5 + $0xd00] sm:$0xff]
    %v504 = vld [vmem:[#allocation5 + $0xd08] sm:$0xff]
    %v505 = vld [vmem:[#allocation5 + $0xd10] sm:$0xff]
    %v506 = vld [vmem:[#allocation5 + $0xd18] sm:$0xff]
    %v507 = vld [vmem:[#allocation5 + $0xd20] sm:$0xff]
    %v508 = vld [vmem:[#allocation5 + $0xd28] sm:$0xff]
    %v509 = vld [vmem:[#allocation5 + $0xd30] sm:$0xff]
    %v510 = vld [vmem:[#allocation5 + $0xd38] sm:$0xff]
    %v511 = vld [vmem:[#allocation5 + $0xd40] sm:$0xff]
    %v512 = vld [vmem:[#allocation5 + $0xd48] sm:$0xff]
    %v513 = vld [vmem:[#allocation5 + $0xd50] sm:$0xff]
    %v514 = vld [vmem:[#allocation5 + $0xd58] sm:$0xff]
    %v515 = vld [vmem:[#allocation5 + $0xd60] sm:$0xff]
    %v516 = vld [vmem:[#allocation5 + $0xd68] sm:$0xff]
    %v517 = vld [vmem:[#allocation5 + $0xd70] sm:$0xff]
    %v518 = vld [vmem:[#allocation5 + $0xd78] sm:$0xff]
    %v519 = vld [vmem:[#allocation5 + $0xd80] sm:$0xff]
    %v520 = vld [vmem:[#allocation5 + $0xd88] sm:$0xff]
    %v521 = vld [vmem:[#allocation5 + $0xd90] sm:$0xff]
    %v522 = vld [vmem:[#allocation5 + $0xd98] sm:$0xff]
    %v523 = vld [vmem:[#allocation5 + $0xda0] sm:$0xff]
    %v524 = vld [vmem:[#allocation5 + $0xda8] sm:$0xff]
    %v525 = vld [vmem:[#allocation5 + $0xdb0] sm:$0xff]
    %v526 = vld [vmem:[#allocation5 + $0xdb8] sm:$0xff]
    %v527 = vld [vmem:[#allocation5 + $0xdc0] sm:$0xff]
    %v528 = vld [vmem:[#allocation5 + $0xdc8] sm:$0xff]
    %v529 = vld [vmem:[#allocation5 + $0xdd0] sm:$0xff]
    %v530 = vld [vmem:[#allocation5 + $0xdd8] sm:$0xff]
    %v531 = vld [vmem:[#allocation5 + $0xde0] sm:$0xff]
    %v532 = vld [vmem:[#allocation5 + $0xde8] sm:$0xff]
    %v533 = vld [vmem:[#allocation5 + $0xdf0] sm:$0xff]
    %v534 = vld [vmem:[#allocation5 + $0xdf8] sm:$0xff]
    %v535 = vld [vmem:[#allocation5 + $0xe00] sm:$0xff]
    %v536 = vld [vmem:[#allocation5 + $0xe08] sm:$0xff]
    %v537 = vld [vmem:[#allocation5 + $0xe10] sm:$0xff]
    %v538 = vld [vmem:[#allocation5 + $0xe18] sm:$0xff]
    %v539 = vld [vmem:[#allocation5 + $0xe20] sm:$0xff]
    %v540 = vld [vmem:[#allocation5 + $0xe28] sm:$0xff]
    %v541 = vld [vmem:[#allocation5 + $0xe30] sm:$0xff]
    %v542 = vld [vmem:[#allocation5 + $0xe38] sm:$0xff]
    %v543 = vld [vmem:[#allocation5 + $0xe40] sm:$0xff]
    %v544 = vld [vmem:[#allocation5 + $0xe48] sm:$0xff]
    %v545 = vld [vmem:[#allocation5 + $0xe50] sm:$0xff]
    %v546 = vld [vmem:[#allocation5 + $0xe58] sm:$0xff]
    %v547 = vld [vmem:[#allocation5 + $0xe60] sm:$0xff]
    %v548 = vld [vmem:[#allocation5 + $0xe68] sm:$0xff]
    %v549 = vld [vmem:[#allocation5 + $0xe70] sm:$0xff]
    %v550 = vld [vmem:[#allocation5 + $0xe78] sm:$0xff]
    %v551 = vld [vmem:[#allocation5 + $0xe80] sm:$0xff]
    %v552 = vld [vmem:[#allocation5 + $0xe88] sm:$0xff]
    %v553 = vld [vmem:[#allocation5 + $0xe90] sm:$0xff]
    %v554 = vld [vmem:[#allocation5 + $0xe98] sm:$0xff]
    %v555 = vld [vmem:[#allocation5 + $0xea0] sm:$0xff]
    %v556 = vld [vmem:[#allocation5 + $0xea8] sm:$0xff]
    %v557 = vld [vmem:[#allocation5 + $0xeb0] sm:$0xff]
    %v558 = vld [vmem:[#allocation5 + $0xeb8] sm:$0xff]
    %v559 = vld [vmem:[#allocation5 + $0xec0] sm:$0xff]
    %v560 = vld [vmem:[#allocation5 + $0xec8] sm:$0xff]
    %v561 = vld [vmem:[#allocation5 + $0xed0] sm:$0xff]
    %v562 = vld [vmem:[#allocation5 + $0xed8] sm:$0xff]
    %v563 = vld [vmem:[#allocation5 + $0xee0] sm:$0xff]
    %v564 = vld [vmem:[#allocation5 + $0xee8] sm:$0xff]
    %v565 = vld [vmem:[#allocation5 + $0xef0] sm:$0xff]
    %v566 = vld [vmem:[#allocation5 + $0xef8] sm:$0xff]
    %v567 = vld [vmem:[#allocation5 + $0xf00] sm:$0xff]
    %v568 = vld [vmem:[#allocation5 + $0xf08] sm:$0xff]
    %v569 = vld [vmem:[#allocation5 + $0xf10] sm:$0xff]
    %v570 = vld [vmem:[#allocation5 + $0xf18] sm:$0xff]
    %v571 = vld [vmem:[#allocation5 + $0xf20] sm:$0xff]
    %v572 = vld [vmem:[#allocation5 + $0xf28] sm:$0xff]
    %v573 = vld [vmem:[#allocation5 + $0xf30] sm:$0xff]
    %v574 = vld [vmem:[#allocation5 + $0xf38] sm:$0xff]
    %v575 = vld [vmem:[#allocation5 + $0xf40] sm:$0xff]
    %v576 = vld [vmem:[#allocation5 + $0xf48] sm:$0xff]
    %v577 = vld [vmem:[#allocation5 + $0xf50] sm:$0xff]
    %v578 = vld [vmem:[#allocation5 + $0xf58] sm:$0xff]
    %v579 = vld [vmem:[#allocation5 + $0xf60] sm:$0xff]
    %v580 = vld [vmem:[#allocation5 + $0xf68] sm:$0xff]
    %v581 = vld [vmem:[#allocation5 + $0xf70] sm:$0xff]
    %v582 = vld [vmem:[#allocation5 + $0xf78] sm:$0xff]
    %v583 = vld [vmem:[#allocation5 + $0xf80] sm:$0xff]
    %v584 = vld [vmem:[#allocation5 + $0xf88] sm:$0xff]
    %v585 = vld [vmem:[#allocation5 + $0xf90] sm:$0xff]
    %v586 = vld [vmem:[#allocation5 + $0xf98] sm:$0xff]
    %v587 = vld [vmem:[#allocation5 + $0xfa0] sm:$0xff]
    %v588 = vld [vmem:[#allocation5 + $0xfa8] sm:$0xff]
    %v589 = vld [vmem:[#allocation5 + $0xfb0] sm:$0xff]
    %v590 = vld [vmem:[#allocation5 + $0xfb8] sm:$0xff]
    %v591 = vld [vmem:[#allocation5 + $0xfc0] sm:$0xff]
    %v592 = vld [vmem:[#allocation5 + $0xfc8] sm:$0xff]
    %v593 = vld [vmem:[#allocation5 + $0xfd0] sm:$0xff]
    %v594 = vld [vmem:[#allocation5 + $0xfd8] sm:$0xff]
    %v595 = vld [vmem:[#allocation5 + $0xfe0] sm:$0xff]
    %v596 = vld [vmem:[#allocation5 + $0xfe8] sm:$0xff]
    %v597 = vld [vmem:[#allocation5 + $0xff0] sm:$0xff]
    %v598 = vld [vmem:[#allocation5 + $0xff8] sm:$0xff]
    %v599 = vld [vmem:[#allocation7] sm:$0xf]
    %v601 = vperm.slane %v599, 0
    %v602 = vperm.slane %v599, 1
    %v603 = vperm.slane %v599, 2
    %v604 = vperm.slane %v599, 3
    %v617 = vunpack.c.l.b16 %v79
    %v618 = vunpack.c.h.b16 %v79
    %v619 = vunpack.c.l.b16 %v80
    %v620 = vunpack.c.h.b16 %v80
    %v621 = vunpack.c.l.b16 %v81
    %v622 = vunpack.c.h.b16 %v81
    %v623 = vunpack.c.l.b16 %v82
    %v624 = vunpack.c.h.b16 %v82
    %v625 = vunpack.c.l.b16 %v83
    %v626 = vunpack.c.h.b16 %v83
    %v627 = vunpack.c.l.b16 %v84
    %v628 = vunpack.c.h.b16 %v84
    %v629 = vunpack.c.l.b16 %v85
    %v630 = vunpack.c.h.b16 %v85
    %v631 = vunpack.c.l.b16 %v86
    %v632 = vunpack.c.h.b16 %v86
    %v633 = vpack.c.b16 %v617, %v617
    %v634 = vpack.c.b16 %v618, %v618
    %v635 = vpack.c.b16 %v619, %v619
    %v636 = vpack.c.b16 %v620, %v620
    %v637 = vpack.c.b16 %v621, %v621
    %v638 = vpack.c.b16 %v622, %v622
    %v639 = vpack.c.b16 %v623, %v623
    %v640 = vpack.c.b16 %v624, %v624
    %v641 = vpack.c.b16 %v625, %v625
    %v642 = vpack.c.b16 %v626, %v626
    %v643 = vpack.c.b16 %v627, %v627
    %v644 = vpack.c.b16 %v628, %v628
    %v645 = vpack.c.b16 %v629, %v629
    %v646 = vpack.c.b16 %v630, %v630
    %v647 = vpack.c.b16 %v631, %v631
    %v648 = vpack.c.b16 %v632, %v632
    %v1177 = vunpack.c.l.b16 %v87
    %v1178 = vunpack.c.h.b16 %v87
    %v1179 = vunpack.c.l.b16 %v88
    %v1180 = vunpack.c.h.b16 %v88
    %v1181 = vunpack.c.l.b16 %v89
    %v1182 = vunpack.c.h.b16 %v89
    %v1183 = vunpack.c.l.b16 %v90
    %v1184 = vunpack.c.h.b16 %v90
    %v1185 = vunpack.c.l.b16 %v91
    %v1186 = vunpack.c.h.b16 %v91
    %v1187 = vunpack.c.l.b16 %v92
    %v1188 = vunpack.c.h.b16 %v92
    %v1189 = vunpack.c.l.b16 %v93
    %v1190 = vunpack.c.h.b16 %v93
    %v1191 = vunpack.c.l.b16 %v94
    %v1192 = vunpack.c.h.b16 %v94
    %v1193 = vunpack.c.l.b16 %v95
    %v1194 = vunpack.c.h.b16 %v95
    %v1195 = vunpack.c.l.b16 %v96
    %v1196 = vunpack.c.h.b16 %v96
    %v1197 = vunpack.c.l.b16 %v97
    %v1198 = vunpack.c.h.b16 %v97
    %v1199 = vunpack.c.l.b16 %v98
    %v1200 = vunpack.c.h.b16 %v98
    %v1201 = vunpack.c.l.b16 %v99
    %v1202 = vunpack.c.h.b16 %v99
    %v1203 = vunpack.c.l.b16 %v100
    %v1204 = vunpack.c.h.b16 %v100
    %v1205 = vunpack.c.l.b16 %v101
    %v1206 = vunpack.c.h.b16 %v101
    %v1207 = vunpack.c.l.b16 %v102
    %v1208 = vunpack.c.h.b16 %v102
    %v1209 = vunpack.c.l.b16 %v103
    %v1210 = vunpack.c.h.b16 %v103
    %v1211 = vunpack.c.l.b16 %v104
    %v1212 = vunpack.c.h.b16 %v104
    %v1213 = vunpack.c.l.b16 %v105
    %v1214 = vunpack.c.h.b16 %v105
    %v1215 = vunpack.c.l.b16 %v106
    %v1216 = vunpack.c.h.b16 %v106
    %v1217 = vunpack.c.l.b16 %v107
    %v1218 = vunpack.c.h.b16 %v107
    %v1219 = vunpack.c.l.b16 %v108
    %v1220 = vunpack.c.h.b16 %v108
    %v1221 = vunpack.c.l.b16 %v109
    %v1222 = vunpack.c.h.b16 %v109
    %v1223 = vunpack.c.l.b16 %v110
    %v1224 = vunpack.c.h.b16 %v110
    %v1225 = vunpack.c.l.b16 %v111
    %v1226 = vunpack.c.h.b16 %v111
    %v1227 = vunpack.c.l.b16 %v112
    %v1228 = vunpack.c.h.b16 %v112
    %v1229 = vunpack.c.l.b16 %v113
    %v1230 = vunpack.c.h.b16 %v113
    %v1231 = vunpack.c.l.b16 %v114
    %v1232 = vunpack.c.h.b16 %v114
    %v1233 = vunpack.c.l.b16 %v115
    %v1234 = vunpack.c.h.b16 %v115
    %v1235 = vunpack.c.l.b16 %v116
    %v1236 = vunpack.c.h.b16 %v116
    %v1237 = vunpack.c.l.b16 %v117
    %v1238 = vunpack.c.h.b16 %v117
    %v1239 = vunpack.c.l.b16 %v118
    %v1240 = vunpack.c.h.b16 %v118
    %v1241 = vunpack.c.l.b16 %v119
    %v1242 = vunpack.c.h.b16 %v119
    %v1243 = vunpack.c.l.b16 %v120
    %v1244 = vunpack.c.h.b16 %v120
    %v1245 = vunpack.c.l.b16 %v121
    %v1246 = vunpack.c.h.b16 %v121
    %v1247 = vunpack.c.l.b16 %v122
    %v1248 = vunpack.c.h.b16 %v122
    %v1249 = vunpack.c.l.b16 %v123
    %v1250 = vunpack.c.h.b16 %v123
    %v1251 = vunpack.c.l.b16 %v124
    %v1252 = vunpack.c.h.b16 %v124
    %v1253 = vunpack.c.l.b16 %v125
    %v1254 = vunpack.c.h.b16 %v125
    %v1255 = vunpack.c.l.b16 %v126
    %v1256 = vunpack.c.h.b16 %v126
    %v1257 = vunpack.c.l.b16 %v127
    %v1258 = vunpack.c.h.b16 %v127
    %v1259 = vunpack.c.l.b16 %v128
    %v1260 = vunpack.c.h.b16 %v128
    %v1261 = vunpack.c.l.b16 %v129
    %v1262 = vunpack.c.h.b16 %v129
    %v1263 = vunpack.c.l.b16 %v130
    %v1264 = vunpack.c.h.b16 %v130
    %v1265 = vunpack.c.l.b16 %v131
    %v1266 = vunpack.c.h.b16 %v131
    %v1267 = vunpack.c.l.b16 %v132
    %v1268 = vunpack.c.h.b16 %v132
    %v1269 = vunpack.c.l.b16 %v133
    %v1270 = vunpack.c.h.b16 %v133
    %v1271 = vunpack.c.l.b16 %v134
    %v1272 = vunpack.c.h.b16 %v134
    %v1273 = vunpack.c.l.b16 %v135
    %v1274 = vunpack.c.h.b16 %v135
    %v1275 = vunpack.c.l.b16 %v136
    %v1276 = vunpack.c.h.b16 %v136
    %v1277 = vunpack.c.l.b16 %v137
    %v1278 = vunpack.c.h.b16 %v137
    %v1279 = vunpack.c.l.b16 %v138
    %v1280 = vunpack.c.h.b16 %v138
    %v1281 = vunpack.c.l.b16 %v139
    %v1282 = vunpack.c.h.b16 %v139
    %v1283 = vunpack.c.l.b16 %v140
    %v1284 = vunpack.c.h.b16 %v140
    %v1285 = vunpack.c.l.b16 %v141
    %v1286 = vunpack.c.h.b16 %v141
    %v1287 = vunpack.c.l.b16 %v142
    %v1288 = vunpack.c.h.b16 %v142
    %v1289 = vunpack.c.l.b16 %v143
    %v1290 = vunpack.c.h.b16 %v143
    %v1291 = vunpack.c.l.b16 %v144
    %v1292 = vunpack.c.h.b16 %v144
    %v1293 = vunpack.c.l.b16 %v145
    %v1294 = vunpack.c.h.b16 %v145
    %v1295 = vunpack.c.l.b16 %v146
    %v1296 = vunpack.c.h.b16 %v146
    %v1297 = vunpack.c.l.b16 %v147
    %v1298 = vunpack.c.h.b16 %v147
    %v1299 = vunpack.c.l.b16 %v148
    %v1300 = vunpack.c.h.b16 %v148
    %v1301 = vunpack.c.l.b16 %v149
    %v1302 = vunpack.c.h.b16 %v149
    %v1303 = vunpack.c.l.b16 %v150
    %v1304 = vunpack.c.h.b16 %v150
    %v1305 = vunpack.c.l.b16 %v151
    %v1306 = vunpack.c.h.b16 %v151
    %v1307 = vunpack.c.l.b16 %v152
    %v1308 = vunpack.c.h.b16 %v152
    %v1309 = vunpack.c.l.b16 %v153
    %v1310 = vunpack.c.h.b16 %v153
    %v1311 = vunpack.c.l.b16 %v154
    %v1312 = vunpack.c.h.b16 %v154
    %v1313 = vunpack.c.l.b16 %v155
    %v1314 = vunpack.c.h.b16 %v155
    %v1315 = vunpack.c.l.b16 %v156
    %v1316 = vunpack.c.h.b16 %v156
    %v1317 = vunpack.c.l.b16 %v157
    %v1318 = vunpack.c.h.b16 %v157
    %v1319 = vunpack.c.l.b16 %v158
    %v1320 = vunpack.c.h.b16 %v158
    %v1321 = vunpack.c.l.b16 %v159
    %v1322 = vunpack.c.h.b16 %v159
    %v1323 = vunpack.c.l.b16 %v160
    %v1324 = vunpack.c.h.b16 %v160
    %v1325 = vunpack.c.l.b16 %v161
    %v1326 = vunpack.c.h.b16 %v161
    %v1327 = vunpack.c.l.b16 %v162
    %v1328 = vunpack.c.h.b16 %v162
    %v1329 = vunpack.c.l.b16 %v163
    %v1330 = vunpack.c.h.b16 %v163
    %v1331 = vunpack.c.l.b16 %v164
    %v1332 = vunpack.c.h.b16 %v164
    %v1333 = vunpack.c.l.b16 %v165
    %v1334 = vunpack.c.h.b16 %v165
    %v1335 = vunpack.c.l.b16 %v166
    %v1336 = vunpack.c.h.b16 %v166
    %v1337 = vunpack.c.l.b16 %v167
    %v1338 = vunpack.c.h.b16 %v167
    %v1339 = vunpack.c.l.b16 %v168
    %v1340 = vunpack.c.h.b16 %v168
    %v1341 = vunpack.c.l.b16 %v169
    %v1342 = vunpack.c.h.b16 %v169
    %v1343 = vunpack.c.l.b16 %v170
    %v1344 = vunpack.c.h.b16 %v170
    %v1345 = vunpack.c.l.b16 %v171
    %v1346 = vunpack.c.h.b16 %v171
    %v1347 = vunpack.c.l.b16 %v172
    %v1348 = vunpack.c.h.b16 %v172
    %v1349 = vunpack.c.l.b16 %v173
    %v1350 = vunpack.c.h.b16 %v173
    %v1351 = vunpack.c.l.b16 %v174
    %v1352 = vunpack.c.h.b16 %v174
    %v1353 = vunpack.c.l.b16 %v175
    %v1354 = vunpack.c.h.b16 %v175
    %v1355 = vunpack.c.l.b16 %v176
    %v1356 = vunpack.c.h.b16 %v176
    %v1357 = vunpack.c.l.b16 %v177
    %v1358 = vunpack.c.h.b16 %v177
    %v1359 = vunpack.c.l.b16 %v178
    %v1360 = vunpack.c.h.b16 %v178
    %v1361 = vunpack.c.l.b16 %v179
    %v1362 = vunpack.c.h.b16 %v179
    %v1363 = vunpack.c.l.b16 %v180
    %v1364 = vunpack.c.h.b16 %v180
    %v1365 = vunpack.c.l.b16 %v181
    %v1366 = vunpack.c.h.b16 %v181
    %v1367 = vunpack.c.l.b16 %v182
    %v1368 = vunpack.c.h.b16 %v182
    %v1369 = vunpack.c.l.b16 %v183
    %v1370 = vunpack.c.h.b16 %v183
    %v1371 = vunpack.c.l.b16 %v184
    %v1372 = vunpack.c.h.b16 %v184
    %v1373 = vunpack.c.l.b16 %v185
    %v1374 = vunpack.c.h.b16 %v185
    %v1375 = vunpack.c.l.b16 %v186
    %v1376 = vunpack.c.h.b16 %v186
    %v1377 = vunpack.c.l.b16 %v187
    %v1378 = vunpack.c.h.b16 %v187
    %v1379 = vunpack.c.l.b16 %v188
    %v1380 = vunpack.c.h.b16 %v188
    %v1381 = vunpack.c.l.b16 %v189
    %v1382 = vunpack.c.h.b16 %v189
    %v1383 = vunpack.c.l.b16 %v190
    %v1384 = vunpack.c.h.b16 %v190
    %v1385 = vunpack.c.l.b16 %v191
    %v1386 = vunpack.c.h.b16 %v191
    %v1387 = vunpack.c.l.b16 %v192
    %v1388 = vunpack.c.h.b16 %v192
    %v1389 = vunpack.c.l.b16 %v193
    %v1390 = vunpack.c.h.b16 %v193
    %v1391 = vunpack.c.l.b16 %v194
    %v1392 = vunpack.c.h.b16 %v194
    %v1393 = vunpack.c.l.b16 %v195
    %v1394 = vunpack.c.h.b16 %v195
    %v1395 = vunpack.c.l.b16 %v196
    %v1396 = vunpack.c.h.b16 %v196
    %v1397 = vunpack.c.l.b16 %v197
    %v1398 = vunpack.c.h.b16 %v197
    %v1399 = vunpack.c.l.b16 %v198
    %v1400 = vunpack.c.h.b16 %v198
    %v1401 = vunpack.c.l.b16 %v199
    %v1402 = vunpack.c.h.b16 %v199
    %v1403 = vunpack.c.l.b16 %v200
    %v1404 = vunpack.c.h.b16 %v200
    %v1405 = vunpack.c.l.b16 %v201
    %v1406 = vunpack.c.h.b16 %v201
    %v1407 = vunpack.c.l.b16 %v202
    %v1408 = vunpack.c.h.b16 %v202
    %v1409 = vunpack.c.l.b16 %v203
    %v1410 = vunpack.c.h.b16 %v203
    %v1411 = vunpack.c.l.b16 %v204
    %v1412 = vunpack.c.h.b16 %v204
    %v1413 = vunpack.c.l.b16 %v205
    %v1414 = vunpack.c.h.b16 %v205
    %v1415 = vunpack.c.l.b16 %v206
    %v1416 = vunpack.c.h.b16 %v206
    %v1417 = vunpack.c.l.b16 %v207
    %v1418 = vunpack.c.h.b16 %v207
    %v1419 = vunpack.c.l.b16 %v208
    %v1420 = vunpack.c.h.b16 %v208
    %v1421 = vunpack.c.l.b16 %v209
    %v1422 = vunpack.c.h.b16 %v209
    %v1423 = vunpack.c.l.b16 %v210
    %v1424 = vunpack.c.h.b16 %v210
    %v1425 = vunpack.c.l.b16 %v211
    %v1426 = vunpack.c.h.b16 %v211
    %v1427 = vunpack.c.l.b16 %v212
    %v1428 = vunpack.c.h.b16 %v212
    %v1429 = vunpack.c.l.b16 %v213
    %v1430 = vunpack.c.h.b16 %v213
    %v1431 = vunpack.c.l.b16 %v214
    %v1432 = vunpack.c.h.b16 %v214
    %v1433 = vunpack.c.l.b16 %v215
    %v1434 = vunpack.c.h.b16 %v215
    %v1435 = vunpack.c.l.b16 %v216
    %v1436 = vunpack.c.h.b16 %v216
    %v1437 = vunpack.c.l.b16 %v217
    %v1438 = vunpack.c.h.b16 %v217
    %v1439 = vunpack.c.l.b16 %v218
    %v1440 = vunpack.c.h.b16 %v218
    %v1441 = vunpack.c.l.b16 %v219
    %v1442 = vunpack.c.h.b16 %v219
    %v1443 = vunpack.c.l.b16 %v220
    %v1444 = vunpack.c.h.b16 %v220
    %v1445 = vunpack.c.l.b16 %v221
    %v1446 = vunpack.c.h.b16 %v221
    %v1447 = vunpack.c.l.b16 %v222
    %v1448 = vunpack.c.h.b16 %v222
    %v1449 = vunpack.c.l.b16 %v223
    %v1450 = vunpack.c.h.b16 %v223
    %v1451 = vunpack.c.l.b16 %v224
    %v1452 = vunpack.c.h.b16 %v224
    %v1453 = vunpack.c.l.b16 %v225
    %v1454 = vunpack.c.h.b16 %v225
    %v1455 = vunpack.c.l.b16 %v226
    %v1456 = vunpack.c.h.b16 %v226
    %v1457 = vunpack.c.l.b16 %v227
    %v1458 = vunpack.c.h.b16 %v227
    %v1459 = vunpack.c.l.b16 %v228
    %v1460 = vunpack.c.h.b16 %v228
    %v1461 = vunpack.c.l.b16 %v229
    %v1462 = vunpack.c.h.b16 %v229
    %v1463 = vunpack.c.l.b16 %v230
    %v1464 = vunpack.c.h.b16 %v230
    %v1465 = vunpack.c.l.b16 %v231
    %v1466 = vunpack.c.h.b16 %v231
    %v1467 = vunpack.c.l.b16 %v232
    %v1468 = vunpack.c.h.b16 %v232
    %v1469 = vunpack.c.l.b16 %v233
    %v1470 = vunpack.c.h.b16 %v233
    %v1471 = vunpack.c.l.b16 %v234
    %v1472 = vunpack.c.h.b16 %v234
    %v1473 = vunpack.c.l.b16 %v235
    %v1474 = vunpack.c.h.b16 %v235
    %v1475 = vunpack.c.l.b16 %v236
    %v1476 = vunpack.c.h.b16 %v236
    %v1477 = vunpack.c.l.b16 %v237
    %v1478 = vunpack.c.h.b16 %v237
    %v1479 = vunpack.c.l.b16 %v238
    %v1480 = vunpack.c.h.b16 %v238
    %v1481 = vunpack.c.l.b16 %v239
    %v1482 = vunpack.c.h.b16 %v239
    %v1483 = vunpack.c.l.b16 %v240
    %v1484 = vunpack.c.h.b16 %v240
    %v1485 = vunpack.c.l.b16 %v241
    %v1486 = vunpack.c.h.b16 %v241
    %v1487 = vunpack.c.l.b16 %v242
    %v1488 = vunpack.c.h.b16 %v242
    %v1489 = vunpack.c.l.b16 %v243
    %v1490 = vunpack.c.h.b16 %v243
    %v1491 = vunpack.c.l.b16 %v244
    %v1492 = vunpack.c.h.b16 %v244
    %v1493 = vunpack.c.l.b16 %v245
    %v1494 = vunpack.c.h.b16 %v245
    %v1495 = vunpack.c.l.b16 %v246
    %v1496 = vunpack.c.h.b16 %v246
    %v1497 = vunpack.c.l.b16 %v247
    %v1498 = vunpack.c.h.b16 %v247
    %v1499 = vunpack.c.l.b16 %v248
    %v1500 = vunpack.c.h.b16 %v248
    %v1501 = vunpack.c.l.b16 %v249
    %v1502 = vunpack.c.h.b16 %v249
    %v1503 = vunpack.c.l.b16 %v250
    %v1504 = vunpack.c.h.b16 %v250
    %v1505 = vunpack.c.l.b16 %v251
    %v1506 = vunpack.c.h.b16 %v251
    %v1507 = vunpack.c.l.b16 %v252
    %v1508 = vunpack.c.h.b16 %v252
    %v1509 = vunpack.c.l.b16 %v253
    %v1510 = vunpack.c.h.b16 %v253
    %v1511 = vunpack.c.l.b16 %v254
    %v1512 = vunpack.c.h.b16 %v254
    %v1513 = vunpack.c.l.b16 %v255
    %v1514 = vunpack.c.h.b16 %v255
    %v1515 = vunpack.c.l.b16 %v256
    %v1516 = vunpack.c.h.b16 %v256
    %v1517 = vunpack.c.l.b16 %v257
    %v1518 = vunpack.c.h.b16 %v257
    %v1519 = vunpack.c.l.b16 %v258
    %v1520 = vunpack.c.h.b16 %v258
    %v1521 = vunpack.c.l.b16 %v259
    %v1522 = vunpack.c.h.b16 %v259
    %v1523 = vunpack.c.l.b16 %v260
    %v1524 = vunpack.c.h.b16 %v260
    %v1525 = vunpack.c.l.b16 %v261
    %v1526 = vunpack.c.h.b16 %v261
    %v1527 = vunpack.c.l.b16 %v262
    %v1528 = vunpack.c.h.b16 %v262
    %v1529 = vunpack.c.l.b16 %v263
    %v1530 = vunpack.c.h.b16 %v263
    %v1531 = vunpack.c.l.b16 %v264
    %v1532 = vunpack.c.h.b16 %v264
    %v1533 = vunpack.c.l.b16 %v265
    %v1534 = vunpack.c.h.b16 %v265
    %v1535 = vunpack.c.l.b16 %v266
    %v1536 = vunpack.c.h.b16 %v266
    %v1537 = vunpack.c.l.b16 %v267
    %v1538 = vunpack.c.h.b16 %v267
    %v1539 = vunpack.c.l.b16 %v268
    %v1540 = vunpack.c.h.b16 %v268
    %v1541 = vunpack.c.l.b16 %v269
    %v1542 = vunpack.c.h.b16 %v269
    %v1543 = vunpack.c.l.b16 %v270
    %v1544 = vunpack.c.h.b16 %v270
    %v1545 = vunpack.c.l.b16 %v271
    %v1546 = vunpack.c.h.b16 %v271
    %v1547 = vunpack.c.l.b16 %v272
    %v1548 = vunpack.c.h.b16 %v272
    %v1549 = vunpack.c.l.b16 %v273
    %v1550 = vunpack.c.h.b16 %v273
    %v1551 = vunpack.c.l.b16 %v274
    %v1552 = vunpack.c.h.b16 %v274
    %v1553 = vunpack.c.l.b16 %v275
    %v1554 = vunpack.c.h.b16 %v275
    %v1555 = vunpack.c.l.b16 %v276
    %v1556 = vunpack.c.h.b16 %v276
    %v1557 = vunpack.c.l.b16 %v277
    %v1558 = vunpack.c.h.b16 %v277
    %v1559 = vunpack.c.l.b16 %v278
    %v1560 = vunpack.c.h.b16 %v278
    %v1561 = vunpack.c.l.b16 %v279
    %v1562 = vunpack.c.h.b16 %v279
    %v1563 = vunpack.c.l.b16 %v280
    %v1564 = vunpack.c.h.b16 %v280
    %v1565 = vunpack.c.l.b16 %v281
    %v1566 = vunpack.c.h.b16 %v281
    %v1567 = vunpack.c.l.b16 %v282
    %v1568 = vunpack.c.h.b16 %v282
    %v1569 = vunpack.c.l.b16 %v283
    %v1570 = vunpack.c.h.b16 %v283
    %v1571 = vunpack.c.l.b16 %v284
    %v1572 = vunpack.c.h.b16 %v284
    %v1573 = vunpack.c.l.b16 %v285
    %v1574 = vunpack.c.h.b16 %v285
    %v1575 = vunpack.c.l.b16 %v286
    %v1576 = vunpack.c.h.b16 %v286
    %v1577 = vunpack.c.l.b16 %v287
    %v1578 = vunpack.c.h.b16 %v287
    %v1579 = vunpack.c.l.b16 %v288
    %v1580 = vunpack.c.h.b16 %v288
    %v1581 = vunpack.c.l.b16 %v289
    %v1582 = vunpack.c.h.b16 %v289
    %v1583 = vunpack.c.l.b16 %v290
    %v1584 = vunpack.c.h.b16 %v290
    %v1585 = vunpack.c.l.b16 %v291
    %v1586 = vunpack.c.h.b16 %v291
    %v1587 = vunpack.c.l.b16 %v292
    %v1588 = vunpack.c.h.b16 %v292
    %v1589 = vunpack.c.l.b16 %v293
    %v1590 = vunpack.c.h.b16 %v293
    %v1591 = vunpack.c.l.b16 %v294
    %v1592 = vunpack.c.h.b16 %v294
    %v1593 = vunpack.c.l.b16 %v295
    %v1594 = vunpack.c.h.b16 %v295
    %v1595 = vunpack.c.l.b16 %v296
    %v1596 = vunpack.c.h.b16 %v296
    %v1597 = vunpack.c.l.b16 %v297
    %v1598 = vunpack.c.h.b16 %v297
    %v1599 = vunpack.c.l.b16 %v298
    %v1600 = vunpack.c.h.b16 %v298
    %v1601 = vunpack.c.l.b16 %v299
    %v1602 = vunpack.c.h.b16 %v299
    %v1603 = vunpack.c.l.b16 %v300
    %v1604 = vunpack.c.h.b16 %v300
    %v1605 = vunpack.c.l.b16 %v301
    %v1606 = vunpack.c.h.b16 %v301
    %v1607 = vunpack.c.l.b16 %v302
    %v1608 = vunpack.c.h.b16 %v302
    %v1609 = vunpack.c.l.b16 %v303
    %v1610 = vunpack.c.h.b16 %v303
    %v1611 = vunpack.c.l.b16 %v304
    %v1612 = vunpack.c.h.b16 %v304
    %v1613 = vunpack.c.l.b16 %v305
    %v1614 = vunpack.c.h.b16 %v305
    %v1615 = vunpack.c.l.b16 %v306
    %v1616 = vunpack.c.h.b16 %v306
    %v1617 = vunpack.c.l.b16 %v307
    %v1618 = vunpack.c.h.b16 %v307
    %v1619 = vunpack.c.l.b16 %v308
    %v1620 = vunpack.c.h.b16 %v308
    %v1621 = vunpack.c.l.b16 %v309
    %v1622 = vunpack.c.h.b16 %v309
    %v1623 = vunpack.c.l.b16 %v310
    %v1624 = vunpack.c.h.b16 %v310
    %v1625 = vunpack.c.l.b16 %v311
    %v1626 = vunpack.c.h.b16 %v311
    %v1627 = vunpack.c.l.b16 %v312
    %v1628 = vunpack.c.h.b16 %v312
    %v1629 = vunpack.c.l.b16 %v313
    %v1630 = vunpack.c.h.b16 %v313
    %v1631 = vunpack.c.l.b16 %v314
    %v1632 = vunpack.c.h.b16 %v314
    %v1633 = vunpack.c.l.b16 %v315
    %v1634 = vunpack.c.h.b16 %v315
    %v1635 = vunpack.c.l.b16 %v316
    %v1636 = vunpack.c.h.b16 %v316
    %v1637 = vunpack.c.l.b16 %v317
    %v1638 = vunpack.c.h.b16 %v317
    %v1639 = vunpack.c.l.b16 %v318
    %v1640 = vunpack.c.h.b16 %v318
    %v1641 = vunpack.c.l.b16 %v319
    %v1642 = vunpack.c.h.b16 %v319
    %v1643 = vunpack.c.l.b16 %v320
    %v1644 = vunpack.c.h.b16 %v320
    %v1645 = vunpack.c.l.b16 %v321
    %v1646 = vunpack.c.h.b16 %v321
    %v1647 = vunpack.c.l.b16 %v322
    %v1648 = vunpack.c.h.b16 %v322
    %v1649 = vunpack.c.l.b16 %v323
    %v1650 = vunpack.c.h.b16 %v323
    %v1651 = vunpack.c.l.b16 %v324
    %v1652 = vunpack.c.h.b16 %v324
    %v1653 = vunpack.c.l.b16 %v325
    %v1654 = vunpack.c.h.b16 %v325
    %v1655 = vunpack.c.l.b16 %v326
    %v1656 = vunpack.c.h.b16 %v326
    %v1657 = vunpack.c.l.b16 %v327
    %v1658 = vunpack.c.h.b16 %v327
    %v1659 = vunpack.c.l.b16 %v328
    %v1660 = vunpack.c.h.b16 %v328
    %v1661 = vunpack.c.l.b16 %v329
    %v1662 = vunpack.c.h.b16 %v329
    %v1663 = vunpack.c.l.b16 %v330
    %v1664 = vunpack.c.h.b16 %v330
    %v1665 = vunpack.c.l.b16 %v331
    %v1666 = vunpack.c.h.b16 %v331
    %v1667 = vunpack.c.l.b16 %v332
    %v1668 = vunpack.c.h.b16 %v332
    %v1669 = vunpack.c.l.b16 %v333
    %v1670 = vunpack.c.h.b16 %v333
    %v1671 = vunpack.c.l.b16 %v334
    %v1672 = vunpack.c.h.b16 %v334
    %v1673 = vunpack.c.l.b16 %v335
    %v1674 = vunpack.c.h.b16 %v335
    %v1675 = vunpack.c.l.b16 %v336
    %v1676 = vunpack.c.h.b16 %v336
    %v1677 = vunpack.c.l.b16 %v337
    %v1678 = vunpack.c.h.b16 %v337
    %v1679 = vunpack.c.l.b16 %v338
    %v1680 = vunpack.c.h.b16 %v338
    %v1681 = vunpack.c.l.b16 %v339
    %v1682 = vunpack.c.h.b16 %v339
    %v1683 = vunpack.c.l.b16 %v340
    %v1684 = vunpack.c.h.b16 %v340
    %v1685 = vunpack.c.l.b16 %v341
    %v1686 = vunpack.c.h.b16 %v341
    %v1687 = vunpack.c.l.b16 %v342
    %v1688 = vunpack.c.h.b16 %v342
    %v1689 = vunpack.c.l.b16 %v343
    %v1690 = vunpack.c.h.b16 %v343
    %v1691 = vunpack.c.l.b16 %v344
    %v1692 = vunpack.c.h.b16 %v344
    %v1693 = vunpack.c.l.b16 %v345
    %v1694 = vunpack.c.h.b16 %v345
    %v1695 = vunpack.c.l.b16 %v346
    %v1696 = vunpack.c.h.b16 %v346
    %v1697 = vunpack.c.l.b16 %v347
    %v1698 = vunpack.c.h.b16 %v347
    %v1699 = vunpack.c.l.b16 %v348
    %v1700 = vunpack.c.h.b16 %v348
    %v1701 = vunpack.c.l.b16 %v349
    %v1702 = vunpack.c.h.b16 %v349
    %v1703 = vunpack.c.l.b16 %v350
    %v1704 = vunpack.c.h.b16 %v350
    %v1705 = vunpack.c.l.b16 %v351
    %v1706 = vunpack.c.h.b16 %v351
    %v1707 = vunpack.c.l.b16 %v352
    %v1708 = vunpack.c.h.b16 %v352
    %v1709 = vunpack.c.l.b16 %v353
    %v1710 = vunpack.c.h.b16 %v353
    %v1711 = vunpack.c.l.b16 %v354
    %v1712 = vunpack.c.h.b16 %v354
    %v1713 = vunpack.c.l.b16 %v355
    %v1714 = vunpack.c.h.b16 %v355
    %v1715 = vunpack.c.l.b16 %v356
    %v1716 = vunpack.c.h.b16 %v356
    %v1717 = vunpack.c.l.b16 %v357
    %v1718 = vunpack.c.h.b16 %v357
    %v1719 = vunpack.c.l.b16 %v358
    %v1720 = vunpack.c.h.b16 %v358
    %v1721 = vunpack.c.l.b16 %v359
    %v1722 = vunpack.c.h.b16 %v359
    %v1723 = vunpack.c.l.b16 %v360
    %v1724 = vunpack.c.h.b16 %v360
    %v1725 = vunpack.c.l.b16 %v361
    %v1726 = vunpack.c.h.b16 %v361
    %v1727 = vunpack.c.l.b16 %v362
    %v1728 = vunpack.c.h.b16 %v362
    %v1729 = vunpack.c.l.b16 %v363
    %v1730 = vunpack.c.h.b16 %v363
    %v1731 = vunpack.c.l.b16 %v364
    %v1732 = vunpack.c.h.b16 %v364
    %v1733 = vunpack.c.l.b16 %v365
    %v1734 = vunpack.c.h.b16 %v365
    %v1735 = vunpack.c.l.b16 %v366
    %v1736 = vunpack.c.h.b16 %v366
    %v1737 = vunpack.c.l.b16 %v367
    %v1738 = vunpack.c.h.b16 %v367
    %v1739 = vunpack.c.l.b16 %v368
    %v1740 = vunpack.c.h.b16 %v368
    %v1741 = vunpack.c.l.b16 %v369
    %v1742 = vunpack.c.h.b16 %v369
    %v1743 = vunpack.c.l.b16 %v370
    %v1744 = vunpack.c.h.b16 %v370
    %v1745 = vunpack.c.l.b16 %v371
    %v1746 = vunpack.c.h.b16 %v371
    %v1747 = vunpack.c.l.b16 %v372
    %v1748 = vunpack.c.h.b16 %v372
    %v1749 = vunpack.c.l.b16 %v373
    %v1750 = vunpack.c.h.b16 %v373
    %v1751 = vunpack.c.l.b16 %v374
    %v1752 = vunpack.c.h.b16 %v374
    %v1753 = vunpack.c.l.b16 %v375
    %v1754 = vunpack.c.h.b16 %v375
    %v1755 = vunpack.c.l.b16 %v376
    %v1756 = vunpack.c.h.b16 %v376
    %v1757 = vunpack.c.l.b16 %v377
    %v1758 = vunpack.c.h.b16 %v377
    %v1759 = vunpack.c.l.b16 %v378
    %v1760 = vunpack.c.h.b16 %v378
    %v1761 = vunpack.c.l.b16 %v379
    %v1762 = vunpack.c.h.b16 %v379
    %v1763 = vunpack.c.l.b16 %v380
    %v1764 = vunpack.c.h.b16 %v380
    %v1765 = vunpack.c.l.b16 %v381
    %v1766 = vunpack.c.h.b16 %v381
    %v1767 = vunpack.c.l.b16 %v382
    %v1768 = vunpack.c.h.b16 %v382
    %v1769 = vunpack.c.l.b16 %v383
    %v1770 = vunpack.c.h.b16 %v383
    %v1771 = vunpack.c.l.b16 %v384
    %v1772 = vunpack.c.h.b16 %v384
    %v1773 = vunpack.c.l.b16 %v385
    %v1774 = vunpack.c.h.b16 %v385
    %v1775 = vunpack.c.l.b16 %v386
    %v1776 = vunpack.c.h.b16 %v386
    %v1777 = vunpack.c.l.b16 %v387
    %v1778 = vunpack.c.h.b16 %v387
    %v1779 = vunpack.c.l.b16 %v388
    %v1780 = vunpack.c.h.b16 %v388
    %v1781 = vunpack.c.l.b16 %v389
    %v1782 = vunpack.c.h.b16 %v389
    %v1783 = vunpack.c.l.b16 %v390
    %v1784 = vunpack.c.h.b16 %v390
    %v1785 = vunpack.c.l.b16 %v391
    %v1786 = vunpack.c.h.b16 %v391
    %v1787 = vunpack.c.l.b16 %v392
    %v1788 = vunpack.c.h.b16 %v392
    %v1789 = vunpack.c.l.b16 %v393
    %v1790 = vunpack.c.h.b16 %v393
    %v1791 = vunpack.c.l.b16 %v394
    %v1792 = vunpack.c.h.b16 %v394
    %v1793 = vunpack.c.l.b16 %v395
    %v1794 = vunpack.c.h.b16 %v395
    %v1795 = vunpack.c.l.b16 %v396
    %v1796 = vunpack.c.h.b16 %v396
    %v1797 = vunpack.c.l.b16 %v397
    %v1798 = vunpack.c.h.b16 %v397
    %v1799 = vunpack.c.l.b16 %v398
    %v1800 = vunpack.c.h.b16 %v398
    %v1801 = vunpack.c.l.b16 %v399
    %v1802 = vunpack.c.h.b16 %v399
    %v1803 = vunpack.c.l.b16 %v400
    %v1804 = vunpack.c.h.b16 %v400
    %v1805 = vunpack.c.l.b16 %v401
    %v1806 = vunpack.c.h.b16 %v401
    %v1807 = vunpack.c.l.b16 %v402
    %v1808 = vunpack.c.h.b16 %v402
    %v1809 = vunpack.c.l.b16 %v403
    %v1810 = vunpack.c.h.b16 %v403
    %v1811 = vunpack.c.l.b16 %v404
    %v1812 = vunpack.c.h.b16 %v404
    %v1813 = vunpack.c.l.b16 %v405
    %v1814 = vunpack.c.h.b16 %v405
    %v1815 = vunpack.c.l.b16 %v406
    %v1816 = vunpack.c.h.b16 %v406
    %v1817 = vunpack.c.l.b16 %v407
    %v1818 = vunpack.c.h.b16 %v407
    %v1819 = vunpack.c.l.b16 %v408
    %v1820 = vunpack.c.h.b16 %v408
    %v1821 = vunpack.c.l.b16 %v409
    %v1822 = vunpack.c.h.b16 %v409
    %v1823 = vunpack.c.l.b16 %v410
    %v1824 = vunpack.c.h.b16 %v410
    %v1825 = vunpack.c.l.b16 %v411
    %v1826 = vunpack.c.h.b16 %v411
    %v1827 = vunpack.c.l.b16 %v412
    %v1828 = vunpack.c.h.b16 %v412
    %v1829 = vunpack.c.l.b16 %v413
    %v1830 = vunpack.c.h.b16 %v413
    %v1831 = vunpack.c.l.b16 %v414
    %v1832 = vunpack.c.h.b16 %v414
    %v1833 = vunpack.c.l.b16 %v415
    %v1834 = vunpack.c.h.b16 %v415
    %v1835 = vunpack.c.l.b16 %v416
    %v1836 = vunpack.c.h.b16 %v416
    %v1837 = vunpack.c.l.b16 %v417
    %v1838 = vunpack.c.h.b16 %v417
    %v1839 = vunpack.c.l.b16 %v418
    %v1840 = vunpack.c.h.b16 %v418
    %v1841 = vunpack.c.l.b16 %v419
    %v1842 = vunpack.c.h.b16 %v419
    %v1843 = vunpack.c.l.b16 %v420
    %v1844 = vunpack.c.h.b16 %v420
    %v1845 = vunpack.c.l.b16 %v421
    %v1846 = vunpack.c.h.b16 %v421
    %v1847 = vunpack.c.l.b16 %v422
    %v1848 = vunpack.c.h.b16 %v422
    %v1849 = vunpack.c.l.b16 %v423
    %v1850 = vunpack.c.h.b16 %v423
    %v1851 = vunpack.c.l.b16 %v424
    %v1852 = vunpack.c.h.b16 %v424
    %v1853 = vunpack.c.l.b16 %v425
    %v1854 = vunpack.c.h.b16 %v425
    %v1855 = vunpack.c.l.b16 %v426
    %v1856 = vunpack.c.h.b16 %v426
    %v1857 = vunpack.c.l.b16 %v427
    %v1858 = vunpack.c.h.b16 %v427
    %v1859 = vunpack.c.l.b16 %v428
    %v1860 = vunpack.c.h.b16 %v428
    %v1861 = vunpack.c.l.b16 %v429
    %v1862 = vunpack.c.h.b16 %v429
    %v1863 = vunpack.c.l.b16 %v430
    %v1864 = vunpack.c.h.b16 %v430
    %v1865 = vunpack.c.l.b16 %v431
    %v1866 = vunpack.c.h.b16 %v431
    %v1867 = vunpack.c.l.b16 %v432
    %v1868 = vunpack.c.h.b16 %v432
    %v1869 = vunpack.c.l.b16 %v433
    %v1870 = vunpack.c.h.b16 %v433
    %v1871 = vunpack.c.l.b16 %v434
    %v1872 = vunpack.c.h.b16 %v434
    %v1873 = vunpack.c.l.b16 %v435
    %v1874 = vunpack.c.h.b16 %v435
    %v1875 = vunpack.c.l.b16 %v436
    %v1876 = vunpack.c.h.b16 %v436
    %v1877 = vunpack.c.l.b16 %v437
    %v1878 = vunpack.c.h.b16 %v437
    %v1879 = vunpack.c.l.b16 %v438
    %v1880 = vunpack.c.h.b16 %v438
    %v1881 = vunpack.c.l.b16 %v439
    %v1882 = vunpack.c.h.b16 %v439
    %v1883 = vunpack.c.l.b16 %v440
    %v1884 = vunpack.c.h.b16 %v440
    %v1885 = vunpack.c.l.b16 %v441
    %v1886 = vunpack.c.h.b16 %v441
    %v1887 = vunpack.c.l.b16 %v442
    %v1888 = vunpack.c.h.b16 %v442
    %v1889 = vunpack.c.l.b16 %v443
    %v1890 = vunpack.c.h.b16 %v443
    %v1891 = vunpack.c.l.b16 %v444
    %v1892 = vunpack.c.h.b16 %v444
    %v1893 = vunpack.c.l.b16 %v445
    %v1894 = vunpack.c.h.b16 %v445
    %v1895 = vunpack.c.l.b16 %v446
    %v1896 = vunpack.c.h.b16 %v446
    %v1897 = vunpack.c.l.b16 %v447
    %v1898 = vunpack.c.h.b16 %v447
    %v1899 = vunpack.c.l.b16 %v448
    %v1900 = vunpack.c.h.b16 %v448
    %v1901 = vunpack.c.l.b16 %v449
    %v1902 = vunpack.c.h.b16 %v449
    %v1903 = vunpack.c.l.b16 %v450
    %v1904 = vunpack.c.h.b16 %v450
    %v1905 = vunpack.c.l.b16 %v451
    %v1906 = vunpack.c.h.b16 %v451
    %v1907 = vunpack.c.l.b16 %v452
    %v1908 = vunpack.c.h.b16 %v452
    %v1909 = vunpack.c.l.b16 %v453
    %v1910 = vunpack.c.h.b16 %v453
    %v1911 = vunpack.c.l.b16 %v454
    %v1912 = vunpack.c.h.b16 %v454
    %v1913 = vunpack.c.l.b16 %v455
    %v1914 = vunpack.c.h.b16 %v455
    %v1915 = vunpack.c.l.b16 %v456
    %v1916 = vunpack.c.h.b16 %v456
    %v1917 = vunpack.c.l.b16 %v457
    %v1918 = vunpack.c.h.b16 %v457
    %v1919 = vunpack.c.l.b16 %v458
    %v1920 = vunpack.c.h.b16 %v458
    %v1921 = vunpack.c.l.b16 %v459
    %v1922 = vunpack.c.h.b16 %v459
    %v1923 = vunpack.c.l.b16 %v460
    %v1924 = vunpack.c.h.b16 %v460
    %v1925 = vunpack.c.l.b16 %v461
    %v1926 = vunpack.c.h.b16 %v461
    %v1927 = vunpack.c.l.b16 %v462
    %v1928 = vunpack.c.h.b16 %v462
    %v1929 = vunpack.c.l.b16 %v463
    %v1930 = vunpack.c.h.b16 %v463
    %v1931 = vunpack.c.l.b16 %v464
    %v1932 = vunpack.c.h.b16 %v464
    %v1933 = vunpack.c.l.b16 %v465
    %v1934 = vunpack.c.h.b16 %v465
    %v1935 = vunpack.c.l.b16 %v466
    %v1936 = vunpack.c.h.b16 %v466
    %v1937 = vunpack.c.l.b16 %v467
    %v1938 = vunpack.c.h.b16 %v467
    %v1939 = vunpack.c.l.b16 %v468
    %v1940 = vunpack.c.h.b16 %v468
    %v1941 = vunpack.c.l.b16 %v469
    %v1942 = vunpack.c.h.b16 %v469
    %v1943 = vunpack.c.l.b16 %v470
    %v1944 = vunpack.c.h.b16 %v470
    %v1945 = vunpack.c.l.b16 %v471
    %v1946 = vunpack.c.h.b16 %v471
    %v1947 = vunpack.c.l.b16 %v472
    %v1948 = vunpack.c.h.b16 %v472
    %v1949 = vunpack.c.l.b16 %v473
    %v1950 = vunpack.c.h.b16 %v473
    %v1951 = vunpack.c.l.b16 %v474
    %v1952 = vunpack.c.h.b16 %v474
    %v1953 = vunpack.c.l.b16 %v475
    %v1954 = vunpack.c.h.b16 %v475
    %v1955 = vunpack.c.l.b16 %v476
    %v1956 = vunpack.c.h.b16 %v476
    %v1957 = vunpack.c.l.b16 %v477
    %v1958 = vunpack.c.h.b16 %v477
    %v1959 = vunpack.c.l.b16 %v478
    %v1960 = vunpack.c.h.b16 %v478
    %v1961 = vunpack.c.l.b16 %v479
    %v1962 = vunpack.c.h.b16 %v479
    %v1963 = vunpack.c.l.b16 %v480
    %v1964 = vunpack.c.h.b16 %v480
    %v1965 = vunpack.c.l.b16 %v481
    %v1966 = vunpack.c.h.b16 %v481
    %v1967 = vunpack.c.l.b16 %v482
    %v1968 = vunpack.c.h.b16 %v482
    %v1969 = vunpack.c.l.b16 %v483
    %v1970 = vunpack.c.h.b16 %v483
    %v1971 = vunpack.c.l.b16 %v484
    %v1972 = vunpack.c.h.b16 %v484
    %v1973 = vunpack.c.l.b16 %v485
    %v1974 = vunpack.c.h.b16 %v485
    %v1975 = vunpack.c.l.b16 %v486
    %v1976 = vunpack.c.h.b16 %v486
    %v1977 = vunpack.c.l.b16 %v487
    %v1978 = vunpack.c.h.b16 %v487
    %v1979 = vunpack.c.l.b16 %v488
    %v1980 = vunpack.c.h.b16 %v488
    %v1981 = vunpack.c.l.b16 %v489
    %v1982 = vunpack.c.h.b16 %v489
    %v1983 = vunpack.c.l.b16 %v490
    %v1984 = vunpack.c.h.b16 %v490
    %v1985 = vunpack.c.l.b16 %v491
    %v1986 = vunpack.c.h.b16 %v491
    %v1987 = vunpack.c.l.b16 %v492
    %v1988 = vunpack.c.h.b16 %v492
    %v1989 = vunpack.c.l.b16 %v493
    %v1990 = vunpack.c.h.b16 %v493
    %v1991 = vunpack.c.l.b16 %v494
    %v1992 = vunpack.c.h.b16 %v494
    %v1993 = vunpack.c.l.b16 %v495
    %v1994 = vunpack.c.h.b16 %v495
    %v1995 = vunpack.c.l.b16 %v496
    %v1996 = vunpack.c.h.b16 %v496
    %v1997 = vunpack.c.l.b16 %v497
    %v1998 = vunpack.c.h.b16 %v497
    %v1999 = vunpack.c.l.b16 %v498
    %v2000 = vunpack.c.h.b16 %v498
    %v2001 = vunpack.c.l.b16 %v499
    %v2002 = vunpack.c.h.b16 %v499
    %v2003 = vunpack.c.l.b16 %v500
    %v2004 = vunpack.c.h.b16 %v500
    %v2005 = vunpack.c.l.b16 %v501
    %v2006 = vunpack.c.h.b16 %v501
    %v2007 = vunpack.c.l.b16 %v502
    %v2008 = vunpack.c.h.b16 %v502
    %v2009 = vunpack.c.l.b16 %v503
    %v2010 = vunpack.c.h.b16 %v503
    %v2011 = vunpack.c.l.b16 %v504
    %v2012 = vunpack.c.h.b16 %v504
    %v2013 = vunpack.c.l.b16 %v505
    %v2014 = vunpack.c.h.b16 %v505
    %v2015 = vunpack.c.l.b16 %v506
    %v2016 = vunpack.c.h.b16 %v506
    %v2017 = vunpack.c.l.b16 %v507
    %v2018 = vunpack.c.h.b16 %v507
    %v2019 = vunpack.c.l.b16 %v508
    %v2020 = vunpack.c.h.b16 %v508
    %v2021 = vunpack.c.l.b16 %v509
    %v2022 = vunpack.c.h.b16 %v509
    %v2023 = vunpack.c.l.b16 %v510
    %v2024 = vunpack.c.h.b16 %v510
    %v2025 = vunpack.c.l.b16 %v511
    %v2026 = vunpack.c.h.b16 %v511
    %v2027 = vunpack.c.l.b16 %v512
    %v2028 = vunpack.c.h.b16 %v512
    %v2029 = vunpack.c.l.b16 %v513
    %v2030 = vunpack.c.h.b16 %v513
    %v2031 = vunpack.c.l.b16 %v514
    %v2032 = vunpack.c.h.b16 %v514
    %v2033 = vunpack.c.l.b16 %v515
    %v2034 = vunpack.c.h.b16 %v515
    %v2035 = vunpack.c.l.b16 %v516
    %v2036 = vunpack.c.h.b16 %v516
    %v2037 = vunpack.c.l.b16 %v517
    %v2038 = vunpack.c.h.b16 %v517
    %v2039 = vunpack.c.l.b16 %v518
    %v2040 = vunpack.c.h.b16 %v518
    %v2041 = vunpack.c.l.b16 %v519
    %v2042 = vunpack.c.h.b16 %v519
    %v2043 = vunpack.c.l.b16 %v520
    %v2044 = vunpack.c.h.b16 %v520
    %v2045 = vunpack.c.l.b16 %v521
    %v2046 = vunpack.c.h.b16 %v521
    %v2047 = vunpack.c.l.b16 %v522
    %v2048 = vunpack.c.h.b16 %v522
    %v2049 = vunpack.c.l.b16 %v523
    %v2050 = vunpack.c.h.b16 %v523
    %v2051 = vunpack.c.l.b16 %v524
    %v2052 = vunpack.c.h.b16 %v524
    %v2053 = vunpack.c.l.b16 %v525
    %v2054 = vunpack.c.h.b16 %v525
    %v2055 = vunpack.c.l.b16 %v526
    %v2056 = vunpack.c.h.b16 %v526
    %v2057 = vunpack.c.l.b16 %v527
    %v2058 = vunpack.c.h.b16 %v527
    %v2059 = vunpack.c.l.b16 %v528
    %v2060 = vunpack.c.h.b16 %v528
    %v2061 = vunpack.c.l.b16 %v529
    %v2062 = vunpack.c.h.b16 %v529
    %v2063 = vunpack.c.l.b16 %v530
    %v2064 = vunpack.c.h.b16 %v530
    %v2065 = vunpack.c.l.b16 %v531
    %v2066 = vunpack.c.h.b16 %v531
    %v2067 = vunpack.c.l.b16 %v532
    %v2068 = vunpack.c.h.b16 %v532
    %v2069 = vunpack.c.l.b16 %v533
    %v2070 = vunpack.c.h.b16 %v533
    %v2071 = vunpack.c.l.b16 %v534
    %v2072 = vunpack.c.h.b16 %v534
    %v2073 = vunpack.c.l.b16 %v535
    %v2074 = vunpack.c.h.b16 %v535
    %v2075 = vunpack.c.l.b16 %v536
    %v2076 = vunpack.c.h.b16 %v536
    %v2077 = vunpack.c.l.b16 %v537
    %v2078 = vunpack.c.h.b16 %v537
    %v2079 = vunpack.c.l.b16 %v538
    %v2080 = vunpack.c.h.b16 %v538
    %v2081 = vunpack.c.l.b16 %v539
    %v2082 = vunpack.c.h.b16 %v539
    %v2083 = vunpack.c.l.b16 %v540
    %v2084 = vunpack.c.h.b16 %v540
    %v2085 = vunpack.c.l.b16 %v541
    %v2086 = vunpack.c.h.b16 %v541
    %v2087 = vunpack.c.l.b16 %v542
    %v2088 = vunpack.c.h.b16 %v542
    %v2089 = vunpack.c.l.b16 %v543
    %v2090 = vunpack.c.h.b16 %v543
    %v2091 = vunpack.c.l.b16 %v544
    %v2092 = vunpack.c.h.b16 %v544
    %v2093 = vunpack.c.l.b16 %v545
    %v2094 = vunpack.c.h.b16 %v545
    %v2095 = vunpack.c.l.b16 %v546
    %v2096 = vunpack.c.h.b16 %v546
    %v2097 = vunpack.c.l.b16 %v547
    %v2098 = vunpack.c.h.b16 %v547
    %v2099 = vunpack.c.l.b16 %v548
    %v2100 = vunpack.c.h.b16 %v548
    %v2101 = vunpack.c.l.b16 %v549
    %v2102 = vunpack.c.h.b16 %v549
    %v2103 = vunpack.c.l.b16 %v550
    %v2104 = vunpack.c.h.b16 %v550
    %v2105 = vunpack.c.l.b16 %v551
    %v2106 = vunpack.c.h.b16 %v551
    %v2107 = vunpack.c.l.b16 %v552
    %v2108 = vunpack.c.h.b16 %v552
    %v2109 = vunpack.c.l.b16 %v553
    %v2110 = vunpack.c.h.b16 %v553
    %v2111 = vunpack.c.l.b16 %v554
    %v2112 = vunpack.c.h.b16 %v554
    %v2113 = vunpack.c.l.b16 %v555
    %v2114 = vunpack.c.h.b16 %v555
    %v2115 = vunpack.c.l.b16 %v556
    %v2116 = vunpack.c.h.b16 %v556
    %v2117 = vunpack.c.l.b16 %v557
    %v2118 = vunpack.c.h.b16 %v557
    %v2119 = vunpack.c.l.b16 %v558
    %v2120 = vunpack.c.h.b16 %v558
    %v2121 = vunpack.c.l.b16 %v559
    %v2122 = vunpack.c.h.b16 %v559
    %v2123 = vunpack.c.l.b16 %v560
    %v2124 = vunpack.c.h.b16 %v560
    %v2125 = vunpack.c.l.b16 %v561
    %v2126 = vunpack.c.h.b16 %v561
    %v2127 = vunpack.c.l.b16 %v562
    %v2128 = vunpack.c.h.b16 %v562
    %v2129 = vunpack.c.l.b16 %v563
    %v2130 = vunpack.c.h.b16 %v563
    %v2131 = vunpack.c.l.b16 %v564
    %v2132 = vunpack.c.h.b16 %v564
    %v2133 = vunpack.c.l.b16 %v565
    %v2134 = vunpack.c.h.b16 %v565
    %v2135 = vunpack.c.l.b16 %v566
    %v2136 = vunpack.c.h.b16 %v566
    %v2137 = vunpack.c.l.b16 %v567
    %v2138 = vunpack.c.h.b16 %v567
    %v2139 = vunpack.c.l.b16 %v568
    %v2140 = vunpack.c.h.b16 %v568
    %v2141 = vunpack.c.l.b16 %v569
    %v2142 = vunpack.c.h.b16 %v569
    %v2143 = vunpack.c.l.b16 %v570
    %v2144 = vunpack.c.h.b16 %v570
    %v2145 = vunpack.c.l.b16 %v571
    %v2146 = vunpack.c.h.b16 %v571
    %v2147 = vunpack.c.l.b16 %v572
    %v2148 = vunpack.c.h.b16 %v572
    %v2149 = vunpack.c.l.b16 %v573
    %v2150 = vunpack.c.h.b16 %v573
    %v2151 = vunpack.c.l.b16 %v574
    %v2152 = vunpack.c.h.b16 %v574
    %v2153 = vunpack.c.l.b16 %v575
    %v2154 = vunpack.c.h.b16 %v575
    %v2155 = vunpack.c.l.b16 %v576
    %v2156 = vunpack.c.h.b16 %v576
    %v2157 = vunpack.c.l.b16 %v577
    %v2158 = vunpack.c.h.b16 %v577
    %v2159 = vunpack.c.l.b16 %v578
    %v2160 = vunpack.c.h.b16 %v578
    %v2161 = vunpack.c.l.b16 %v579
    %v2162 = vunpack.c.h.b16 %v579
    %v2163 = vunpack.c.l.b16 %v580
    %v2164 = vunpack.c.h.b16 %v580
    %v2165 = vunpack.c.l.b16 %v581
    %v2166 = vunpack.c.h.b16 %v581
    %v2167 = vunpack.c.l.b16 %v582
    %v2168 = vunpack.c.h.b16 %v582
    %v2169 = vunpack.c.l.b16 %v583
    %v2170 = vunpack.c.h.b16 %v583
    %v2171 = vunpack.c.l.b16 %v584
    %v2172 = vunpack.c.h.b16 %v584
    %v2173 = vunpack.c.l.b16 %v585
    %v2174 = vunpack.c.h.b16 %v585
    %v2175 = vunpack.c.l.b16 %v586
    %v2176 = vunpack.c.h.b16 %v586
    %v2177 = vunpack.c.l.b16 %v587
    %v2178 = vunpack.c.h.b16 %v587
    %v2179 = vunpack.c.l.b16 %v588
    %v2180 = vunpack.c.h.b16 %v588
    %v2181 = vunpack.c.l.b16 %v589
    %v2182 = vunpack.c.h.b16 %v589
    %v2183 = vunpack.c.l.b16 %v590
    %v2184 = vunpack.c.h.b16 %v590
    %v2185 = vunpack.c.l.b16 %v591
    %v2186 = vunpack.c.h.b16 %v591
    %v2187 = vunpack.c.l.b16 %v592
    %v2188 = vunpack.c.h.b16 %v592
    %v2189 = vunpack.c.l.b16 %v593
    %v2190 = vunpack.c.h.b16 %v593
    %v2191 = vunpack.c.l.b16 %v594
    %v2192 = vunpack.c.h.b16 %v594
    %v2193 = vunpack.c.l.b16 %v595
    %v2194 = vunpack.c.h.b16 %v595
    %v2195 = vunpack.c.l.b16 %v596
    %v2196 = vunpack.c.h.b16 %v596
    %v2197 = vunpack.c.l.b16 %v597
    %v2198 = vunpack.c.h.b16 %v597
    %v2199 = vunpack.c.l.b16 %v598
    %v2200 = vunpack.c.h.b16 %v598
    %v2201 = vpack.c.b16 %v1181, %v1177
    %v2202 = vpack.c.b16 %v1182, %v1178
    %v2203 = vpack.c.b16 %v1183, %v1179
    %v2204 = vpack.c.b16 %v1184, %v1180
    %v2205 = vpack.c.b16 %v1189, %v1185
    %v2206 = vpack.c.b16 %v1190, %v1186
    %v2207 = vpack.c.b16 %v1191, %v1187
    %v2208 = vpack.c.b16 %v1192, %v1188
    %v2209 = vpack.c.b16 %v1197, %v1193
    %v2210 = vpack.c.b16 %v1198, %v1194
    %v2211 = vpack.c.b16 %v1199, %v1195
    %v2212 = vpack.c.b16 %v1200, %v1196
    %v2213 = vpack.c.b16 %v1205, %v1201
    %v2214 = vpack.c.b16 %v1206, %v1202
    %v2215 = vpack.c.b16 %v1207, %v1203
    %v2216 = vpack.c.b16 %v1208, %v1204
    %v2217 = vpack.c.b16 %v1213, %v1209
    %v2218 = vpack.c.b16 %v1214, %v1210
    %v2219 = vpack.c.b16 %v1215, %v1211
    %v2220 = vpack.c.b16 %v1216, %v1212
    %v2221 = vpack.c.b16 %v1221, %v1217
    %v2222 = vpack.c.b16 %v1222, %v1218
    %v2223 = vpack.c.b16 %v1223, %v1219
    %v2224 = vpack.c.b16 %v1224, %v1220
    %v2225 = vpack.c.b16 %v1229, %v1225
    %v2226 = vpack.c.b16 %v1230, %v1226
    %v2227 = vpack.c.b16 %v1231, %v1227
    %v2228 = vpack.c.b16 %v1232, %v1228
    %v2229 = vpack.c.b16 %v1237, %v1233
    %v2230 = vpack.c.b16 %v1238, %v1234
    %v2231 = vpack.c.b16 %v1239, %v1235
    %v2232 = vpack.c.b16 %v1240, %v1236
    %v2233 = vpack.c.b16 %v1245, %v1241
    %v2234 = vpack.c.b16 %v1246, %v1242
    %v2235 = vpack.c.b16 %v1247, %v1243
    %v2236 = vpack.c.b16 %v1248, %v1244
    %v2237 = vpack.c.b16 %v1253, %v1249
    %v2238 = vpack.c.b16 %v1254, %v1250
    %v2239 = vpack.c.b16 %v1255, %v1251
    %v2240 = vpack.c.b16 %v1256, %v1252
    %v2241 = vpack.c.b16 %v1261, %v1257
    %v2242 = vpack.c.b16 %v1262, %v1258
    %v2243 = vpack.c.b16 %v1263, %v1259
    %v2244 = vpack.c.b16 %v1264, %v1260
    %v2245 = vpack.c.b16 %v1269, %v1265
    %v2246 = vpack.c.b16 %v1270, %v1266
    %v2247 = vpack.c.b16 %v1271, %v1267
    %v2248 = vpack.c.b16 %v1272, %v1268
    %v2249 = vpack.c.b16 %v1277, %v1273
    %v2250 = vpack.c.b16 %v1278, %v1274
    %v2251 = vpack.c.b16 %v1279, %v1275
    %v2252 = vpack.c.b16 %v1280, %v1276
    %v2253 = vpack.c.b16 %v1285, %v1281
    %v2254 = vpack.c.b16 %v1286, %v1282
    %v2255 = vpack.c.b16 %v1287, %v1283
    %v2256 = vpack.c.b16 %v1288, %v1284
    %v2257 = vpack.c.b16 %v1293, %v1289
    %v2258 = vpack.c.b16 %v1294, %v1290
    %v2259 = vpack.c.b16 %v1295, %v1291
    %v2260 = vpack.c.b16 %v1296, %v1292
    %v2261 = vpack.c.b16 %v1301, %v1297
    %v2262 = vpack.c.b16 %v1302, %v1298
    %v2263 = vpack.c.b16 %v1303, %v1299
    %v2264 = vpack.c.b16 %v1304, %v1300
    %v2265 = vpack.c.b16 %v1309, %v1305
    %v2266 = vpack.c.b16 %v1310, %v1306
    %v2267 = vpack.c.b16 %v1311, %v1307
    %v2268 = vpack.c.b16 %v1312, %v1308
    %v2269 = vpack.c.b16 %v1317, %v1313
    %v2270 = vpack.c.b16 %v1318, %v1314
    %v2271 = vpack.c.b16 %v1319, %v1315
    %v2272 = vpack.c.b16 %v1320, %v1316
    %v2273 = vpack.c.b16 %v1325, %v1321
    %v2274 = vpack.c.b16 %v1326, %v1322
    %v2275 = vpack.c.b16 %v1327, %v1323
    %v2276 = vpack.c.b16 %v1328, %v1324
    %v2277 = vpack.c.b16 %v1333, %v1329
    %v2278 = vpack.c.b16 %v1334, %v1330
    %v2279 = vpack.c.b16 %v1335, %v1331
    %v2280 = vpack.c.b16 %v1336, %v1332
    %v2281 = vpack.c.b16 %v1341, %v1337
    %v2282 = vpack.c.b16 %v1342, %v1338
    %v2283 = vpack.c.b16 %v1343, %v1339
    %v2284 = vpack.c.b16 %v1344, %v1340
    %v2285 = vpack.c.b16 %v1349, %v1345
    %v2286 = vpack.c.b16 %v1350, %v1346
    %v2287 = vpack.c.b16 %v1351, %v1347
    %v2288 = vpack.c.b16 %v1352, %v1348
    %v2289 = vpack.c.b16 %v1357, %v1353
    %v2290 = vpack.c.b16 %v1358, %v1354
    %v2291 = vpack.c.b16 %v1359, %v1355
    %v2292 = vpack.c.b16 %v1360, %v1356
    %v2293 = vpack.c.b16 %v1365, %v1361
    %v2294 = vpack.c.b16 %v1366, %v1362
    %v2295 = vpack.c.b16 %v1367, %v1363
    %v2296 = vpack.c.b16 %v1368, %v1364
    %v2297 = vpack.c.b16 %v1373, %v1369
    %v2298 = vpack.c.b16 %v1374, %v1370
    %v2299 = vpack.c.b16 %v1375, %v1371
    %v2300 = vpack.c.b16 %v1376, %v1372
    %v2301 = vpack.c.b16 %v1381, %v1377
    %v2302 = vpack.c.b16 %v1382, %v1378
    %v2303 = vpack.c.b16 %v1383, %v1379
    %v2304 = vpack.c.b16 %v1384, %v1380
    %v2305 = vpack.c.b16 %v1389, %v1385
    %v2306 = vpack.c.b16 %v1390, %v1386
    %v2307 = vpack.c.b16 %v1391, %v1387
    %v2308 = vpack.c.b16 %v1392, %v1388
    %v2309 = vpack.c.b16 %v1397, %v1393
    %v2310 = vpack.c.b16 %v1398, %v1394
    %v2311 = vpack.c.b16 %v1399, %v1395
    %v2312 = vpack.c.b16 %v1400, %v1396
    %v2313 = vpack.c.b16 %v1405, %v1401
    %v2314 = vpack.c.b16 %v1406, %v1402
    %v2315 = vpack.c.b16 %v1407, %v1403
    %v2316 = vpack.c.b16 %v1408, %v1404
    %v2317 = vpack.c.b16 %v1413, %v1409
    %v2318 = vpack.c.b16 %v1414, %v1410
    %v2319 = vpack.c.b16 %v1415, %v1411
    %v2320 = vpack.c.b16 %v1416, %v1412
    %v2321 = vpack.c.b16 %v1421, %v1417
    %v2322 = vpack.c.b16 %v1422, %v1418
    %v2323 = vpack.c.b16 %v1423, %v1419
    %v2324 = vpack.c.b16 %v1424, %v1420
    %v2325 = vpack.c.b16 %v1429, %v1425
    %v2326 = vpack.c.b16 %v1430, %v1426
    %v2327 = vpack.c.b16 %v1431, %v1427
    %v2328 = vpack.c.b16 %v1432, %v1428
    %v2329 = vpack.c.b16 %v1437, %v1433
    %v2330 = vpack.c.b16 %v1438, %v1434
    %v2331 = vpack.c.b16 %v1439, %v1435
    %v2332 = vpack.c.b16 %v1440, %v1436
    %v2333 = vpack.c.b16 %v1445, %v1441
    %v2334 = vpack.c.b16 %v1446, %v1442
    %v2335 = vpack.c.b16 %v1447, %v1443
    %v2336 = vpack.c.b16 %v1448, %v1444
    %v2337 = vpack.c.b16 %v1453, %v1449
    %v2338 = vpack.c.b16 %v1454, %v1450
    %v2339 = vpack.c.b16 %v1455, %v1451
    %v2340 = vpack.c.b16 %v1456, %v1452
    %v2341 = vpack.c.b16 %v1461, %v1457
    %v2342 = vpack.c.b16 %v1462, %v1458
    %v2343 = vpack.c.b16 %v1463, %v1459
    %v2344 = vpack.c.b16 %v1464, %v1460
    %v2345 = vpack.c.b16 %v1469, %v1465
    %v2346 = vpack.c.b16 %v1470, %v1466
    %v2347 = vpack.c.b16 %v1471, %v1467
    %v2348 = vpack.c.b16 %v1472, %v1468
    %v2349 = vpack.c.b16 %v1477, %v1473
    %v2350 = vpack.c.b16 %v1478, %v1474
    %v2351 = vpack.c.b16 %v1479, %v1475
    %v2352 = vpack.c.b16 %v1480, %v1476
    %v2353 = vpack.c.b16 %v1485, %v1481
    %v2354 = vpack.c.b16 %v1486, %v1482
    %v2355 = vpack.c.b16 %v1487, %v1483
    %v2356 = vpack.c.b16 %v1488, %v1484
    %v2357 = vpack.c.b16 %v1493, %v1489
    %v2358 = vpack.c.b16 %v1494, %v1490
    %v2359 = vpack.c.b16 %v1495, %v1491
    %v2360 = vpack.c.b16 %v1496, %v1492
    %v2361 = vpack.c.b16 %v1501, %v1497
    %v2362 = vpack.c.b16 %v1502, %v1498
    %v2363 = vpack.c.b16 %v1503, %v1499
    %v2364 = vpack.c.b16 %v1504, %v1500
    %v2365 = vpack.c.b16 %v1509, %v1505
    %v2366 = vpack.c.b16 %v1510, %v1506
    %v2367 = vpack.c.b16 %v1511, %v1507
    %v2368 = vpack.c.b16 %v1512, %v1508
    %v2369 = vpack.c.b16 %v1517, %v1513
    %v2370 = vpack.c.b16 %v1518, %v1514
    %v2371 = vpack.c.b16 %v1519, %v1515
    %v2372 = vpack.c.b16 %v1520, %v1516
    %v2373 = vpack.c.b16 %v1525, %v1521
    %v2374 = vpack.c.b16 %v1526, %v1522
    %v2375 = vpack.c.b16 %v1527, %v1523
    %v2376 = vpack.c.b16 %v1528, %v1524
    %v2377 = vpack.c.b16 %v1533, %v1529
    %v2378 = vpack.c.b16 %v1534, %v1530
    %v2379 = vpack.c.b16 %v1535, %v1531
    %v2380 = vpack.c.b16 %v1536, %v1532
    %v2381 = vpack.c.b16 %v1541, %v1537
    %v2382 = vpack.c.b16 %v1542, %v1538
    %v2383 = vpack.c.b16 %v1543, %v1539
    %v2384 = vpack.c.b16 %v1544, %v1540
    %v2385 = vpack.c.b16 %v1549, %v1545
    %v2386 = vpack.c.b16 %v1550, %v1546
    %v2387 = vpack.c.b16 %v1551, %v1547
    %v2388 = vpack.c.b16 %v1552, %v1548
    %v2389 = vpack.c.b16 %v1557, %v1553
    %v2390 = vpack.c.b16 %v1558, %v1554
    %v2391 = vpack.c.b16 %v1559, %v1555
    %v2392 = vpack.c.b16 %v1560, %v1556
    %v2393 = vpack.c.b16 %v1565, %v1561
    %v2394 = vpack.c.b16 %v1566, %v1562
    %v2395 = vpack.c.b16 %v1567, %v1563
    %v2396 = vpack.c.b16 %v1568, %v1564
    %v2397 = vpack.c.b16 %v1573, %v1569
    %v2398 = vpack.c.b16 %v1574, %v1570
    %v2399 = vpack.c.b16 %v1575, %v1571
    %v2400 = vpack.c.b16 %v1576, %v1572
    %v2401 = vpack.c.b16 %v1581, %v1577
    %v2402 = vpack.c.b16 %v1582, %v1578
    %v2403 = vpack.c.b16 %v1583, %v1579
    %v2404 = vpack.c.b16 %v1584, %v1580
    %v2405 = vpack.c.b16 %v1589, %v1585
    %v2406 = vpack.c.b16 %v1590, %v1586
    %v2407 = vpack.c.b16 %v1591, %v1587
    %v2408 = vpack.c.b16 %v1592, %v1588
    %v2409 = vpack.c.b16 %v1597, %v1593
    %v2410 = vpack.c.b16 %v1598, %v1594
    %v2411 = vpack.c.b16 %v1599, %v1595
    %v2412 = vpack.c.b16 %v1600, %v1596
    %v2413 = vpack.c.b16 %v1605, %v1601
    %v2414 = vpack.c.b16 %v1606, %v1602
    %v2415 = vpack.c.b16 %v1607, %v1603
    %v2416 = vpack.c.b16 %v1608, %v1604
    %v2417 = vpack.c.b16 %v1613, %v1609
    %v2418 = vpack.c.b16 %v1614, %v1610
    %v2419 = vpack.c.b16 %v1615, %v1611
    %v2420 = vpack.c.b16 %v1616, %v1612
    %v2421 = vpack.c.b16 %v1621, %v1617
    %v2422 = vpack.c.b16 %v1622, %v1618
    %v2423 = vpack.c.b16 %v1623, %v1619
    %v2424 = vpack.c.b16 %v1624, %v1620
    %v2425 = vpack.c.b16 %v1629, %v1625
    %v2426 = vpack.c.b16 %v1630, %v1626
    %v2427 = vpack.c.b16 %v1631, %v1627
    %v2428 = vpack.c.b16 %v1632, %v1628
    %v2429 = vpack.c.b16 %v1637, %v1633
    %v2430 = vpack.c.b16 %v1638, %v1634
    %v2431 = vpack.c.b16 %v1639, %v1635
    %v2432 = vpack.c.b16 %v1640, %v1636
    %v2433 = vpack.c.b16 %v1645, %v1641
    %v2434 = vpack.c.b16 %v1646, %v1642
    %v2435 = vpack.c.b16 %v1647, %v1643
    %v2436 = vpack.c.b16 %v1648, %v1644
    %v2437 = vpack.c.b16 %v1653, %v1649
    %v2438 = vpack.c.b16 %v1654, %v1650
    %v2439 = vpack.c.b16 %v1655, %v1651
    %v2440 = vpack.c.b16 %v1656, %v1652
    %v2441 = vpack.c.b16 %v1661, %v1657
    %v2442 = vpack.c.b16 %v1662, %v1658
    %v2443 = vpack.c.b16 %v1663, %v1659
    %v2444 = vpack.c.b16 %v1664, %v1660
    %v2445 = vpack.c.b16 %v1669, %v1665
    %v2446 = vpack.c.b16 %v1670, %v1666
    %v2447 = vpack.c.b16 %v1671, %v1667
    %v2448 = vpack.c.b16 %v1672, %v1668
    %v2449 = vpack.c.b16 %v1677, %v1673
    %v2450 = vpack.c.b16 %v1678, %v1674
    %v2451 = vpack.c.b16 %v1679, %v1675
    %v2452 = vpack.c.b16 %v1680, %v1676
    %v2453 = vpack.c.b16 %v1685, %v1681
    %v2454 = vpack.c.b16 %v1686, %v1682
    %v2455 = vpack.c.b16 %v1687, %v1683
    %v2456 = vpack.c.b16 %v1688, %v1684
    %v2457 = vpack.c.b16 %v1693, %v1689
    %v2458 = vpack.c.b16 %v1694, %v1690
    %v2459 = vpack.c.b16 %v1695, %v1691
    %v2460 = vpack.c.b16 %v1696, %v1692
    %v2461 = vpack.c.b16 %v1701, %v1697
    %v2462 = vpack.c.b16 %v1702, %v1698
    %v2463 = vpack.c.b16 %v1703, %v1699
    %v2464 = vpack.c.b16 %v1704, %v1700
    %v2465 = vpack.c.b16 %v1709, %v1705
    %v2466 = vpack.c.b16 %v1710, %v1706
    %v2467 = vpack.c.b16 %v1711, %v1707
    %v2468 = vpack.c.b16 %v1712, %v1708
    %v2469 = vpack.c.b16 %v1717, %v1713
    %v2470 = vpack.c.b16 %v1718, %v1714
    %v2471 = vpack.c.b16 %v1719, %v1715
    %v2472 = vpack.c.b16 %v1720, %v1716
    %v2473 = vpack.c.b16 %v1725, %v1721
    %v2474 = vpack.c.b16 %v1726, %v1722
    %v2475 = vpack.c.b16 %v1727, %v1723
    %v2476 = vpack.c.b16 %v1728, %v1724
    %v2477 = vpack.c.b16 %v1733, %v1729
    %v2478 = vpack.c.b16 %v1734, %v1730
    %v2479 = vpack.c.b16 %v1735, %v1731
    %v2480 = vpack.c.b16 %v1736, %v1732
    %v2481 = vpack.c.b16 %v1741, %v1737
    %v2482 = vpack.c.b16 %v1742, %v1738
    %v2483 = vpack.c.b16 %v1743, %v1739
    %v2484 = vpack.c.b16 %v1744, %v1740
    %v2485 = vpack.c.b16 %v1749, %v1745
    %v2486 = vpack.c.b16 %v1750, %v1746
    %v2487 = vpack.c.b16 %v1751, %v1747
    %v2488 = vpack.c.b16 %v1752, %v1748
    %v2489 = vpack.c.b16 %v1757, %v1753
    %v2490 = vpack.c.b16 %v1758, %v1754
    %v2491 = vpack.c.b16 %v1759, %v1755
    %v2492 = vpack.c.b16 %v1760, %v1756
    %v2493 = vpack.c.b16 %v1765, %v1761
    %v2494 = vpack.c.b16 %v1766, %v1762
    %v2495 = vpack.c.b16 %v1767, %v1763
    %v2496 = vpack.c.b16 %v1768, %v1764
    %v2497 = vpack.c.b16 %v1773, %v1769
    %v2498 = vpack.c.b16 %v1774, %v1770
    %v2499 = vpack.c.b16 %v1775, %v1771
    %v2500 = vpack.c.b16 %v1776, %v1772
    %v2501 = vpack.c.b16 %v1781, %v1777
    %v2502 = vpack.c.b16 %v1782, %v1778
    %v2503 = vpack.c.b16 %v1783, %v1779
    %v2504 = vpack.c.b16 %v1784, %v1780
    %v2505 = vpack.c.b16 %v1789, %v1785
    %v2506 = vpack.c.b16 %v1790, %v1786
    %v2507 = vpack.c.b16 %v1791, %v1787
    %v2508 = vpack.c.b16 %v1792, %v1788
    %v2509 = vpack.c.b16 %v1797, %v1793
    %v2510 = vpack.c.b16 %v1798, %v1794
    %v2511 = vpack.c.b16 %v1799, %v1795
    %v2512 = vpack.c.b16 %v1800, %v1796
    %v2513 = vpack.c.b16 %v1805, %v1801
    %v2514 = vpack.c.b16 %v1806, %v1802
    %v2515 = vpack.c.b16 %v1807, %v1803
    %v2516 = vpack.c.b16 %v1808, %v1804
    %v2517 = vpack.c.b16 %v1813, %v1809
    %v2518 = vpack.c.b16 %v1814, %v1810
    %v2519 = vpack.c.b16 %v1815, %v1811
    %v2520 = vpack.c.b16 %v1816, %v1812
    %v2521 = vpack.c.b16 %v1821, %v1817
    %v2522 = vpack.c.b16 %v1822, %v1818
    %v2523 = vpack.c.b16 %v1823, %v1819
    %v2524 = vpack.c.b16 %v1824, %v1820
    %v2525 = vpack.c.b16 %v1829, %v1825
    %v2526 = vpack.c.b16 %v1830, %v1826
    %v2527 = vpack.c.b16 %v1831, %v1827
    %v2528 = vpack.c.b16 %v1832, %v1828
    %v2529 = vpack.c.b16 %v1837, %v1833
    %v2530 = vpack.c.b16 %v1838, %v1834
    %v2531 = vpack.c.b16 %v1839, %v1835
    %v2532 = vpack.c.b16 %v1840, %v1836
    %v2533 = vpack.c.b16 %v1845, %v1841
    %v2534 = vpack.c.b16 %v1846, %v1842
    %v2535 = vpack.c.b16 %v1847, %v1843
    %v2536 = vpack.c.b16 %v1848, %v1844
    %v2537 = vpack.c.b16 %v1853, %v1849
    %v2538 = vpack.c.b16 %v1854, %v1850
    %v2539 = vpack.c.b16 %v1855, %v1851
    %v2540 = vpack.c.b16 %v1856, %v1852
    %v2541 = vpack.c.b16 %v1861, %v1857
    %v2542 = vpack.c.b16 %v1862, %v1858
    %v2543 = vpack.c.b16 %v1863, %v1859
    %v2544 = vpack.c.b16 %v1864, %v1860
    %v2545 = vpack.c.b16 %v1869, %v1865
    %v2546 = vpack.c.b16 %v1870, %v1866
    %v2547 = vpack.c.b16 %v1871, %v1867
    %v2548 = vpack.c.b16 %v1872, %v1868
    %v2549 = vpack.c.b16 %v1877, %v1873
    %v2550 = vpack.c.b16 %v1878, %v1874
    %v2551 = vpack.c.b16 %v1879, %v1875
    %v2552 = vpack.c.b16 %v1880, %v1876
    %v2553 = vpack.c.b16 %v1885, %v1881
    %v2554 = vpack.c.b16 %v1886, %v1882
    %v2555 = vpack.c.b16 %v1887, %v1883
    %v2556 = vpack.c.b16 %v1888, %v1884
    %v2557 = vpack.c.b16 %v1893, %v1889
    %v2558 = vpack.c.b16 %v1894, %v1890
    %v2559 = vpack.c.b16 %v1895, %v1891
    %v2560 = vpack.c.b16 %v1896, %v1892
    %v2561 = vpack.c.b16 %v1901, %v1897
    %v2562 = vpack.c.b16 %v1902, %v1898
    %v2563 = vpack.c.b16 %v1903, %v1899
    %v2564 = vpack.c.b16 %v1904, %v1900
    %v2565 = vpack.c.b16 %v1909, %v1905
    %v2566 = vpack.c.b16 %v1910, %v1906
    %v2567 = vpack.c.b16 %v1911, %v1907
    %v2568 = vpack.c.b16 %v1912, %v1908
    %v2569 = vpack.c.b16 %v1917, %v1913
    %v2570 = vpack.c.b16 %v1918, %v1914
    %v2571 = vpack.c.b16 %v1919, %v1915
    %v2572 = vpack.c.b16 %v1920, %v1916
    %v2573 = vpack.c.b16 %v1925, %v1921
    %v2574 = vpack.c.b16 %v1926, %v1922
    %v2575 = vpack.c.b16 %v1927, %v1923
    %v2576 = vpack.c.b16 %v1928, %v1924
    %v2577 = vpack.c.b16 %v1933, %v1929
    %v2578 = vpack.c.b16 %v1934, %v1930
    %v2579 = vpack.c.b16 %v1935, %v1931
    %v2580 = vpack.c.b16 %v1936, %v1932
    %v2581 = vpack.c.b16 %v1941, %v1937
    %v2582 = vpack.c.b16 %v1942, %v1938
    %v2583 = vpack.c.b16 %v1943, %v1939
    %v2584 = vpack.c.b16 %v1944, %v1940
    %v2585 = vpack.c.b16 %v1949, %v1945
    %v2586 = vpack.c.b16 %v1950, %v1946
    %v2587 = vpack.c.b16 %v1951, %v1947
    %v2588 = vpack.c.b16 %v1952, %v1948
    %v2589 = vpack.c.b16 %v1957, %v1953
    %v2590 = vpack.c.b16 %v1958, %v1954
    %v2591 = vpack.c.b16 %v1959, %v1955
    %v2592 = vpack.c.b16 %v1960, %v1956
    %v2593 = vpack.c.b16 %v1965, %v1961
    %v2594 = vpack.c.b16 %v1966, %v1962
    %v2595 = vpack.c.b16 %v1967, %v1963
    %v2596 = vpack.c.b16 %v1968, %v1964
    %v2597 = vpack.c.b16 %v1973, %v1969
    %v2598 = vpack.c.b16 %v1974, %v1970
    %v2599 = vpack.c.b16 %v1975, %v1971
    %v2600 = vpack.c.b16 %v1976, %v1972
    %v2601 = vpack.c.b16 %v1981, %v1977
    %v2602 = vpack.c.b16 %v1982, %v1978
    %v2603 = vpack.c.b16 %v1983, %v1979
    %v2604 = vpack.c.b16 %v1984, %v1980
    %v2605 = vpack.c.b16 %v1989, %v1985
    %v2606 = vpack.c.b16 %v1990, %v1986
    %v2607 = vpack.c.b16 %v1991, %v1987
    %v2608 = vpack.c.b16 %v1992, %v1988
    %v2609 = vpack.c.b16 %v1997, %v1993
    %v2610 = vpack.c.b16 %v1998, %v1994
    %v2611 = vpack.c.b16 %v1999, %v1995
    %v2612 = vpack.c.b16 %v2000, %v1996
    %v2613 = vpack.c.b16 %v2005, %v2001
    %v2614 = vpack.c.b16 %v2006, %v2002
    %v2615 = vpack.c.b16 %v2007, %v2003
    %v2616 = vpack.c.b16 %v2008, %v2004
    %v2617 = vpack.c.b16 %v2013, %v2009
    %v2618 = vpack.c.b16 %v2014, %v2010
    %v2619 = vpack.c.b16 %v2015, %v2011
    %v2620 = vpack.c.b16 %v2016, %v2012
    %v2621 = vpack.c.b16 %v2021, %v2017
    %v2622 = vpack.c.b16 %v2022, %v2018
    %v2623 = vpack.c.b16 %v2023, %v2019
    %v2624 = vpack.c.b16 %v2024, %v2020
    %v2625 = vpack.c.b16 %v2029, %v2025
    %v2626 = vpack.c.b16 %v2030, %v2026
    %v2627 = vpack.c.b16 %v2031, %v2027
    %v2628 = vpack.c.b16 %v2032, %v2028
    %v2629 = vpack.c.b16 %v2037, %v2033
    %v2630 = vpack.c.b16 %v2038, %v2034
    %v2631 = vpack.c.b16 %v2039, %v2035
    %v2632 = vpack.c.b16 %v2040, %v2036
    %v2633 = vpack.c.b16 %v2045, %v2041
    %v2634 = vpack.c.b16 %v2046, %v2042
    %v2635 = vpack.c.b16 %v2047, %v2043
    %v2636 = vpack.c.b16 %v2048, %v2044
    %v2637 = vpack.c.b16 %v2053, %v2049
    %v2638 = vpack.c.b16 %v2054, %v2050
    %v2639 = vpack.c.b16 %v2055, %v2051
    %v2640 = vpack.c.b16 %v2056, %v2052
    %v2641 = vpack.c.b16 %v2061, %v2057
    %v2642 = vpack.c.b16 %v2062, %v2058
    %v2643 = vpack.c.b16 %v2063, %v2059
    %v2644 = vpack.c.b16 %v2064, %v2060
    %v2645 = vpack.c.b16 %v2069, %v2065
    %v2646 = vpack.c.b16 %v2070, %v2066
    %v2647 = vpack.c.b16 %v2071, %v2067
    %v2648 = vpack.c.b16 %v2072, %v2068
    %v2649 = vpack.c.b16 %v2077, %v2073
    %v2650 = vpack.c.b16 %v2078, %v2074
    %v2651 = vpack.c.b16 %v2079, %v2075
    %v2652 = vpack.c.b16 %v2080, %v2076
    %v2653 = vpack.c.b16 %v2085, %v2081
    %v2654 = vpack.c.b16 %v2086, %v2082
    %v2655 = vpack.c.b16 %v2087, %v2083
    %v2656 = vpack.c.b16 %v2088, %v2084
    %v2657 = vpack.c.b16 %v2093, %v2089
    %v2658 = vpack.c.b16 %v2094, %v2090
    %v2659 = vpack.c.b16 %v2095, %v2091
    %v2660 = vpack.c.b16 %v2096, %v2092
    %v2661 = vpack.c.b16 %v2101, %v2097
    %v2662 = vpack.c.b16 %v2102, %v2098
    %v2663 = vpack.c.b16 %v2103, %v2099
    %v2664 = vpack.c.b16 %v2104, %v2100
    %v2665 = vpack.c.b16 %v2109, %v2105
    %v2666 = vpack.c.b16 %v2110, %v2106
    %v2667 = vpack.c.b16 %v2111, %v2107
    %v2668 = vpack.c.b16 %v2112, %v2108
    %v2669 = vpack.c.b16 %v2117, %v2113
    %v2670 = vpack.c.b16 %v2118, %v2114
    %v2671 = vpack.c.b16 %v2119, %v2115
    %v2672 = vpack.c.b16 %v2120, %v2116
    %v2673 = vpack.c.b16 %v2125, %v2121
    %v2674 = vpack.c.b16 %v2126, %v2122
    %v2675 = vpack.c.b16 %v2127, %v2123
    %v2676 = vpack.c.b16 %v2128, %v2124
    %v2677 = vpack.c.b16 %v2133, %v2129
    %v2678 = vpack.c.b16 %v2134, %v2130
    %v2679 = vpack.c.b16 %v2135, %v2131
    %v2680 = vpack.c.b16 %v2136, %v2132
    %v2681 = vpack.c.b16 %v2141, %v2137
    %v2682 = vpack.c.b16 %v2142, %v2138
    %v2683 = vpack.c.b16 %v2143, %v2139
    %v2684 = vpack.c.b16 %v2144, %v2140
    %v2685 = vpack.c.b16 %v2149, %v2145
    %v2686 = vpack.c.b16 %v2150, %v2146
    %v2687 = vpack.c.b16 %v2151, %v2147
    %v2688 = vpack.c.b16 %v2152, %v2148
    %v2689 = vpack.c.b16 %v2157, %v2153
    %v2690 = vpack.c.b16 %v2158, %v2154
    %v2691 = vpack.c.b16 %v2159, %v2155
    %v2692 = vpack.c.b16 %v2160, %v2156
    %v2693 = vpack.c.b16 %v2165, %v2161
    %v2694 = vpack.c.b16 %v2166, %v2162
    %v2695 = vpack.c.b16 %v2167, %v2163
    %v2696 = vpack.c.b16 %v2168, %v2164
    %v2697 = vpack.c.b16 %v2173, %v2169
    %v2698 = vpack.c.b16 %v2174, %v2170
    %v2699 = vpack.c.b16 %v2175, %v2171
    %v2700 = vpack.c.b16 %v2176, %v2172
    %v2701 = vpack.c.b16 %v2181, %v2177
    %v2702 = vpack.c.b16 %v2182, %v2178
    %v2703 = vpack.c.b16 %v2183, %v2179
    %v2704 = vpack.c.b16 %v2184, %v2180
    %v2705 = vpack.c.b16 %v2189, %v2185
    %v2706 = vpack.c.b16 %v2190, %v2186
    %v2707 = vpack.c.b16 %v2191, %v2187
    %v2708 = vpack.c.b16 %v2192, %v2188
    %v2709 = vpack.c.b16 %v2197, %v2193
    %v2710 = vpack.c.b16 %v2198, %v2194
    %v2711 = vpack.c.b16 %v2199, %v2195
    %v2712 = vpack.c.b16 %v2200, %v2196
    %3225 = vmatpush.bf16.msra.mxu0 %v2229
    %3226 = vmatpush.bf16.msra.mxu0 %v2225
    %3227 = vmatpush.bf16.msra.mxu0 %v2221
    %3228 = vmatpush.bf16.msra.mxu0 %v2217
    %3229 = vmatpush.bf16.msra.mxu0 %v2213
    %3230 = vmatpush.bf16.msra.mxu0 %v2209
    %3231 = vmatpush.bf16.msra.mxu0 %v2205
    %3232 = vmatpush.bf16.msra.mxu0 %v2201
    %3233 = vmatmul.bf16.gmra.mxu0 %v633
    %v3234 = vpop.f32.mrf.mxu0
    %v3235 = vadd.f32 %v601, %v3234
    %v3236 = vpop.f32.mrf.mxu0
    %3237 = vdwg.mxu0
    %3238 = vmatpush.bf16.msra.mxu0 %v2261
    %3239 = vmatpush.bf16.msra.mxu0 %v2257
    %3240 = vmatpush.bf16.msra.mxu0 %v2253
    %3241 = vmatpush.bf16.msra.mxu0 %v2249
    %3242 = vmatpush.bf16.msra.mxu0 %v2245
    %3243 = vmatpush.bf16.msra.mxu0 %v2241
    %3244 = vmatpush.bf16.msra.mxu0 %v2237
    %3245 = vmatpush.bf16.msra.mxu0 %v2233
    %3246 = vmatmul.bf16.gmra.mxu0 %v634
    %v3247 = vpop.f32.mrf.mxu0
    %v3248 = vadd.f32 %v3235, %v3247
    %v3249 = vpop.f32.mrf.mxu0
    %3250 = vdwg.mxu0
    %3251 = vmatpush.bf16.msra.mxu0 %v2293
    %3252 = vmatpush.bf16.msra.mxu0 %v2289
    %3253 = vmatpush.bf16.msra.mxu0 %v2285
    %3254 = vmatpush.bf16.msra.mxu0 %v2281
    %3255 = vmatpush.bf16.msra.mxu0 %v2277
    %3256 = vmatpush.bf16.msra.mxu0 %v2273
    %3257 = vmatpush.bf16.msra.mxu0 %v2269
    %3258 = vmatpush.bf16.msra.mxu0 %v2265
    %3259 = vmatmul.bf16.gmra.mxu0 %v635
    %v3260 = vpop.f32.mrf.mxu0
    %v3261 = vadd.f32 %v3248, %v3260
    %v3262 = vpop.f32.mrf.mxu0
    %3263 = vdwg.mxu0
    %3264 = vmatpush.bf16.msra.mxu0 %v2325
    %3265 = vmatpush.bf16.msra.mxu0 %v2321
    %3266 = vmatpush.bf16.msra.mxu0 %v2317
    %3267 = vmatpush.bf16.msra.mxu0 %v2313
    %3268 = vmatpush.bf16.msra.mxu0 %v2309
    %3269 = vmatpush.bf16.msra.mxu0 %v2305
    %3270 = vmatpush.bf16.msra.mxu0 %v2301
    %3271 = vmatpush.bf16.msra.mxu0 %v2297
    %3272 = vmatmul.bf16.gmra.mxu0 %v636
    %v3273 = vpop.f32.mrf.mxu0
    %v3274 = vadd.f32 %v3261, %v3273
    %v3275 = vpop.f32.mrf.mxu0
    %3276 = vdwg.mxu0
    %3277 = vmatpush.bf16.msra.mxu0 %v2357
    %3278 = vmatpush.bf16.msra.mxu0 %v2353
    %3279 = vmatpush.bf16.msra.mxu0 %v2349
    %3280 = vmatpush.bf16.msra.mxu0 %v2345
    %3281 = vmatpush.bf16.msra.mxu0 %v2341
    %3282 = vmatpush.bf16.msra.mxu0 %v2337
    %3283 = vmatpush.bf16.msra.mxu0 %v2333
    %3284 = vmatpush.bf16.msra.mxu0 %v2329
    %3285 = vmatmul.bf16.gmra.mxu0 %v637
    %v3286 = vpop.f32.mrf.mxu0
    %v3287 = vadd.f32 %v3274, %v3286
    %v3288 = vpop.f32.mrf.mxu0
    %3289 = vdwg.mxu0
    %3290 = vmatpush.bf16.msra.mxu0 %v2389
    %3291 = vmatpush.bf16.msra.mxu0 %v2385
    %3292 = vmatpush.bf16.msra.mxu0 %v2381
    %3293 = vmatpush.bf16.msra.mxu0 %v2377
    %3294 = vmatpush.bf16.msra.mxu0 %v2373
    %3295 = vmatpush.bf16.msra.mxu0 %v2369
    %3296 = vmatpush.bf16.msra.mxu0 %v2365
    %3297 = vmatpush.bf16.msra.mxu0 %v2361
    %3298 = vmatmul.bf16.gmra.mxu0 %v638
    %v3299 = vpop.f32.mrf.mxu0
    %v3300 = vadd.f32 %v3287, %v3299
    %v3301 = vpop.f32.mrf.mxu0
    %3302 = vdwg.mxu0
    %3303 = vmatpush.bf16.msra.mxu0 %v2421
    %3304 = vmatpush.bf16.msra.mxu0 %v2417
    %3305 = vmatpush.bf16.msra.mxu0 %v2413
    %3306 = vmatpush.bf16.msra.mxu0 %v2409
    %3307 = vmatpush.bf16.msra.mxu0 %v2405
    %3308 = vmatpush.bf16.msra.mxu0 %v2401
    %3309 = vmatpush.bf16.msra.mxu0 %v2397
    %3310 = vmatpush.bf16.msra.mxu0 %v2393
    %3311 = vmatmul.bf16.gmra.mxu0 %v639
    %v3312 = vpop.f32.mrf.mxu0
    %v3313 = vadd.f32 %v3300, %v3312
    %v3314 = vpop.f32.mrf.mxu0
    %3315 = vdwg.mxu0
    %3316 = vmatpush.bf16.msra.mxu0 %v2453
    %3317 = vmatpush.bf16.msra.mxu0 %v2449
    %3318 = vmatpush.bf16.msra.mxu0 %v2445
    %3319 = vmatpush.bf16.msra.mxu0 %v2441
    %3320 = vmatpush.bf16.msra.mxu0 %v2437
    %3321 = vmatpush.bf16.msra.mxu0 %v2433
    %3322 = vmatpush.bf16.msra.mxu0 %v2429
    %3323 = vmatpush.bf16.msra.mxu0 %v2425
    %3324 = vmatmul.bf16.gmra.mxu0 %v640
    %v3325 = vpop.f32.mrf.mxu0
    %v3326 = vadd.f32 %v3313, %v3325
    %v3327 = vpop.f32.mrf.mxu0
    %3328 = vdwg.mxu0
    %3329 = vmatpush.bf16.msra.mxu0 %v2485
    %3330 = vmatpush.bf16.msra.mxu0 %v2481
    %3331 = vmatpush.bf16.msra.mxu0 %v2477
    %3332 = vmatpush.bf16.msra.mxu0 %v2473
    %3333 = vmatpush.bf16.msra.mxu0 %v2469
    %3334 = vmatpush.bf16.msra.mxu0 %v2465
    %3335 = vmatpush.bf16.msra.mxu0 %v2461
    %3336 = vmatpush.bf16.msra.mxu0 %v2457
    %3337 = vmatmul.bf16.gmra.mxu0 %v641
    %v3338 = vpop.f32.mrf.mxu0
    %v3339 = vadd.f32 %v3326, %v3338
    %v3340 = vpop.f32.mrf.mxu0
    %3341 = vdwg.mxu0
    %3342 = vmatpush.bf16.msra.mxu0 %v2517
    %3343 = vmatpush.bf16.msra.mxu0 %v2513
    %3344 = vmatpush.bf16.msra.mxu0 %v2509
    %3345 = vmatpush.bf16.msra.mxu0 %v2505
    %3346 = vmatpush.bf16.msra.mxu0 %v2501
    %3347 = vmatpush.bf16.msra.mxu0 %v2497
    %3348 = vmatpush.bf16.msra.mxu0 %v2493
    %3349 = vmatpush.bf16.msra.mxu0 %v2489
    %3350 = vmatmul.bf16.gmra.mxu0 %v642
    %v3351 = vpop.f32.mrf.mxu0
    %v3352 = vadd.f32 %v3339, %v3351
    %v3353 = vpop.f32.mrf.mxu0
    %3354 = vdwg.mxu0
    %3355 = vmatpush.bf16.msra.mxu0 %v2549
    %3356 = vmatpush.bf16.msra.mxu0 %v2545
    %3357 = vmatpush.bf16.msra.mxu0 %v2541
    %3358 = vmatpush.bf16.msra.mxu0 %v2537
    %3359 = vmatpush.bf16.msra.mxu0 %v2533
    %3360 = vmatpush.bf16.msra.mxu0 %v2529
    %3361 = vmatpush.bf16.msra.mxu0 %v2525
    %3362 = vmatpush.bf16.msra.mxu0 %v2521
    %3363 = vmatmul.bf16.gmra.mxu0 %v643
    %v3364 = vpop.f32.mrf.mxu0
    %v3365 = vadd.f32 %v3352, %v3364
    %v3366 = vpop.f32.mrf.mxu0
    %3367 = vdwg.mxu0
    %3368 = vmatpush.bf16.msra.mxu0 %v2581
    %3369 = vmatpush.bf16.msra.mxu0 %v2577
    %3370 = vmatpush.bf16.msra.mxu0 %v2573
    %3371 = vmatpush.bf16.msra.mxu0 %v2569
    %3372 = vmatpush.bf16.msra.mxu0 %v2565
    %3373 = vmatpush.bf16.msra.mxu0 %v2561
    %3374 = vmatpush.bf16.msra.mxu0 %v2557
    %3375 = vmatpush.bf16.msra.mxu0 %v2553
    %3376 = vmatmul.bf16.gmra.mxu0 %v644
    %v3377 = vpop.f32.mrf.mxu0
    %v3378 = vadd.f32 %v3365, %v3377
    %v3379 = vpop.f32.mrf.mxu0
    %3380 = vdwg.mxu0
    %3381 = vmatpush.bf16.msra.mxu0 %v2613
    %3382 = vmatpush.bf16.msra.mxu0 %v2609
    %3383 = vmatpush.bf16.msra.mxu0 %v2605
    %3384 = vmatpush.bf16.msra.mxu0 %v2601
    %3385 = vmatpush.bf16.msra.mxu0 %v2597
    %3386 = vmatpush.bf16.msra.mxu0 %v2593
    %3387 = vmatpush.bf16.msra.mxu0 %v2589
    %3388 = vmatpush.bf16.msra.mxu0 %v2585
    %3389 = vmatmul.bf16.gmra.mxu0 %v645
    %v3390 = vpop.f32.mrf.mxu0
    %v3391 = vadd.f32 %v3378, %v3390
    %v3392 = vpop.f32.mrf.mxu0
    %3393 = vdwg.mxu0
    %3394 = vmatpush.bf16.msra.mxu0 %v2645
    %3395 = vmatpush.bf16.msra.mxu0 %v2641
    %3396 = vmatpush.bf16.msra.mxu0 %v2637
    %3397 = vmatpush.bf16.msra.mxu0 %v2633
    %3398 = vmatpush.bf16.msra.mxu0 %v2629
    %3399 = vmatpush.bf16.msra.mxu0 %v2625
    %3400 = vmatpush.bf16.msra.mxu0 %v2621
    %3401 = vmatpush.bf16.msra.mxu0 %v2617
    %3402 = vmatmul.bf16.gmra.mxu0 %v646
    %v3403 = vpop.f32.mrf.mxu0
    %v3404 = vadd.f32 %v3391, %v3403
    %v3405 = vpop.f32.mrf.mxu0
    %3406 = vdwg.mxu0
    %3407 = vmatpush.bf16.msra.mxu0 %v2677
    %3408 = vmatpush.bf16.msra.mxu0 %v2673
    %3409 = vmatpush.bf16.msra.mxu0 %v2669
    %3410 = vmatpush.bf16.msra.mxu0 %v2665
    %3411 = vmatpush.bf16.msra.mxu0 %v2661
    %3412 = vmatpush.bf16.msra.mxu0 %v2657
    %3413 = vmatpush.bf16.msra.mxu0 %v2653
    %3414 = vmatpush.bf16.msra.mxu0 %v2649
    %3415 = vmatmul.bf16.gmra.mxu0 %v647
    %v3416 = vpop.f32.mrf.mxu0
    %v3417 = vadd.f32 %v3404, %v3416
    %v3418 = vpop.f32.mrf.mxu0
    %3419 = vdwg.mxu0
    %3420 = vmatpush.bf16.msra.mxu0 %v2709
    %3421 = vmatpush.bf16.msra.mxu0 %v2705
    %3422 = vmatpush.bf16.msra.mxu0 %v2701
    %3423 = vmatpush.bf16.msra.mxu0 %v2697
    %3424 = vmatpush.bf16.msra.mxu0 %v2693
    %3425 = vmatpush.bf16.msra.mxu0 %v2689
    %3426 = vmatpush.bf16.msra.mxu0 %v2685
    %3427 = vmatpush.bf16.msra.mxu0 %v2681
    %3428 = vmatmul.bf16.gmra.mxu0 %v648
    %v3429 = vpop.f32.mrf.mxu0
    %v3430 = vadd.f32 %v3417, %v3429
    %v3431 = vpop.f32.mrf.mxu0
    %3432 = vdwg.mxu0
    %3433 = vmatpush.bf16.msra.mxu0 %v2230
    %3434 = vmatpush.bf16.msra.mxu0 %v2226
    %3435 = vmatpush.bf16.msra.mxu0 %v2222
    %3436 = vmatpush.bf16.msra.mxu0 %v2218
    %3437 = vmatpush.bf16.msra.mxu0 %v2214
    %3438 = vmatpush.bf16.msra.mxu0 %v2210
    %3439 = vmatpush.bf16.msra.mxu0 %v2206
    %3440 = vmatpush.bf16.msra.mxu0 %v2202
    %3441 = vmatmul.bf16.gmra.mxu0 %v633
    %v3442 = vpop.f32.mrf.mxu0
    %v3443 = vadd.f32 %v602, %v3442
    %v3444 = vpop.f32.mrf.mxu0
    %3445 = vdwg.mxu0
    %3446 = vmatpush.bf16.msra.mxu0 %v2262
    %3447 = vmatpush.bf16.msra.mxu0 %v2258
    %3448 = vmatpush.bf16.msra.mxu0 %v2254
    %3449 = vmatpush.bf16.msra.mxu0 %v2250
    %3450 = vmatpush.bf16.msra.mxu0 %v2246
    %3451 = vmatpush.bf16.msra.mxu0 %v2242
    %3452 = vmatpush.bf16.msra.mxu0 %v2238
    %3453 = vmatpush.bf16.msra.mxu0 %v2234
    %3454 = vmatmul.bf16.gmra.mxu0 %v634
    %v3455 = vpop.f32.mrf.mxu0
    %v3456 = vadd.f32 %v3443, %v3455
    %v3457 = vpop.f32.mrf.mxu0
    %3458 = vdwg.mxu0
    %3459 = vmatpush.bf16.msra.mxu0 %v2294
    %3460 = vmatpush.bf16.msra.mxu0 %v2290
    %3461 = vmatpush.bf16.msra.mxu0 %v2286
    %3462 = vmatpush.bf16.msra.mxu0 %v2282
    %3463 = vmatpush.bf16.msra.mxu0 %v2278
    %3464 = vmatpush.bf16.msra.mxu0 %v2274
    %3465 = vmatpush.bf16.msra.mxu0 %v2270
    %3466 = vmatpush.bf16.msra.mxu0 %v2266
    %3467 = vmatmul.bf16.gmra.mxu0 %v635
    %v3468 = vpop.f32.mrf.mxu0
    %v3469 = vadd.f32 %v3456, %v3468
    %v3470 = vpop.f32.mrf.mxu0
    %3471 = vdwg.mxu0
    %3472 = vmatpush.bf16.msra.mxu0 %v2326
    %3473 = vmatpush.bf16.msra.mxu0 %v2322
    %3474 = vmatpush.bf16.msra.mxu0 %v2318
    %3475 = vmatpush.bf16.msra.mxu0 %v2314
    %3476 = vmatpush.bf16.msra.mxu0 %v2310
    %3477 = vmatpush.bf16.msra.mxu0 %v2306
    %3478 = vmatpush.bf16.msra.mxu0 %v2302
    %3479 = vmatpush.bf16.msra.mxu0 %v2298
    %3480 = vmatmul.bf16.gmra.mxu0 %v636
    %v3481 = vpop.f32.mrf.mxu0
    %v3482 = vadd.f32 %v3469, %v3481
    %v3483 = vpop.f32.mrf.mxu0
    %3484 = vdwg.mxu0
    %3485 = vmatpush.bf16.msra.mxu0 %v2358
    %3486 = vmatpush.bf16.msra.mxu0 %v2354
    %3487 = vmatpush.bf16.msra.mxu0 %v2350
    %3488 = vmatpush.bf16.msra.mxu0 %v2346
    %3489 = vmatpush.bf16.msra.mxu0 %v2342
    %3490 = vmatpush.bf16.msra.mxu0 %v2338
    %3491 = vmatpush.bf16.msra.mxu0 %v2334
    %3492 = vmatpush.bf16.msra.mxu0 %v2330
    %3493 = vmatmul.bf16.gmra.mxu0 %v637
    %v3494 = vpop.f32.mrf.mxu0
    %v3495 = vadd.f32 %v3482, %v3494
    %v3496 = vpop.f32.mrf.mxu0
    %3497 = vdwg.mxu0
    %3498 = vmatpush.bf16.msra.mxu0 %v2390
    %3499 = vmatpush.bf16.msra.mxu0 %v2386
    %3500 = vmatpush.bf16.msra.mxu0 %v2382
    %3501 = vmatpush.bf16.msra.mxu0 %v2378
    %3502 = vmatpush.bf16.msra.mxu0 %v2374
    %3503 = vmatpush.bf16.msra.mxu0 %v2370
    %3504 = vmatpush.bf16.msra.mxu0 %v2366
    %3505 = vmatpush.bf16.msra.mxu0 %v2362
    %3506 = vmatmul.bf16.gmra.mxu0 %v638
    %v3507 = vpop.f32.mrf.mxu0
    %v3508 = vadd.f32 %v3495, %v3507
    %v3509 = vpop.f32.mrf.mxu0
    %3510 = vdwg.mxu0
    %3511 = vmatpush.bf16.msra.mxu0 %v2422
    %3512 = vmatpush.bf16.msra.mxu0 %v2418
    %3513 = vmatpush.bf16.msra.mxu0 %v2414
    %3514 = vmatpush.bf16.msra.mxu0 %v2410
    %3515 = vmatpush.bf16.msra.mxu0 %v2406
    %3516 = vmatpush.bf16.msra.mxu0 %v2402
    %3517 = vmatpush.bf16.msra.mxu0 %v2398
    %3518 = vmatpush.bf16.msra.mxu0 %v2394
    %3519 = vmatmul.bf16.gmra.mxu0 %v639
    %v3520 = vpop.f32.mrf.mxu0
    %v3521 = vadd.f32 %v3508, %v3520
    %v3522 = vpop.f32.mrf.mxu0
    %3523 = vdwg.mxu0
    %3524 = vmatpush.bf16.msra.mxu0 %v2454
    %3525 = vmatpush.bf16.msra.mxu0 %v2450
    %3526 = vmatpush.bf16.msra.mxu0 %v2446
    %3527 = vmatpush.bf16.msra.mxu0 %v2442
    %3528 = vmatpush.bf16.msra.mxu0 %v2438
    %3529 = vmatpush.bf16.msra.mxu0 %v2434
    %3530 = vmatpush.bf16.msra.mxu0 %v2430
    %3531 = vmatpush.bf16.msra.mxu0 %v2426
    %3532 = vmatmul.bf16.gmra.mxu0 %v640
    %v3533 = vpop.f32.mrf.mxu0
    %v3534 = vadd.f32 %v3521, %v3533
    %v3535 = vpop.f32.mrf.mxu0
    %3536 = vdwg.mxu0
    %3537 = vmatpush.bf16.msra.mxu0 %v2486
    %3538 = vmatpush.bf16.msra.mxu0 %v2482
    %3539 = vmatpush.bf16.msra.mxu0 %v2478
    %3540 = vmatpush.bf16.msra.mxu0 %v2474
    %3541 = vmatpush.bf16.msra.mxu0 %v2470
    %3542 = vmatpush.bf16.msra.mxu0 %v2466
    %3543 = vmatpush.bf16.msra.mxu0 %v2462
    %3544 = vmatpush.bf16.msra.mxu0 %v2458
    %3545 = vmatmul.bf16.gmra.mxu0 %v641
    %v3546 = vpop.f32.mrf.mxu0
    %v3547 = vadd.f32 %v3534, %v3546
    %v3548 = vpop.f32.mrf.mxu0
    %3549 = vdwg.mxu0
    %3550 = vmatpush.bf16.msra.mxu0 %v2518
    %3551 = vmatpush.bf16.msra.mxu0 %v2514
    %3552 = vmatpush.bf16.msra.mxu0 %v2510
    %3553 = vmatpush.bf16.msra.mxu0 %v2506
    %3554 = vmatpush.bf16.msra.mxu0 %v2502
    %3555 = vmatpush.bf16.msra.mxu0 %v2498
    %3556 = vmatpush.bf16.msra.mxu0 %v2494
    %3557 = vmatpush.bf16.msra.mxu0 %v2490
    %3558 = vmatmul.bf16.gmra.mxu0 %v642
    %v3559 = vpop.f32.mrf.mxu0
    %v3560 = vadd.f32 %v3547, %v3559
    %v3561 = vpop.f32.mrf.mxu0
    %3562 = vdwg.mxu0
    %3563 = vmatpush.bf16.msra.mxu0 %v2550
    %3564 = vmatpush.bf16.msra.mxu0 %v2546
    %3565 = vmatpush.bf16.msra.mxu0 %v2542
    %3566 = vmatpush.bf16.msra.mxu0 %v2538
    %3567 = vmatpush.bf16.msra.mxu0 %v2534
    %3568 = vmatpush.bf16.msra.mxu0 %v2530
    %3569 = vmatpush.bf16.msra.mxu0 %v2526
    %3570 = vmatpush.bf16.msra.mxu0 %v2522
    %3571 = vmatmul.bf16.gmra.mxu0 %v643
    %v3572 = vpop.f32.mrf.mxu0
    %v3573 = vadd.f32 %v3560, %v3572
    %v3574 = vpop.f32.mrf.mxu0
    %3575 = vdwg.mxu0
    %3576 = vmatpush.bf16.msra.mxu0 %v2582
    %3577 = vmatpush.bf16.msra.mxu0 %v2578
    %3578 = vmatpush.bf16.msra.mxu0 %v2574
    %3579 = vmatpush.bf16.msra.mxu0 %v2570
    %3580 = vmatpush.bf16.msra.mxu0 %v2566
    %3581 = vmatpush.bf16.msra.mxu0 %v2562
    %3582 = vmatpush.bf16.msra.mxu0 %v2558
    %3583 = vmatpush.bf16.msra.mxu0 %v2554
    %3584 = vmatmul.bf16.gmra.mxu0 %v644
    %v3585 = vpop.f32.mrf.mxu0
    %v3586 = vadd.f32 %v3573, %v3585
    %v3587 = vpop.f32.mrf.mxu0
    %3588 = vdwg.mxu0
    %3589 = vmatpush.bf16.msra.mxu0 %v2614
    %3590 = vmatpush.bf16.msra.mxu0 %v2610
    %3591 = vmatpush.bf16.msra.mxu0 %v2606
    %3592 = vmatpush.bf16.msra.mxu0 %v2602
    %3593 = vmatpush.bf16.msra.mxu0 %v2598
    %3594 = vmatpush.bf16.msra.mxu0 %v2594
    %3595 = vmatpush.bf16.msra.mxu0 %v2590
    %3596 = vmatpush.bf16.msra.mxu0 %v2586
    %3597 = vmatmul.bf16.gmra.mxu0 %v645
    %v3598 = vpop.f32.mrf.mxu0
    %v3599 = vadd.f32 %v3586, %v3598
    %v3600 = vpop.f32.mrf.mxu0
    %3601 = vdwg.mxu0
    %3602 = vmatpush.bf16.msra.mxu0 %v2646
    %3603 = vmatpush.bf16.msra.mxu0 %v2642
    %3604 = vmatpush.bf16.msra.mxu0 %v2638
    %3605 = vmatpush.bf16.msra.mxu0 %v2634
    %3606 = vmatpush.bf16.msra.mxu0 %v2630
    %3607 = vmatpush.bf16.msra.mxu0 %v2626
    %3608 = vmatpush.bf16.msra.mxu0 %v2622
    %3609 = vmatpush.bf16.msra.mxu0 %v2618
    %3610 = vmatmul.bf16.gmra.mxu0 %v646
    %v3611 = vpop.f32.mrf.mxu0
    %v3612 = vadd.f32 %v3599, %v3611
    %v3613 = vpop.f32.mrf.mxu0
    %3614 = vdwg.mxu0
    %3615 = vmatpush.bf16.msra.mxu0 %v2678
    %3616 = vmatpush.bf16.msra.mxu0 %v2674
    %3617 = vmatpush.bf16.msra.mxu0 %v2670
    %3618 = vmatpush.bf16.msra.mxu0 %v2666
    %3619 = vmatpush.bf16.msra.mxu0 %v2662
    %3620 = vmatpush.bf16.msra.mxu0 %v2658
    %3621 = vmatpush.bf16.msra.mxu0 %v2654
    %3622 = vmatpush.bf16.msra.mxu0 %v2650
    %3623 = vmatmul.bf16.gmra.mxu0 %v647
    %v3624 = vpop.f32.mrf.mxu0
    %v3625 = vadd.f32 %v3612, %v3624
    %v3626 = vpop.f32.mrf.mxu0
    %3627 = vdwg.mxu0
    %3628 = vmatpush.bf16.msra.mxu0 %v2710
    %3629 = vmatpush.bf16.msra.mxu0 %v2706
    %3630 = vmatpush.bf16.msra.mxu0 %v2702
    %3631 = vmatpush.bf16.msra.mxu0 %v2698
    %3632 = vmatpush.bf16.msra.mxu0 %v2694
    %3633 = vmatpush.bf16.msra.mxu0 %v2690
    %3634 = vmatpush.bf16.msra.mxu0 %v2686
    %3635 = vmatpush.bf16.msra.mxu0 %v2682
    %3636 = vmatmul.bf16.gmra.mxu0 %v648
    %v3637 = vpop.f32.mrf.mxu0
    %v3638 = vadd.f32 %v3625, %v3637
    %v3639 = vpop.f32.mrf.mxu0
    %3640 = vdwg.mxu0
    %3641 = vmatpush.bf16.msra.mxu0 %v2231
    %3642 = vmatpush.bf16.msra.mxu0 %v2227
    %3643 = vmatpush.bf16.msra.mxu0 %v2223
    %3644 = vmatpush.bf16.msra.mxu0 %v2219
    %3645 = vmatpush.bf16.msra.mxu0 %v2215
    %3646 = vmatpush.bf16.msra.mxu0 %v2211
    %3647 = vmatpush.bf16.msra.mxu0 %v2207
    %3648 = vmatpush.bf16.msra.mxu0 %v2203
    %3649 = vmatmul.bf16.gmra.mxu0 %v633
    %v3650 = vpop.f32.mrf.mxu0
    %v3651 = vadd.f32 %v603, %v3650
    %v3652 = vpop.f32.mrf.mxu0
    %3653 = vdwg.mxu0
    %3654 = vmatpush.bf16.msra.mxu0 %v2263
    %3655 = vmatpush.bf16.msra.mxu0 %v2259
    %3656 = vmatpush.bf16.msra.mxu0 %v2255
    %3657 = vmatpush.bf16.msra.mxu0 %v2251
    %3658 = vmatpush.bf16.msra.mxu0 %v2247
    %3659 = vmatpush.bf16.msra.mxu0 %v2243
    %3660 = vmatpush.bf16.msra.mxu0 %v2239
    %3661 = vmatpush.bf16.msra.mxu0 %v2235
    %3662 = vmatmul.bf16.gmra.mxu0 %v634
    %v3663 = vpop.f32.mrf.mxu0
    %v3664 = vadd.f32 %v3651, %v3663
    %v3665 = vpop.f32.mrf.mxu0
    %3666 = vdwg.mxu0
    %3667 = vmatpush.bf16.msra.mxu0 %v2295
    %3668 = vmatpush.bf16.msra.mxu0 %v2291
    %3669 = vmatpush.bf16.msra.mxu0 %v2287
    %3670 = vmatpush.bf16.msra.mxu0 %v2283
    %3671 = vmatpush.bf16.msra.mxu0 %v2279
    %3672 = vmatpush.bf16.msra.mxu0 %v2275
    %3673 = vmatpush.bf16.msra.mxu0 %v2271
    %3674 = vmatpush.bf16.msra.mxu0 %v2267
    %3675 = vmatmul.bf16.gmra.mxu0 %v635
    %v3676 = vpop.f32.mrf.mxu0
    %v3677 = vadd.f32 %v3664, %v3676
    %v3678 = vpop.f32.mrf.mxu0
    %3679 = vdwg.mxu0
    %3680 = vmatpush.bf16.msra.mxu0 %v2327
    %3681 = vmatpush.bf16.msra.mxu0 %v2323
    %3682 = vmatpush.bf16.msra.mxu0 %v2319
    %3683 = vmatpush.bf16.msra.mxu0 %v2315
    %3684 = vmatpush.bf16.msra.mxu0 %v2311
    %3685 = vmatpush.bf16.msra.mxu0 %v2307
    %3686 = vmatpush.bf16.msra.mxu0 %v2303
    %3687 = vmatpush.bf16.msra.mxu0 %v2299
    %3688 = vmatmul.bf16.gmra.mxu0 %v636
    %v3689 = vpop.f32.mrf.mxu0
    %v3690 = vadd.f32 %v3677, %v3689
    %v3691 = vpop.f32.mrf.mxu0
    %3692 = vdwg.mxu0
    %3693 = vmatpush.bf16.msra.mxu0 %v2359
    %3694 = vmatpush.bf16.msra.mxu0 %v2355
    %3695 = vmatpush.bf16.msra.mxu0 %v2351
    %3696 = vmatpush.bf16.msra.mxu0 %v2347
    %3697 = vmatpush.bf16.msra.mxu0 %v2343
    %3698 = vmatpush.bf16.msra.mxu0 %v2339
    %3699 = vmatpush.bf16.msra.mxu0 %v2335
    %3700 = vmatpush.bf16.msra.mxu0 %v2331
    %3701 = vmatmul.bf16.gmra.mxu0 %v637
    %v3702 = vpop.f32.mrf.mxu0
    %v3703 = vadd.f32 %v3690, %v3702
    %v3704 = vpop.f32.mrf.mxu0
    %3705 = vdwg.mxu0
    %3706 = vmatpush.bf16.msra.mxu0 %v2391
    %3707 = vmatpush.bf16.msra.mxu0 %v2387
    %3708 = vmatpush.bf16.msra.mxu0 %v2383
    %3709 = vmatpush.bf16.msra.mxu0 %v2379
    %3710 = vmatpush.bf16.msra.mxu0 %v2375
    %3711 = vmatpush.bf16.msra.mxu0 %v2371
    %3712 = vmatpush.bf16.msra.mxu0 %v2367
    %3713 = vmatpush.bf16.msra.mxu0 %v2363
    %3714 = vmatmul.bf16.gmra.mxu0 %v638
    %v3715 = vpop.f32.mrf.mxu0
    %v3716 = vadd.f32 %v3703, %v3715
    %v3717 = vpop.f32.mrf.mxu0
    %3718 = vdwg.mxu0
    %3719 = vmatpush.bf16.msra.mxu0 %v2423
    %3720 = vmatpush.bf16.msra.mxu0 %v2419
    %3721 = vmatpush.bf16.msra.mxu0 %v2415
    %3722 = vmatpush.bf16.msra.mxu0 %v2411
    %3723 = vmatpush.bf16.msra.mxu0 %v2407
    %3724 = vmatpush.bf16.msra.mxu0 %v2403
    %3725 = vmatpush.bf16.msra.mxu0 %v2399
    %3726 = vmatpush.bf16.msra.mxu0 %v2395
    %3727 = vmatmul.bf16.gmra.mxu0 %v639
    %v3728 = vpop.f32.mrf.mxu0
    %v3729 = vadd.f32 %v3716, %v3728
    %v3730 = vpop.f32.mrf.mxu0
    %3731 = vdwg.mxu0
    %3732 = vmatpush.bf16.msra.mxu0 %v2455
    %3733 = vmatpush.bf16.msra.mxu0 %v2451
    %3734 = vmatpush.bf16.msra.mxu0 %v2447
    %3735 = vmatpush.bf16.msra.mxu0 %v2443
    %3736 = vmatpush.bf16.msra.mxu0 %v2439
    %3737 = vmatpush.bf16.msra.mxu0 %v2435
    %3738 = vmatpush.bf16.msra.mxu0 %v2431
    %3739 = vmatpush.bf16.msra.mxu0 %v2427
    %3740 = vmatmul.bf16.gmra.mxu0 %v640
    %v3741 = vpop.f32.mrf.mxu0
    %v3742 = vadd.f32 %v3729, %v3741
    %v3743 = vpop.f32.mrf.mxu0
    %3744 = vdwg.mxu0
    %3745 = vmatpush.bf16.msra.mxu0 %v2487
    %3746 = vmatpush.bf16.msra.mxu0 %v2483
    %3747 = vmatpush.bf16.msra.mxu0 %v2479
    %3748 = vmatpush.bf16.msra.mxu0 %v2475
    %3749 = vmatpush.bf16.msra.mxu0 %v2471
    %3750 = vmatpush.bf16.msra.mxu0 %v2467
    %3751 = vmatpush.bf16.msra.mxu0 %v2463
    %3752 = vmatpush.bf16.msra.mxu0 %v2459
    %3753 = vmatmul.bf16.gmra.mxu0 %v641
    %v3754 = vpop.f32.mrf.mxu0
    %v3755 = vadd.f32 %v3742, %v3754
    %v3756 = vpop.f32.mrf.mxu0
    %3757 = vdwg.mxu0
    %3758 = vmatpush.bf16.msra.mxu0 %v2519
    %3759 = vmatpush.bf16.msra.mxu0 %v2515
    %3760 = vmatpush.bf16.msra.mxu0 %v2511
    %3761 = vmatpush.bf16.msra.mxu0 %v2507
    %3762 = vmatpush.bf16.msra.mxu0 %v2503
    %3763 = vmatpush.bf16.msra.mxu0 %v2499
    %3764 = vmatpush.bf16.msra.mxu0 %v2495
    %3765 = vmatpush.bf16.msra.mxu0 %v2491
    %3766 = vmatmul.bf16.gmra.mxu0 %v642
    %v3767 = vpop.f32.mrf.mxu0
    %v3768 = vadd.f32 %v3755, %v3767
    %v3769 = vpop.f32.mrf.mxu0
    %3770 = vdwg.mxu0
    %3771 = vmatpush.bf16.msra.mxu0 %v2551
    %3772 = vmatpush.bf16.msra.mxu0 %v2547
    %3773 = vmatpush.bf16.msra.mxu0 %v2543
    %3774 = vmatpush.bf16.msra.mxu0 %v2539
    %3775 = vmatpush.bf16.msra.mxu0 %v2535
    %3776 = vmatpush.bf16.msra.mxu0 %v2531
    %3777 = vmatpush.bf16.msra.mxu0 %v2527
    %3778 = vmatpush.bf16.msra.mxu0 %v2523
    %3779 = vmatmul.bf16.gmra.mxu0 %v643
    %v3780 = vpop.f32.mrf.mxu0
    %v3781 = vadd.f32 %v3768, %v3780
    %v3782 = vpop.f32.mrf.mxu0
    %3783 = vdwg.mxu0
    %3784 = vmatpush.bf16.msra.mxu0 %v2583
    %3785 = vmatpush.bf16.msra.mxu0 %v2579
    %3786 = vmatpush.bf16.msra.mxu0 %v2575
    %3787 = vmatpush.bf16.msra.mxu0 %v2571
    %3788 = vmatpush.bf16.msra.mxu0 %v2567
    %3789 = vmatpush.bf16.msra.mxu0 %v2563
    %3790 = vmatpush.bf16.msra.mxu0 %v2559
    %3791 = vmatpush.bf16.msra.mxu0 %v2555
    %3792 = vmatmul.bf16.gmra.mxu0 %v644
    %v3793 = vpop.f32.mrf.mxu0
    %v3794 = vadd.f32 %v3781, %v3793
    %v3795 = vpop.f32.mrf.mxu0
    %3796 = vdwg.mxu0
    %3797 = vmatpush.bf16.msra.mxu0 %v2615
    %3798 = vmatpush.bf16.msra.mxu0 %v2611
    %3799 = vmatpush.bf16.msra.mxu0 %v2607
    %3800 = vmatpush.bf16.msra.mxu0 %v2603
    %3801 = vmatpush.bf16.msra.mxu0 %v2599
    %3802 = vmatpush.bf16.msra.mxu0 %v2595
    %3803 = vmatpush.bf16.msra.mxu0 %v2591
    %3804 = vmatpush.bf16.msra.mxu0 %v2587
    %3805 = vmatmul.bf16.gmra.mxu0 %v645
    %v3806 = vpop.f32.mrf.mxu0
    %v3807 = vadd.f32 %v3794, %v3806
    %v3808 = vpop.f32.mrf.mxu0
    %3809 = vdwg.mxu0
    %3810 = vmatpush.bf16.msra.mxu0 %v2647
    %3811 = vmatpush.bf16.msra.mxu0 %v2643
    %3812 = vmatpush.bf16.msra.mxu0 %v2639
    %3813 = vmatpush.bf16.msra.mxu0 %v2635
    %3814 = vmatpush.bf16.msra.mxu0 %v2631
    %3815 = vmatpush.bf16.msra.mxu0 %v2627
    %3816 = vmatpush.bf16.msra.mxu0 %v2623
    %3817 = vmatpush.bf16.msra.mxu0 %v2619
    %3818 = vmatmul.bf16.gmra.mxu0 %v646
    %v3819 = vpop.f32.mrf.mxu0
    %v3820 = vadd.f32 %v3807, %v3819
    %v3821 = vpop.f32.mrf.mxu0
    %3822 = vdwg.mxu0
    %3823 = vmatpush.bf16.msra.mxu0 %v2679
    %3824 = vmatpush.bf16.msra.mxu0 %v2675
    %3825 = vmatpush.bf16.msra.mxu0 %v2671
    %3826 = vmatpush.bf16.msra.mxu0 %v2667
    %3827 = vmatpush.bf16.msra.mxu0 %v2663
    %3828 = vmatpush.bf16.msra.mxu0 %v2659
    %3829 = vmatpush.bf16.msra.mxu0 %v2655
    %3830 = vmatpush.bf16.msra.mxu0 %v2651
    %3831 = vmatmul.bf16.gmra.mxu0 %v647
    %v3832 = vpop.f32.mrf.mxu0
    %v3833 = vadd.f32 %v3820, %v3832
    %v3834 = vpop.f32.mrf.mxu0
    %3835 = vdwg.mxu0
    %3836 = vmatpush.bf16.msra.mxu0 %v2711
    %3837 = vmatpush.bf16.msra.mxu0 %v2707
    %3838 = vmatpush.bf16.msra.mxu0 %v2703
    %3839 = vmatpush.bf16.msra.mxu0 %v2699
    %3840 = vmatpush.bf16.msra.mxu0 %v2695
    %3841 = vmatpush.bf16.msra.mxu0 %v2691
    %3842 = vmatpush.bf16.msra.mxu0 %v2687
    %3843 = vmatpush.bf16.msra.mxu0 %v2683
    %3844 = vmatmul.bf16.gmra.mxu0 %v648
    %v3845 = vpop.f32.mrf.mxu0
    %v3846 = vadd.f32 %v3833, %v3845
    %v3847 = vpop.f32.mrf.mxu0
    %3848 = vdwg.mxu0
    %3849 = vmatpush.bf16.msra.mxu0 %v2232
    %3850 = vmatpush.bf16.msra.mxu0 %v2228
    %3851 = vmatpush.bf16.msra.mxu0 %v2224
    %3852 = vmatpush.bf16.msra.mxu0 %v2220
    %3853 = vmatpush.bf16.msra.mxu0 %v2216
    %3854 = vmatpush.bf16.msra.mxu0 %v2212
    %3855 = vmatpush.bf16.msra.mxu0 %v2208
    %3856 = vmatpush.bf16.msra.mxu0 %v2204
    %3857 = vmatmul.bf16.gmra.mxu0 %v633
    %v3858 = vpop.f32.mrf.mxu0
    %v3859 = vadd.f32 %v604, %v3858
    %v3860 = vpop.f32.mrf.mxu0
    %3861 = vdwg.mxu0
    %3862 = vmatpush.bf16.msra.mxu0 %v2264
    %3863 = vmatpush.bf16.msra.mxu0 %v2260
    %3864 = vmatpush.bf16.msra.mxu0 %v2256
    %3865 = vmatpush.bf16.msra.mxu0 %v2252
    %3866 = vmatpush.bf16.msra.mxu0 %v2248
    %3867 = vmatpush.bf16.msra.mxu0 %v2244
    %3868 = vmatpush.bf16.msra.mxu0 %v2240
    %3869 = vmatpush.bf16.msra.mxu0 %v2236
    %3870 = vmatmul.bf16.gmra.mxu0 %v634
    %v3871 = vpop.f32.mrf.mxu0
    %v3872 = vadd.f32 %v3859, %v3871
    %v3873 = vpop.f32.mrf.mxu0
    %3874 = vdwg.mxu0
    %3875 = vmatpush.bf16.msra.mxu0 %v2296
    %3876 = vmatpush.bf16.msra.mxu0 %v2292
    %3877 = vmatpush.bf16.msra.mxu0 %v2288
    %3878 = vmatpush.bf16.msra.mxu0 %v2284
    %3879 = vmatpush.bf16.msra.mxu0 %v2280
    %3880 = vmatpush.bf16.msra.mxu0 %v2276
    %3881 = vmatpush.bf16.msra.mxu0 %v2272
    %3882 = vmatpush.bf16.msra.mxu0 %v2268
    %3883 = vmatmul.bf16.gmra.mxu0 %v635
    %v3884 = vpop.f32.mrf.mxu0
    %v3885 = vadd.f32 %v3872, %v3884
    %v3886 = vpop.f32.mrf.mxu0
    %3887 = vdwg.mxu0
    %3888 = vmatpush.bf16.msra.mxu0 %v2328
    %3889 = vmatpush.bf16.msra.mxu0 %v2324
    %3890 = vmatpush.bf16.msra.mxu0 %v2320
    %3891 = vmatpush.bf16.msra.mxu0 %v2316
    %3892 = vmatpush.bf16.msra.mxu0 %v2312
    %3893 = vmatpush.bf16.msra.mxu0 %v2308
    %3894 = vmatpush.bf16.msra.mxu0 %v2304
    %3895 = vmatpush.bf16.msra.mxu0 %v2300
    %3896 = vmatmul.bf16.gmra.mxu0 %v636
    %v3897 = vpop.f32.mrf.mxu0
    %v3898 = vadd.f32 %v3885, %v3897
    %v3899 = vpop.f32.mrf.mxu0
    %3900 = vdwg.mxu0
    %3901 = vmatpush.bf16.msra.mxu0 %v2360
    %3902 = vmatpush.bf16.msra.mxu0 %v2356
    %3903 = vmatpush.bf16.msra.mxu0 %v2352
    %3904 = vmatpush.bf16.msra.mxu0 %v2348
    %3905 = vmatpush.bf16.msra.mxu0 %v2344
    %3906 = vmatpush.bf16.msra.mxu0 %v2340
    %3907 = vmatpush.bf16.msra.mxu0 %v2336
    %3908 = vmatpush.bf16.msra.mxu0 %v2332
    %3909 = vmatmul.bf16.gmra.mxu0 %v637
    %v3910 = vpop.f32.mrf.mxu0
    %v3911 = vadd.f32 %v3898, %v3910
    %v3912 = vpop.f32.mrf.mxu0
    %3913 = vdwg.mxu0
    %3914 = vmatpush.bf16.msra.mxu0 %v2392
    %3915 = vmatpush.bf16.msra.mxu0 %v2388
    %3916 = vmatpush.bf16.msra.mxu0 %v2384
    %3917 = vmatpush.bf16.msra.mxu0 %v2380
    %3918 = vmatpush.bf16.msra.mxu0 %v2376
    %3919 = vmatpush.bf16.msra.mxu0 %v2372
    %3920 = vmatpush.bf16.msra.mxu0 %v2368
    %3921 = vmatpush.bf16.msra.mxu0 %v2364
    %3922 = vmatmul.bf16.gmra.mxu0 %v638
    %v3923 = vpop.f32.mrf.mxu0
    %v3924 = vadd.f32 %v3911, %v3923
    %v3925 = vpop.f32.mrf.mxu0
    %3926 = vdwg.mxu0
    %3927 = vmatpush.bf16.msra.mxu0 %v2424
    %3928 = vmatpush.bf16.msra.mxu0 %v2420
    %3929 = vmatpush.bf16.msra.mxu0 %v2416
    %3930 = vmatpush.bf16.msra.mxu0 %v2412
    %3931 = vmatpush.bf16.msra.mxu0 %v2408
    %3932 = vmatpush.bf16.msra.mxu0 %v2404
    %3933 = vmatpush.bf16.msra.mxu0 %v2400
    %3934 = vmatpush.bf16.msra.mxu0 %v2396
    %3935 = vmatmul.bf16.gmra.mxu0 %v639
    %v3936 = vpop.f32.mrf.mxu0
    %v3937 = vadd.f32 %v3924, %v3936
    %v3938 = vpop.f32.mrf.mxu0
    %3939 = vdwg.mxu0
    %3940 = vmatpush.bf16.msra.mxu0 %v2456
    %3941 = vmatpush.bf16.msra.mxu0 %v2452
    %3942 = vmatpush.bf16.msra.mxu0 %v2448
    %3943 = vmatpush.bf16.msra.mxu0 %v2444
    %3944 = vmatpush.bf16.msra.mxu0 %v2440
    %3945 = vmatpush.bf16.msra.mxu0 %v2436
    %3946 = vmatpush.bf16.msra.mxu0 %v2432
    %3947 = vmatpush.bf16.msra.mxu0 %v2428
    %3948 = vmatmul.bf16.gmra.mxu0 %v640
    %v3949 = vpop.f32.mrf.mxu0
    %v3950 = vadd.f32 %v3937, %v3949
    %v3951 = vpop.f32.mrf.mxu0
    %3952 = vdwg.mxu0
    %3953 = vmatpush.bf16.msra.mxu0 %v2488
    %3954 = vmatpush.bf16.msra.mxu0 %v2484
    %3955 = vmatpush.bf16.msra.mxu0 %v2480
    %3956 = vmatpush.bf16.msra.mxu0 %v2476
    %3957 = vmatpush.bf16.msra.mxu0 %v2472
    %3958 = vmatpush.bf16.msra.mxu0 %v2468
    %3959 = vmatpush.bf16.msra.mxu0 %v2464
    %3960 = vmatpush.bf16.msra.mxu0 %v2460
    %3961 = vmatmul.bf16.gmra.mxu0 %v641
    %v3962 = vpop.f32.mrf.mxu0
    %v3963 = vadd.f32 %v3950, %v3962
    %v3964 = vpop.f32.mrf.mxu0
    %3965 = vdwg.mxu0
    %3966 = vmatpush.bf16.msra.mxu0 %v2520
    %3967 = vmatpush.bf16.msra.mxu0 %v2516
    %3968 = vmatpush.bf16.msra.mxu0 %v2512
    %3969 = vmatpush.bf16.msra.mxu0 %v2508
    %3970 = vmatpush.bf16.msra.mxu0 %v2504
    %3971 = vmatpush.bf16.msra.mxu0 %v2500
    %3972 = vmatpush.bf16.msra.mxu0 %v2496
    %3973 = vmatpush.bf16.msra.mxu0 %v2492
    %3974 = vmatmul.bf16.gmra.mxu0 %v642
    %v3975 = vpop.f32.mrf.mxu0
    %v3976 = vadd.f32 %v3963, %v3975
    %v3977 = vpop.f32.mrf.mxu0
    %3978 = vdwg.mxu0
    %3979 = vmatpush.bf16.msra.mxu0 %v2552
    %3980 = vmatpush.bf16.msra.mxu0 %v2548
    %3981 = vmatpush.bf16.msra.mxu0 %v2544
    %3982 = vmatpush.bf16.msra.mxu0 %v2540
    %3983 = vmatpush.bf16.msra.mxu0 %v2536
    %3984 = vmatpush.bf16.msra.mxu0 %v2532
    %3985 = vmatpush.bf16.msra.mxu0 %v2528
    %3986 = vmatpush.bf16.msra.mxu0 %v2524
    %3987 = vmatmul.bf16.gmra.mxu0 %v643
    %v3988 = vpop.f32.mrf.mxu0
    %v3989 = vadd.f32 %v3976, %v3988
    %v3990 = vpop.f32.mrf.mxu0
    %3991 = vdwg.mxu0
    %3992 = vmatpush.bf16.msra.mxu0 %v2584
    %3993 = vmatpush.bf16.msra.mxu0 %v2580
    %3994 = vmatpush.bf16.msra.mxu0 %v2576
    %3995 = vmatpush.bf16.msra.mxu0 %v2572
    %3996 = vmatpush.bf16.msra.mxu0 %v2568
    %3997 = vmatpush.bf16.msra.mxu0 %v2564
    %3998 = vmatpush.bf16.msra.mxu0 %v2560
    %3999 = vmatpush.bf16.msra.mxu0 %v2556
    %4000 = vmatmul.bf16.gmra.mxu0 %v644
    %v4001 = vpop.f32.mrf.mxu0
    %v4002 = vadd.f32 %v3989, %v4001
    %v4003 = vpop.f32.mrf.mxu0
    %4004 = vdwg.mxu0
    %4005 = vmatpush.bf16.msra.mxu0 %v2616
    %4006 = vmatpush.bf16.msra.mxu0 %v2612
    %4007 = vmatpush.bf16.msra.mxu0 %v2608
    %4008 = vmatpush.bf16.msra.mxu0 %v2604
    %4009 = vmatpush.bf16.msra.mxu0 %v2600
    %4010 = vmatpush.bf16.msra.mxu0 %v2596
    %4011 = vmatpush.bf16.msra.mxu0 %v2592
    %4012 = vmatpush.bf16.msra.mxu0 %v2588
    %4013 = vmatmul.bf16.gmra.mxu0 %v645
    %v4014 = vpop.f32.mrf.mxu0
    %v4015 = vadd.f32 %v4002, %v4014
    %v4016 = vpop.f32.mrf.mxu0
    %4017 = vdwg.mxu0
    %4018 = vmatpush.bf16.msra.mxu0 %v2648
    %4019 = vmatpush.bf16.msra.mxu0 %v2644
    %4020 = vmatpush.bf16.msra.mxu0 %v2640
    %4021 = vmatpush.bf16.msra.mxu0 %v2636
    %4022 = vmatpush.bf16.msra.mxu0 %v2632
    %4023 = vmatpush.bf16.msra.mxu0 %v2628
    %4024 = vmatpush.bf16.msra.mxu0 %v2624
    %4025 = vmatpush.bf16.msra.mxu0 %v2620
    %4026 = vmatmul.bf16.gmra.mxu0 %v646
    %v4027 = vpop.f32.mrf.mxu0
    %v4028 = vadd.f32 %v4015, %v4027
    %v4029 = vpop.f32.mrf.mxu0
    %4030 = vdwg.mxu0
    %4031 = vmatpush.bf16.msra.mxu0 %v2680
    %4032 = vmatpush.bf16.msra.mxu0 %v2676
    %4033 = vmatpush.bf16.msra.mxu0 %v2672
    %4034 = vmatpush.bf16.msra.mxu0 %v2668
    %4035 = vmatpush.bf16.msra.mxu0 %v2664
    %4036 = vmatpush.bf16.msra.mxu0 %v2660
    %4037 = vmatpush.bf16.msra.mxu0 %v2656
    %4038 = vmatpush.bf16.msra.mxu0 %v2652
    %4039 = vmatmul.bf16.gmra.mxu0 %v647
    %v4040 = vpop.f32.mrf.mxu0
    %v4041 = vadd.f32 %v4028, %v4040
    %v4042 = vpop.f32.mrf.mxu0
    %4043 = vdwg.mxu0
    %4044 = vmatpush.bf16.msra.mxu0 %v2712
    %4045 = vmatpush.bf16.msra.mxu0 %v2708
    %4046 = vmatpush.bf16.msra.mxu0 %v2704
    %4047 = vmatpush.bf16.msra.mxu0 %v2700
    %4048 = vmatpush.bf16.msra.mxu0 %v2696
    %4049 = vmatpush.bf16.msra.mxu0 %v2692
    %4050 = vmatpush.bf16.msra.mxu0 %v2688
    %4051 = vmatpush.bf16.msra.mxu0 %v2684
    %4052 = vmatmul.bf16.gmra.mxu0 %v648
    %v4053 = vpop.f32.mrf.mxu0
    %v4054 = vadd.f32 %v4041, %v4053
    %v4055 = vpop.f32.mrf.mxu0
    %4056 = vdwg.mxu0
    %v4057 = vmax.f32 %v3430, 0.0
    %v4058 = vmax.f32 %v3638, 0.0
    %v4059 = vmax.f32 %v3846, 0.0
    %v4060 = vmax.f32 %v4054, 0.0
    %v4061 = vld [vmem:[#allocation8] sm:$0xf]
    %v4063 = vperm.slane %v4061, 0
    %v4064 = vperm.slane %v4061, 1
    %v4065 = vperm.slane %v4061, 2
    %v4066 = vperm.slane %v4061, 3
    %v4071 = vmul.f32 %v4057, %v4063
    %v4072 = vmul.f32 %v4058, %v4064
    %v4073 = vmul.f32 %v4059, %v4065
    %v4074 = vmul.f32 %v4060, %v4066
    %v4075 = vadd.f32 %v4071, %v4072
    %v4076 = vadd.f32 %v4075, %v4073
    %v4077 = vadd.f32 %v4076, %v4074
    %4078 = vadd.xlane.f32.xlu0 %v4077
    %v4079 = vpop.xlane.xlu0 %4078
    %v4080 = vld [vmem:[#allocation2] sm:$0x1]
    %v4082 = vperm.slane %v4080, 0
    %v4084 = vadd.f32 %v4079, %v4082
    %v4085 = vsub.f32 0.0, %v4084
    %v4086 = vmul.f32 %v4085, 1.442695
    %v4087 = vpow.pop %v4086
    %v4088 = vadd.f32 %v4087, 1.0
    %v4089 = vrcp.pop %v4088
    %v4090 = vmul.f32 %v4088, %v4089
    %v4091 = vsub.f32 1.0, %v4090
    %v4092 = vmul.f32 %v4089, %v4091
    %v4093 = vadd.f32 %v4089, %v4092
    %vm4094 = vweird.f32 %v4088
    %vm4095 = vweird.f32 %v4089
    %vm4096 = vmor %vm4094, %vm4095
    %v4097 = vsel %vm4096, %v4089, %v4093
    %v4098 = vand.u32 2147483647, %v4088
    %vm4099 = vcmp.eq.f32.partialorder %v4098, 8.507059e+37
    %v4100 = vand.u32 %v4088, 2147483648
    %v4101 = vor.u32 1.1754944e-38, %v4100
    %v4102 = vsel %vm4099, %v4101, %v4097
    %v4103 = vmul.f32 1.0, %v4102
    %vm4104 = vcmask 7168
    %4105 = vst.msk [vmem:[%s5] sm:$0xff] %vm4104, %v4103
    // Predicated region
    $region38: #{tpu_custom_call.1} parent=1 // pred_check
      _
    $region39: #{tpu_custom_call.1} parent=1 // pred_check_branch
      %4107 = sbr.rel (0) target = $region41
    $region40: #{tpu_custom_call.1} parent=1 // pred_region
      _
    $region41: #{tpu_custom_call.1} parent=1 // pred_fallthru
      _
    // Predicated region
    $region42: #{tpu_custom_call.1} parent=1 // pred_check
      _
    $region43: #{tpu_custom_call.1} parent=1 // pred_check_branch
      %4109 = sbr.rel (0) target = $region45
    $region44: #{tpu_custom_call.1} parent=1 // pred_region
      _
    $region45: #{tpu_custom_call.1} parent=1 // pred_fallthru
      _
    %4110 = vsyncpa [#allocation4], 1
    %4111 = vsyncpa [#allocation6], 1
    %4112 = vsyncpa [#allocation9], 1

</llo_original>
